<compile_context>
chip_gen: v6e
topology: v6e:2x2x1
jax: 0.10.0
libtpu: 0.0.40
codegen_flags: <defaults>
</compile_context>

<pallas_src>
import jax
import jax.numpy as jnp
from jax.experimental import pallas as pl
from jax.experimental.pallas import tpu as pltpu

_PAD = 8  # -inf border on every side (>= 6 required for 3 chained 5x5 pools;
          # 8 keeps the interior origin sublane-aligned along W).


def _silu(y):
    # sigmoid via EUP exp + approx reciprocal (keeps the VALU slot free).
    return y * pl.reciprocal(1.0 + jnp.exp(-y), approx=True)


# ----------------------------------------------------------------------------
# Fused kernel: cv1 + 3x chained MaxPool2d(5,1,2) + concat-free cv2 (+BN+SiLU)
# ----------------------------------------------------------------------------
def _sppf_fused_kernel(x_ref, w1_ref, s1_ref, b1_ref, w2_ref, s2_ref, b2_ref,
                       o_ref, pbuf):
    H, W, C1 = x_ref.shape[1], x_ref.shape[2], x_ref.shape[3]
    C = w1_ref.shape[1]                    # c_ = c1 // 2
    Cout = o_ref.shape[3]
    Hp, Wp = pbuf.shape[0], pbuf.shape[1]
    M = H * W
    P = _PAD
    f32, bf16 = jnp.float32, jnp.bfloat16

    # ---- -inf border strips only (interior is overwritten below) -----------
    neg = -jnp.inf
    pbuf[0:P, :, :] = jnp.full((P, Wp, C), neg, f32)
    pbuf[P + H:Hp, :, :] = jnp.full((Hp - P - H, Wp, C), neg, f32)
    pbuf[P:P + H, 0:P, :] = jnp.full((H, P, C), neg, f32)
    pbuf[P:P + H, P + W:Wp, :] = jnp.full((H, Wp - P - W, C), neg, f32)

    # ---- cv1: 1x1 conv (bf16 MXU, f32 acc) + folded BN + SiLU ---------------
    x2d = x_ref[0].reshape(M, C1).astype(bf16)
    z1 = jnp.dot(x2d, w1_ref[...], preferred_element_type=f32)
    y0 = _silu(z1 * s1_ref[...] + b1_ref[...])                 # (M, C) f32
    pbuf[P:P + H, P:P + W, :] = y0.reshape(H, W, C)

    # cv2 accumulated per concat slab (the concat is never materialized).
    acc = jnp.dot(y0.astype(bf16), w2_ref[0], preferred_element_type=f32)

    def pool5_same():
        # 5x5 / stride 1 / pad 2 max-pool of the current interior of pbuf
        # (borders are -inf == PyTorch's implicit max-pool padding).
        # Separable, 3 maxes per direction (doubling trick), origin preserved.
        r0 = pbuf[P - 2:P + H + 2, :, :]           # (H+4, Wp, C)
        a = jnp.maximum(r0[:-1], r0[1:])           # (H+3, Wp, C)
        b = jnp.maximum(a[:-2], a[2:])             # (H+1, Wp, C)
        t = jnp.maximum(b[:H], r0[4:4 + H])        # (H,   Wp, C)
        u = t[:, P - 2:P + W + 2, :]               # (H, W+4, C)
        a2 = jnp.maximum(u[:, :-1], u[:, 1:])      # (H, W+3, C)
        b2 = jnp.maximum(a2[:, :-2], a2[:, 2:])    # (H, W+1, C)
        return jnp.maximum(b2[:, :W], u[:, 4:4 + W])   # (H, W, C)

    for k in range(1, 4):
        yk = pool5_same()                                          # f32
        acc = acc + jnp.dot(yk.reshape(M, C).astype(bf16), w2_ref[k],
                            preferred_element_type=f32)
        if k < 3:
            pbuf[P:P + H, P:P + W, :] = yk                         # next input

    # ---- cv2 epilogue: folded BN + SiLU -------------------------------------
    y = acc * s2_ref[...] + b2_ref[...]
    o_ref[0] = _silu(y).reshape(H, W, Cout).astype(o_ref.dtype)


def _fused_vmem_limit(H, W, c1, c_, c2):
    """Derive vmem_limit_bytes from the actual footprint (with headroom)."""
    f32b = 4
    pbuf = (H + 2 * _PAD) * (W + 2 * _PAD) * c_ * f32b
    io_blocks = 2 * H * W * (c1 + c2) * f32b           # double-buffered in/out
    weights = 2 * 2 * (c1 * c_ + 4 * c_ * c2) + 2 * 2 * (c_ + c2) * f32b
    temporaries = 12 * H * W * c_ * f32b + 4 * H * W * c2 * f32b
    total = pbuf + io_blocks + weights + temporaries
    return int(min(max(2 * total, 16 << 20), 100 << 20))


def sppf_pallas(x_nhwc, params):
    N, H, W, C1 = x_nhwc.shape
    c_ = params["w1"].shape[1]
    c2 = params["w2"].shape[1]

    w1b = params["w1"].astype(jnp.bfloat16)                       # (c1, c_)
    w2b = params["w2"].reshape(4, c_, c2).astype(jnp.bfloat16)    # (4, c_, c2)

    return pl.pallas_call(
        _sppf_fused_kernel,
        out_shape=jax.ShapeDtypeStruct((N, H, W, c2), x_nhwc.dtype),
        grid=(N,),
        in_specs=[
            pl.BlockSpec((1, H, W, C1), lambda n: (n, 0, 0, 0)),
            pl.BlockSpec((C1, c_), lambda n: (0, 0)),
            pl.BlockSpec((1, c_), lambda n: (0, 0)),
            pl.BlockSpec((1, c_), lambda n: (0, 0)),
            pl.BlockSpec((4, c_, c2), lambda n: (0, 0, 0)),
            pl.BlockSpec((1, c2), lambda n: (0, 0)),
            pl.BlockSpec((1, c2), lambda n: (0, 0)),
        ],
        out_specs=pl.BlockSpec((1, H, W, c2), lambda n: (n, 0, 0, 0)),
        scratch_shapes=[
            pltpu.VMEM((H + 2 * _PAD, W + 2 * _PAD, c_), jnp.float32)
        ],
        compiler_params=pltpu.CompilerParams(
            dimension_semantics=("parallel",),
            vmem_limit_bytes=_fused_vmem_limit(H, W, C1, c_, c2),
        ),
        cost_estimate=pl.CostEstimate(
            flops=2 * N * H * W * (C1 * c_ + 4 * c_ * c2) + 18 * N * H * W * c_,
            transcendentals=N * H * W * (c_ + c2),
            bytes_accessed=4 * N * H * W * (C1 + c2)
                           + 2 * (C1 * c_ + 4 * c_ * c2) + 8 * (c_ + c2),
        ),
    )(x_nhwc, w1b, params["s1"], params["b1"], w2b, params["s2"], params["b2"])


# ----------------------------------------------------------------------------
# Parameter construction (deterministic, synthetic) + BN folding (eval mode)
# ----------------------------------------------------------------------------
def make_sppf_params(key, c1, c2):
    c_ = c1 // 2
    ks = jax.random.split(key, 10)
    eps = 1e-5

    def bn_fold(kg, kb, km, kv, c):
        gamma = 1.0 + 0.1 * jax.random.normal(kg, (c,), jnp.float32)
        beta = 0.1 * jax.random.normal(kb, (c,), jnp.float32)
        mean = 0.1 * jax.random.normal(km, (c,), jnp.float32)
        var = jnp.abs(jax.random.normal(kv, (c,), jnp.float32)) + 0.5
        scale = gamma / jnp.sqrt(var + eps)
        bias = beta - mean * scale
        return scale.reshape(1, c), bias.reshape(1, c)

    w1 = 0.2 * jax.random.normal(ks[0], (c1, c_), jnp.float32)       # cv1
    s1, b1 = bn_fold(ks[1], ks[2], ks[3], ks[4], c_)
    w2 = 0.2 * jax.random.normal(ks[5], (4 * c_, c2), jnp.float32)   # cv2
    s2, b2 = bn_fold(ks[6], ks[7], ks[8], ks[9], c2)
    return dict(w1=w1, s1=s1, b1=b1, w2=w2, s2=s2, b2=b2)


# ----------------------------------------------------------------------------
# SPPF forward (wrapper). Input/output are NCHW to match PyTorch.
# ----------------------------------------------------------------------------
@jax.jit
def sppf_forward(x_nchw, params):
    x = jnp.transpose(x_nchw, (0, 2, 3, 1))              # NCHW -> NHWC
    out = sppf_pallas(x, params)
    return jnp.transpose(out, (0, 3, 1, 2))              # NHWC -> NCHW


# ----------------------------------------------------------------------------
# Pure-JAX f32 reference (for self-check)
# ----------------------------------------------------------------------------
def sppf_reference(x_nchw, params):
    def silu(v):
        return v * jax.nn.sigmoid(v)

    x = jnp.transpose(x_nchw, (0, 2, 3, 1))
    y0 = silu(jnp.einsum("nhwc,cd->nhwd", x, params["w1"])
              * params["s1"][0] + params["b1"][0])

    def mp(v):
        neg = jnp.asarray(-jnp.inf, v.dtype)
        vp = jnp.pad(v, ((0, 0), (2, 2), (2, 2), (0, 0)), constant_values=neg)
        return jax.lax.reduce_window(vp, neg, jax.lax.max,
                                     (1, 5, 5, 1), (1, 1, 1, 1), "VALID")

    y1 = mp(y0)
    y2 = mp(y1)
    y3 = mp(y2)
    cat = jnp.concatenate([y0, y1, y2, y3], axis=-1)
    out = silu(jnp.einsum("nhwc,cd->nhwd", cat, params["w2"])
               * params["s2"][0] + params["b2"][0])
    return jnp.transpose(out, (0, 3, 1, 2))


if __name__ == "__main__":
    c1, c2, N, H, W = 4, 8, 2, 16, 16
    key = jax.random.PRNGKey(0)
    kx, kp = jax.random.split(key)
    x = jax.random.normal(kx, (N, c1, H, W), jnp.float32)
    params = make_sppf_params(kp, c1, c2)

    out = sppf_forward(x, params)
    out = jax.block_until_ready(out)

    ref = sppf_reference(x, params)
    assert out.shape == (N, c2, H, W), out.shape
    err = float(jnp.max(jnp.abs(out - ref)))
    # bf16 MXU operands + approx reciprocal => looser tolerance vs f32 reference.
    assert jnp.allclose(out, ref, rtol=5e-2, atol=5e-2), err

    print("KERNEL_OK")
</pallas_src>

<mosaic_0001>
module attributes {stable_mosaic.version = 11 : i64} {
  func.func @_sppf_fused_kernel(%arg0: i32, %arg1: memref<1x16x16x4xf32, #tpu.memory_space<vmem>>, %arg2: memref<4x2xbf16, #tpu.memory_space<vmem>>, %arg3: memref<1x2xf32, #tpu.memory_space<vmem>>, %arg4: memref<1x2xf32, #tpu.memory_space<vmem>>, %arg5: memref<4x2x8xbf16, #tpu.memory_space<vmem>>, %arg6: memref<1x8xf32, #tpu.memory_space<vmem>>, %arg7: memref<1x8xf32, #tpu.memory_space<vmem>>, %arg8: memref<1x16x16x8xf32, #tpu.memory_space<vmem>>, %arg9: memref<32x32x2xf32, #tpu.memory_space<vmem>>) attributes {dimension_semantics = [#tpu.dimension_semantics<parallel>], iteration_bounds = array<i64: 2>, scalar_prefetch = 0 : i64, scratch_operands = 1 : i64, tpu.core_type = #tpu.core_type<tc>, window_params = [{transform_indices = @transform_0, window_bounds = array<i64: 1, 16, 16, 4>}, {pipeline_mode = #tpu.pipeline_mode<synchronous>, transform_indices = @transform_1, window_bounds = array<i64: 4, 2>}, {pipeline_mode = #tpu.pipeline_mode<synchronous>, transform_indices = @transform_2, window_bounds = array<i64: 1, 2>}, {pipeline_mode = #tpu.pipeline_mode<synchronous>, transform_indices = @transform_3, window_bounds = array<i64: 1, 2>}, {pipeline_mode = #tpu.pipeline_mode<synchronous>, transform_indices = @transform_4, window_bounds = array<i64: 4, 2, 8>}, {pipeline_mode = #tpu.pipeline_mode<synchronous>, transform_indices = @transform_5, window_bounds = array<i64: 1, 8>}, {pipeline_mode = #tpu.pipeline_mode<synchronous>, transform_indices = @transform_6, window_bounds = array<i64: 1, 8>}, {transform_indices = @transform_7, window_bounds = array<i64: 1, 16, 16, 8>}]} {
    %cst = arith.constant 0xFF800000 : f32
    %0 = vector.broadcast %cst : f32 to vector<8x32x2xf32>
    %c0 = arith.constant 0 : index
    %c0_0 = arith.constant 0 : index
    %c0_1 = arith.constant 0 : index
    %1 = vector.load %arg9[%c0, %c0_0, %c0_1] : memref<32x32x2xf32, #tpu.memory_space<vmem>>, vector<8x32x2xf32>
    tpu.vector_store %arg9[%c0, %c0_0, %c0_1], %0 {strides = array<i32>} : memref<32x32x2xf32, #tpu.memory_space<vmem>>, vector<8x32x2xf32>,
    %cst_2 = arith.constant 0xFF800000 : f32
    %2 = vector.broadcast %cst_2 : f32 to vector<8x32x2xf32>
    %c24 = arith.constant 24 : index
    %c0_3 = arith.constant 0 : index
    %c0_4 = arith.constant 0 : index
    %3 = vector.load %arg9[%c24, %c0_3, %c0_4] : memref<32x32x2xf32, #tpu.memory_space<vmem>>, vector<8x32x2xf32>
    tpu.vector_store %arg9[%c24, %c0_3, %c0_4], %2 {strides = array<i32>} : memref<32x32x2xf32, #tpu.memory_space<vmem>>, vector<8x32x2xf32>,
    %cst_5 = arith.constant 0xFF800000 : f32
    %4 = vector.broadcast %cst_5 : f32 to vector<16x8x2xf32>
    %c8 = arith.constant 8 : index
    %c0_6 = arith.constant 0 : index
    %c0_7 = arith.constant 0 : index
    %5 = vector.load %arg9[%c8, %c0_6, %c0_7] : memref<32x32x2xf32, #tpu.memory_space<vmem>>, vector<16x8x2xf32>
    tpu.vector_store %arg9[%c8, %c0_6, %c0_7], %4 {strides = array<i32>} : memref<32x32x2xf32, #tpu.memory_space<vmem>>, vector<16x8x2xf32>,
    %cst_8 = arith.constant 0xFF800000 : f32
    %6 = vector.broadcast %cst_8 : f32 to vector<16x8x2xf32>
    %c8_9 = arith.constant 8 : index
    %c24_10 = arith.constant 24 : index
    %c0_11 = arith.constant 0 : index
    %7 = vector.load %arg9[%c8_9, %c24_10, %c0_11] : memref<32x32x2xf32, #tpu.memory_space<vmem>>, vector<16x8x2xf32>
    tpu.vector_store %arg9[%c8_9, %c24_10, %c0_11], %6 {strides = array<i32>} : memref<32x32x2xf32, #tpu.memory_space<vmem>>, vector<16x8x2xf32>,
    %c0_12 = arith.constant 0 : index
    %c0_13 = arith.constant 0 : index
    %c0_14 = arith.constant 0 : index
    %c0_15 = arith.constant 0 : index
    %8 = vector.load %arg1[%c0_12, %c0_13, %c0_14, %c0_15] : memref<1x16x16x4xf32, #tpu.memory_space<vmem>>, vector<1x16x16x4xf32>
    %9 = vector.shape_cast %8 : vector<1x16x16x4xf32> to vector<16x16x4xf32>
    %10 = vector.shape_cast %9 : vector<16x16x4xf32> to vector<256x4xf32>
    %11 = arith.truncf %10 : vector<256x4xf32> to vector<256x4xbf16>
    %c0_16 = arith.constant 0 : index
    %c0_17 = arith.constant 0 : index
    %12 = vector.load %arg2[%c0_16, %c0_17] : memref<4x2xbf16, #tpu.memory_space<vmem>>, vector<4x2xbf16>
    %cst_18 = arith.constant dense<0.000000e+00> : vector<256x2xf32>
    %13 = tpu.matmul %11, %12, %cst_18 {dimension_numbers = #tpu.dot_dimension_numbers<[1], [0], [0], [1], [0, 0, 1, 1], [], []>} : vector<256x4xbf16>, vector<4x2xbf16>, vector<256x2xf32> -> vector<256x2xf32>
    %c0_19 = arith.constant 0 : index
    %c0_20 = arith.constant 0 : index
    %14 = vector.load %arg3[%c0_19, %c0_20] : memref<1x2xf32, #tpu.memory_space<vmem>>, vector<1x2xf32>
    %15 = vector.broadcast %14 : vector<1x2xf32> to vector<256x2xf32>
    %16 = arith.mulf %13, %15 : vector<256x2xf32>
    %c0_21 = arith.constant 0 : index
    %c0_22 = arith.constant 0 : index
    %17 = vector.load %arg4[%c0_21, %c0_22] : memref<1x2xf32, #tpu.memory_space<vmem>>, vector<1x2xf32>
    %18 = vector.broadcast %17 : vector<1x2xf32> to vector<256x2xf32>
    %19 = arith.addf %16, %18 : vector<256x2xf32>
    %cst_23 = arith.constant 0.000000e+00 : f32
    %20 = vector.broadcast %cst_23 : f32 to vector<256x2xf32>
    %21 = arith.subf %20, %19 : vector<256x2xf32>
    %22 = math.exp %21 : vector<256x2xf32>
    %cst_24 = arith.constant 1.000000e+00 : f32
    %23 = vector.broadcast %cst_24 : f32 to vector<256x2xf32>
    %24 = arith.addf %23, %22 : vector<256x2xf32>
    %25 = tpu.reciprocal %24 {approx = true} : vector<256x2xf32> -> vector<256x2xf32>
    %26 = arith.mulf %19, %25 : vector<256x2xf32>
    %27 = vector.shape_cast %26 : vector<256x2xf32> to vector<16x16x2xf32>
    %c8_25 = arith.constant 8 : index
    %c8_26 = arith.constant 8 : index
    %c0_27 = arith.constant 0 : index
    %28 = vector.load %arg9[%c8_25, %c8_26, %c0_27] : memref<32x32x2xf32, #tpu.memory_space<vmem>>, vector<16x16x2xf32>
    tpu.vector_store %arg9[%c8_25, %c8_26, %c0_27], %27 {strides = array<i32>} : memref<32x32x2xf32, #tpu.memory_space<vmem>>, vector<16x16x2xf32>,
    %29 = arith.truncf %26 : vector<256x2xf32> to vector<256x2xbf16>
    %c0_28 = arith.constant 0 : index
    %c0_29 = arith.constant 0 : index
    %c0_30 = arith.constant 0 : index
    %30 = vector.load %arg5[%c0_28, %c0_29, %c0_30] : memref<4x2x8xbf16, #tpu.memory_space<vmem>>, vector<1x2x8xbf16>
    %31 = vector.shape_cast %30 : vector<1x2x8xbf16> to vector<2x8xbf16>
    %cst_31 = arith.constant dense<0.000000e+00> : vector<256x8xf32>
    %32 = tpu.matmul %29, %31, %cst_31 {dimension_numbers = #tpu.dot_dimension_numbers<[1], [0], [0], [1], [0, 0, 1, 1], [], []>} : vector<256x2xbf16>, vector<2x8xbf16>, vector<256x8xf32> -> vector<256x8xf32>
    %c6 = arith.constant 6 : index
    %c0_32 = arith.constant 0 : index
    %c0_33 = arith.constant 0 : index
    %33 = vector.load %arg9[%c6, %c0_32, %c0_33] : memref<32x32x2xf32, #tpu.memory_space<vmem>>, vector<20x32x2xf32>
    %34 = vector.extract_strided_slice %33 {offsets = [0, 0, 0], sizes = [19, 32, 2], strides = [1, 1, 1]} : vector<20x32x2xf32> to vector<19x32x2xf32>
    %35 = vector.extract_strided_slice %33 {offsets = [1, 0, 0], sizes = [19, 32, 2], strides = [1, 1, 1]} : vector<20x32x2xf32> to vector<19x32x2xf32>
    %36 = arith.maximumf %34, %35 : vector<19x32x2xf32>
    %37 = vector.extract_strided_slice %36 {offsets = [0, 0, 0], sizes = [17, 32, 2], strides = [1, 1, 1]} : vector<19x32x2xf32> to vector<17x32x2xf32>
    %38 = vector.extract_strided_slice %36 {offsets = [2, 0, 0], sizes = [17, 32, 2], strides = [1, 1, 1]} : vector<19x32x2xf32> to vector<17x32x2xf32>
    %39 = arith.maximumf %37, %38 : vector<17x32x2xf32>
    %40 = vector.extract_strided_slice %39 {offsets = [0, 0, 0], sizes = [16, 32, 2], strides = [1, 1, 1]} : vector<17x32x2xf32> to vector<16x32x2xf32>
    %41 = vector.extract_strided_slice %33 {offsets = [4, 0, 0], sizes = [16, 32, 2], strides = [1, 1, 1]} : vector<20x32x2xf32> to vector<16x32x2xf32>
    %42 = arith.maximumf %40, %41 : vector<16x32x2xf32>
    %43 = vector.extract_strided_slice %42 {offsets = [0, 6, 0], sizes = [16, 20, 2], strides = [1, 1, 1]} : vector<16x32x2xf32> to vector<16x20x2xf32>
    %44 = vector.extract_strided_slice %43 {offsets = [0, 0, 0], sizes = [16, 19, 2], strides = [1, 1, 1]} : vector<16x20x2xf32> to vector<16x19x2xf32>
    %45 = vector.extract_strided_slice %43 {offsets = [0, 1, 0], sizes = [16, 19, 2], strides = [1, 1, 1]} : vector<16x20x2xf32> to vector<16x19x2xf32>
    %46 = arith.maximumf %44, %45 : vector<16x19x2xf32>
    %47 = vector.extract_strided_slice %46 {offsets = [0, 0, 0], sizes = [16, 17, 2], strides = [1, 1, 1]} : vector<16x19x2xf32> to vector<16x17x2xf32>
    %48 = vector.extract_strided_slice %46 {offsets = [0, 2, 0], sizes = [16, 17, 2], strides = [1, 1, 1]} : vector<16x19x2xf32> to vector<16x17x2xf32>
    %49 = arith.maximumf %47, %48 : vector<16x17x2xf32>
    %50 = vector.extract_strided_slice %49 {offsets = [0, 0, 0], sizes = [16, 16, 2], strides = [1, 1, 1]} : vector<16x17x2xf32> to vector<16x16x2xf32>
    %51 = vector.extract_strided_slice %43 {offsets = [0, 4, 0], sizes = [16, 16, 2], strides = [1, 1, 1]} : vector<16x20x2xf32> to vector<16x16x2xf32>
    %52 = arith.maximumf %50, %51 : vector<16x16x2xf32>
    %53 = vector.shape_cast %52 : vector<16x16x2xf32> to vector<256x2xf32>
    %54 = arith.truncf %53 : vector<256x2xf32> to vector<256x2xbf16>
    %c1 = arith.constant 1 : index
    %c0_34 = arith.constant 0 : index
    %c0_35 = arith.constant 0 : index
    %55 = vector.load %arg5[%c1, %c0_34, %c0_35] : memref<4x2x8xbf16, #tpu.memory_space<vmem>>, vector<1x2x8xbf16>
    %56 = vector.shape_cast %55 : vector<1x2x8xbf16> to vector<2x8xbf16>
    %cst_36 = arith.constant dense<0.000000e+00> : vector<256x8xf32>
    %57 = tpu.matmul %54, %56, %cst_36 {dimension_numbers = #tpu.dot_dimension_numbers<[1], [0], [0], [1], [0, 0, 1, 1], [], []>} : vector<256x2xbf16>, vector<2x8xbf16>, vector<256x8xf32> -> vector<256x8xf32>
    %58 = arith.addf %32, %57 : vector<256x8xf32>
    %c8_37 = arith.constant 8 : index
    %c8_38 = arith.constant 8 : index
    %c0_39 = arith.constant 0 : index
    %59 = vector.load %arg9[%c8_37, %c8_38, %c0_39] : memref<32x32x2xf32, #tpu.memory_space<vmem>>, vector<16x16x2xf32>
    tpu.vector_store %arg9[%c8_37, %c8_38, %c0_39], %52 {strides = array<i32>} : memref<32x32x2xf32, #tpu.memory_space<vmem>>, vector<16x16x2xf32>,
    %c6_40 = arith.constant 6 : index
    %c0_41 = arith.constant 0 : index
    %c0_42 = arith.constant 0 : index
    %60 = vector.load %arg9[%c6_40, %c0_41, %c0_42] : memref<32x32x2xf32, #tpu.memory_space<vmem>>, vector<20x32x2xf32>
    %61 = vector.extract_strided_slice %60 {offsets = [0, 0, 0], sizes = [19, 32, 2], strides = [1, 1, 1]} : vector<20x32x2xf32> to vector<19x32x2xf32>
    %62 = vector.extract_strided_slice %60 {offsets = [1, 0, 0], sizes = [19, 32, 2], strides = [1, 1, 1]} : vector<20x32x2xf32> to vector<19x32x2xf32>
    %63 = arith.maximumf %61, %62 : vector<19x32x2xf32>
    %64 = vector.extract_strided_slice %63 {offsets = [0, 0, 0], sizes = [17, 32, 2], strides = [1, 1, 1]} : vector<19x32x2xf32> to vector<17x32x2xf32>
    %65 = vector.extract_strided_slice %63 {offsets = [2, 0, 0], sizes = [17, 32, 2], strides = [1, 1, 1]} : vector<19x32x2xf32> to vector<17x32x2xf32>
    %66 = arith.maximumf %64, %65 : vector<17x32x2xf32>
    %67 = vector.extract_strided_slice %66 {offsets = [0, 0, 0], sizes = [16, 32, 2], strides = [1, 1, 1]} : vector<17x32x2xf32> to vector<16x32x2xf32>
    %68 = vector.extract_strided_slice %60 {offsets = [4, 0, 0], sizes = [16, 32, 2], strides = [1, 1, 1]} : vector<20x32x2xf32> to vector<16x32x2xf32>
    %69 = arith.maximumf %67, %68 : vector<16x32x2xf32>
    %70 = vector.extract_strided_slice %69 {offsets = [0, 6, 0], sizes = [16, 20, 2], strides = [1, 1, 1]} : vector<16x32x2xf32> to vector<16x20x2xf32>
    %71 = vector.extract_strided_slice %70 {offsets = [0, 0, 0], sizes = [16, 19, 2], strides = [1, 1, 1]} : vector<16x20x2xf32> to vector<16x19x2xf32>
    %72 = vector.extract_strided_slice %70 {offsets = [0, 1, 0], sizes = [16, 19, 2], strides = [1, 1, 1]} : vector<16x20x2xf32> to vector<16x19x2xf32>
    %73 = arith.maximumf %71, %72 : vector<16x19x2xf32>
    %74 = vector.extract_strided_slice %73 {offsets = [0, 0, 0], sizes = [16, 17, 2], strides = [1, 1, 1]} : vector<16x19x2xf32> to vector<16x17x2xf32>
    %75 = vector.extract_strided_slice %73 {offsets = [0, 2, 0], sizes = [16, 17, 2], strides = [1, 1, 1]} : vector<16x19x2xf32> to vector<16x17x2xf32>
    %76 = arith.maximumf %74, %75 : vector<16x17x2xf32>
    %77 = vector.extract_strided_slice %76 {offsets = [0, 0, 0], sizes = [16, 16, 2], strides = [1, 1, 1]} : vector<16x17x2xf32> to vector<16x16x2xf32>
    %78 = vector.extract_strided_slice %70 {offsets = [0, 4, 0], sizes = [16, 16, 2], strides = [1, 1, 1]} : vector<16x20x2xf32> to vector<16x16x2xf32>
    %79 = arith.maximumf %77, %78 : vector<16x16x2xf32>
    %80 = vector.shape_cast %79 : vector<16x16x2xf32> to vector<256x2xf32>
    %81 = arith.truncf %80 : vector<256x2xf32> to vector<256x2xbf16>
    %c2 = arith.constant 2 : index
    %c0_43 = arith.constant 0 : index
    %c0_44 = arith.constant 0 : index
    %82 = vector.load %arg5[%c2, %c0_43, %c0_44] : memref<4x2x8xbf16, #tpu.memory_space<vmem>>, vector<1x2x8xbf16>
    %83 = vector.shape_cast %82 : vector<1x2x8xbf16> to vector<2x8xbf16>
    %cst_45 = arith.constant dense<0.000000e+00> : vector<256x8xf32>
    %84 = tpu.matmul %81, %83, %cst_45 {dimension_numbers = #tpu.dot_dimension_numbers<[1], [0], [0], [1], [0, 0, 1, 1], [], []>} : vector<256x2xbf16>, vector<2x8xbf16>, vector<256x8xf32> -> vector<256x8xf32>
    %85 = arith.addf %58, %84 : vector<256x8xf32>
    %c8_46 = arith.constant 8 : index
    %c8_47 = arith.constant 8 : index
    %c0_48 = arith.constant 0 : index
    %86 = vector.load %arg9[%c8_46, %c8_47, %c0_48] : memref<32x32x2xf32, #tpu.memory_space<vmem>>, vector<16x16x2xf32>
    tpu.vector_store %arg9[%c8_46, %c8_47, %c0_48], %79 {strides = array<i32>} : memref<32x32x2xf32, #tpu.memory_space<vmem>>, vector<16x16x2xf32>,
    %c6_49 = arith.constant 6 : index
    %c0_50 = arith.constant 0 : index
    %c0_51 = arith.constant 0 : index
    %87 = vector.load %arg9[%c6_49, %c0_50, %c0_51] : memref<32x32x2xf32, #tpu.memory_space<vmem>>, vector<20x32x2xf32>
    %88 = vector.extract_strided_slice %87 {offsets = [0, 0, 0], sizes = [19, 32, 2], strides = [1, 1, 1]} : vector<20x32x2xf32> to vector<19x32x2xf32>
    %89 = vector.extract_strided_slice %87 {offsets = [1, 0, 0], sizes = [19, 32, 2], strides = [1, 1, 1]} : vector<20x32x2xf32> to vector<19x32x2xf32>
    %90 = arith.maximumf %88, %89 : vector<19x32x2xf32>
    %91 = vector.extract_strided_slice %90 {offsets = [0, 0, 0], sizes = [17, 32, 2], strides = [1, 1, 1]} : vector<19x32x2xf32> to vector<17x32x2xf32>
    %92 = vector.extract_strided_slice %90 {offsets = [2, 0, 0], sizes = [17, 32, 2], strides = [1, 1, 1]} : vector<19x32x2xf32> to vector<17x32x2xf32>
    %93 = arith.maximumf %91, %92 : vector<17x32x2xf32>
    %94 = vector.extract_strided_slice %93 {offsets = [0, 0, 0], sizes = [16, 32, 2], strides = [1, 1, 1]} : vector<17x32x2xf32> to vector<16x32x2xf32>
    %95 = vector.extract_strided_slice %87 {offsets = [4, 0, 0], sizes = [16, 32, 2], strides = [1, 1, 1]} : vector<20x32x2xf32> to vector<16x32x2xf32>
    %96 = arith.maximumf %94, %95 : vector<16x32x2xf32>
    %97 = vector.extract_strided_slice %96 {offsets = [0, 6, 0], sizes = [16, 20, 2], strides = [1, 1, 1]} : vector<16x32x2xf32> to vector<16x20x2xf32>
    %98 = vector.extract_strided_slice %97 {offsets = [0, 0, 0], sizes = [16, 19, 2], strides = [1, 1, 1]} : vector<16x20x2xf32> to vector<16x19x2xf32>
    %99 = vector.extract_strided_slice %97 {offsets = [0, 1, 0], sizes = [16, 19, 2], strides = [1, 1, 1]} : vector<16x20x2xf32> to vector<16x19x2xf32>
    %100 = arith.maximumf %98, %99 : vector<16x19x2xf32>
    %101 = vector.extract_strided_slice %100 {offsets = [0, 0, 0], sizes = [16, 17, 2], strides = [1, 1, 1]} : vector<16x19x2xf32> to vector<16x17x2xf32>
    %102 = vector.extract_strided_slice %100 {offsets = [0, 2, 0], sizes = [16, 17, 2], strides = [1, 1, 1]} : vector<16x19x2xf32> to vector<16x17x2xf32>
    %103 = arith.maximumf %101, %102 : vector<16x17x2xf32>
    %104 = vector.extract_strided_slice %103 {offsets = [0, 0, 0], sizes = [16, 16, 2], strides = [1, 1, 1]} : vector<16x17x2xf32> to vector<16x16x2xf32>
    %105 = vector.extract_strided_slice %97 {offsets = [0, 4, 0], sizes = [16, 16, 2], strides = [1, 1, 1]} : vector<16x20x2xf32> to vector<16x16x2xf32>
    %106 = arith.maximumf %104, %105 : vector<16x16x2xf32>
    %107 = vector.shape_cast %106 : vector<16x16x2xf32> to vector<256x2xf32>
    %108 = arith.truncf %107 : vector<256x2xf32> to vector<256x2xbf16>
    %c3 = arith.constant 3 : index
    %c0_52 = arith.constant 0 : index
    %c0_53 = arith.constant 0 : index
    %109 = vector.load %arg5[%c3, %c0_52, %c0_53] : memref<4x2x8xbf16, #tpu.memory_space<vmem>>, vector<1x2x8xbf16>
    %110 = vector.shape_cast %109 : vector<1x2x8xbf16> to vector<2x8xbf16>
    %cst_54 = arith.constant dense<0.000000e+00> : vector<256x8xf32>
    %111 = tpu.matmul %108, %110, %cst_54 {dimension_numbers = #tpu.dot_dimension_numbers<[1], [0], [0], [1], [0, 0, 1, 1], [], []>} : vector<256x2xbf16>, vector<2x8xbf16>, vector<256x8xf32> -> vector<256x8xf32>
    %112 = arith.addf %85, %111 : vector<256x8xf32>
    %c0_55 = arith.constant 0 : index
    %c0_56 = arith.constant 0 : index
    %113 = vector.load %arg6[%c0_55, %c0_56] : memref<1x8xf32, #tpu.memory_space<vmem>>, vector<1x8xf32>
    %114 = vector.broadcast %113 : vector<1x8xf32> to vector<256x8xf32>
    %115 = arith.mulf %112, %114 : vector<256x8xf32>
    %c0_57 = arith.constant 0 : index
    %c0_58 = arith.constant 0 : index
    %116 = vector.load %arg7[%c0_57, %c0_58] : memref<1x8xf32, #tpu.memory_space<vmem>>, vector<1x8xf32>
    %117 = vector.broadcast %116 : vector<1x8xf32> to vector<256x8xf32>
    %118 = arith.addf %115, %117 : vector<256x8xf32>
    %cst_59 = arith.constant 0.000000e+00 : f32
    %119 = vector.broadcast %cst_59 : f32 to vector<256x8xf32>
    %120 = arith.subf %119, %118 : vector<256x8xf32>
    %121 = math.exp %120 : vector<256x8xf32>
    %cst_60 = arith.constant 1.000000e+00 : f32
    %122 = vector.broadcast %cst_60 : f32 to vector<256x8xf32>
    %123 = arith.addf %122, %121 : vector<256x8xf32>
    %124 = tpu.reciprocal %123 {approx = true} : vector<256x8xf32> -> vector<256x8xf32>
    %125 = arith.mulf %118, %124 : vector<256x8xf32>
    %126 = vector.shape_cast %125 : vector<256x8xf32> to vector<16x16x8xf32>
    %c0_61 = arith.constant 0 : index
    %c0_62 = arith.constant 0 : index
    %c0_63 = arith.constant 0 : index
    %c0_64 = arith.constant 0 : index
    %127 = vector.load %arg8[%c0_61, %c0_62, %c0_63, %c0_64] : memref<1x16x16x8xf32, #tpu.memory_space<vmem>>, vector<1x16x16x8xf32>
    %128 = vector.shape_cast %127 : vector<1x16x16x8xf32> to vector<16x16x8xf32>
    %129 = vector.shape_cast %126 : vector<16x16x8xf32> to vector<1x16x16x8xf32>
    tpu.vector_store %arg8[%c0_61, %c0_62, %c0_63, %c0_64], %129 {strides = array<i32>} : memref<1x16x16x8xf32, #tpu.memory_space<vmem>>, vector<1x16x16x8xf32>,
    return
  }
  func.func @transform_0(%arg0: i32) -> (i32, i32, i32, i32) {
    %c0_i32 = arith.constant 0 : i32
    %c0_i32_0 = arith.constant 0 : i32
    %c0_i32_1 = arith.constant 0 : i32
    %c0_i32_2 = arith.constant 0 : i32
    return %arg0, %c0_i32, %c0_i32_0, %c0_i32_1 : i32, i32, i32, i32
  }
  func.func @transform_1(%arg0: i32) -> (i32, i32) {
    %c0_i32 = arith.constant 0 : i32
    %c0_i32_0 = arith.constant 0 : i32
    %c0_i32_1 = arith.constant 0 : i32
    return %c0_i32, %c0_i32_0 : i32, i32
  }
  func.func @transform_2(%arg0: i32) -> (i32, i32) {
    %c0_i32 = arith.constant 0 : i32
    %c0_i32_0 = arith.constant 0 : i32
    %c0_i32_1 = arith.constant 0 : i32
    return %c0_i32, %c0_i32_0 : i32, i32
  }
  func.func @transform_3(%arg0: i32) -> (i32, i32) {
    %c0_i32 = arith.constant 0 : i32
    %c0_i32_0 = arith.constant 0 : i32
    %c0_i32_1 = arith.constant 0 : i32
    return %c0_i32, %c0_i32_0 : i32, i32
  }
  func.func @transform_4(%arg0: i32) -> (i32, i32, i32) {
    %c0_i32 = arith.constant 0 : i32
    %c0_i32_0 = arith.constant 0 : i32
    %c0_i32_1 = arith.constant 0 : i32
    %c0_i32_2 = arith.constant 0 : i32
    return %c0_i32, %c0_i32_0, %c0_i32_1 : i32, i32, i32
  }
  func.func @transform_5(%arg0: i32) -> (i32, i32) {
    %c0_i32 = arith.constant 0 : i32
    %c0_i32_0 = arith.constant 0 : i32
    %c0_i32_1 = arith.constant 0 : i32
    return %c0_i32, %c0_i32_0 : i32, i32
  }
  func.func @transform_6(%arg0: i32) -> (i32, i32) {
    %c0_i32 = arith.constant 0 : i32
    %c0_i32_0 = arith.constant 0 : i32
    %c0_i32_1 = arith.constant 0 : i32
    return %c0_i32, %c0_i32_0 : i32, i32
  }
  func.func @transform_7(%arg0: i32) -> (i32, i32, i32, i32) {
    %c0_i32 = arith.constant 0 : i32
    %c0_i32_0 = arith.constant 0 : i32
    %c0_i32_1 = arith.constant 0 : i32
    %c0_i32_2 = arith.constant 0 : i32
    return %arg0, %c0_i32, %c0_i32_0, %c0_i32_1 : i32, i32, i32, i32
  }
}

</mosaic_0001>

<llo_original>
// kernel: sppf_forward.1
$region0: #{sppf_forward.1}
  #allocation0 [shape = 'u32[]', space=smem, size = 0x4, offset = 0x4, fixed_abs, tag = 'smem constant byte address 0x4 - core index']
  #allocation1 [shape = 'u32[144,128]{1,0:T(1,128)}', space=vmem, size = 0x12000, scoped, tag = 'internal scratch']
  #allocation2 [shape = 'f32[32,32,2]{2,1,0:T(8,128)}', space=vmem, size = 0x80000, scoped, tag = 'scratch operand']
  %s0 = inlined_call_operand.vmem [shape: f32[2,16,16,4], index: 0, kind: input, shape index: {}]
  %s1 = inlined_call_operand.vmem [shape: bf16[4,2], index: 1, kind: input, shape index: {}]
  %s2 = inlined_call_operand.vmem [shape: f32[1,2], index: 2, kind: input, shape index: {}]
  %s3 = inlined_call_operand.vmem [shape: f32[1,2], index: 3, kind: input, shape index: {}]
  %s4 = inlined_call_operand.vmem [shape: bf16[4,2,8], index: 4, kind: input, shape index: {}]
  %s5 = inlined_call_operand.vmem [shape: f32[1,8], index: 5, kind: input, shape index: {}]
  %s6 = inlined_call_operand.vmem [shape: f32[1,8], index: 6, kind: input, shape index: {}]
  %s7 = inlined_call_operand.vmem [shape: f32[2,16,16,8], index: 7, kind: output, shape index: {}]
  %s8 = sld [smem:[#allocation0]]
  $region61: #{sppf_forward.1} parent=0
    _
  %s10 = ssub.s32 1, %s8
  %s11 = scalar_select 0, %s10, %s8
  loop: start=0, step=1, limit=4
  $region2: #{sppf_forward.1} parent=0 // loop_pre_header
    _
  $region3: #{sppf_forward.1} parent=0 // loop_header
    %s13 = sphi 0, %s17
    %p14 = scmp.ge.s32.totalorder %s13, 4
    %s23 = sphi 0, %s25
    %s26 = sphi 0, %s23
    %s27 = sphi 0, %s26
    %s43 = sphi 0, %s27
    %s47 = sphi 0, %s47
    %s49 = sphi 0, %s47
    %s50 = sphi 0, %s49
    %s64 = sphi 0, %s50
    %s68 = sphi 0, %s68
    %s70 = sphi 0, %s68
    %s71 = sphi 0, %s70
    %s85 = sphi 0, %s71
    %s89 = sphi 0, %s89
    %s91 = sphi 0, %s89
    %s92 = sphi 0, %s91
    %s106 = sphi 0, %s92
    %s110 = sphi 0, %s110
    %s112 = sphi 0, %s110
    %s113 = sphi 0, %s112
    %s127 = sphi 0, %s113
    %s131 = sphi 0, %s131
    %s133 = sphi 0, %s131
    %s134 = sphi 0, %s133
    %s148 = sphi 0, %s134
    %s152 = sphi 0, %s152
    %s154 = sphi 0, %s152
    %s155 = sphi 0, %s154
    %s169 = sphi 0, %s155
    %s175 = sphi 0, %s177
    %s178 = sphi 0, %s175
    %s179 = sphi 0, %s178
    %s195 = sphi 0, %s179
  $region4: #{sppf_forward.1} parent=0 // loop_header_branch
    %16 = sbr.rel (%p14) target = $region8
  $region5: #{sppf_forward.1} parent=0 // loop_body
    %s18 = ssub.s32 %s13, 1
    %s19 = ssub.s32 %s13, 2
    %s20 = sadd.s32 %s13, 1
    %s21 = ssub.s32 %s13, %s20
    %p22 = scmp.eq.s32.totalorder %s21, 0
    %s24 = sadd.s32 %s23, 1
    %s25 = scalar_select %p22, %s23, %s24
    %p28 = pneg %p22
    %p29 = scmp.eq.s32.totalorder %s13, 1
    %p30 = por %p28, %p29
    %p31 = scmp.ne.s32.totalorder %s23, %s26
    %p32 = scmp.eq.s32.totalorder %s13, 0
    %p33 = por %p31, %p32
    %p34 = scmp.ne.s32.totalorder %s23, %s26
    %p35 = scmp.eq.s32.totalorder %s18, 1
    %p36 = por %p34, %p35
    %p37 = scmp.ne.s32.totalorder %s26, %s27
    %p38 = scmp.eq.s32.totalorder %s18, 0
    %p39 = por %p37, %p38
    %p40 = scmp.ne.s32.totalorder %s26, %s27
    %p41 = scmp.eq.s32.totalorder %s19, 1
    %p42 = por %p40, %p41
    %p44 = scmp.ne.s32.totalorder %s27, %s43
    %p45 = scmp.eq.s32.totalorder %s19, 0
    %p46 = por %p44, %p45
    %s48 = sadd.s32 %s47, 1
    %p51 = scmp.eq.s32.totalorder %s13, 1
    %p52 = scmp.ne.s32.totalorder %s47, %s49
    %p53 = scmp.eq.s32.totalorder %s13, 0
    %p54 = por %p52, %p53
    %p55 = scmp.ne.s32.totalorder %s47, %s49
    %p56 = scmp.eq.s32.totalorder %s18, 1
    %p57 = por %p55, %p56
    %p58 = scmp.ne.s32.totalorder %s49, %s50
    %p59 = scmp.eq.s32.totalorder %s18, 0
    %p60 = por %p58, %p59
    %p61 = scmp.ne.s32.totalorder %s49, %s50
    %p62 = scmp.eq.s32.totalorder %s19, 1
    %p63 = por %p61, %p62
    %p65 = scmp.ne.s32.totalorder %s50, %s64
    %p66 = scmp.eq.s32.totalorder %s19, 0
    %p67 = por %p65, %p66
    %s69 = sadd.s32 %s68, 1
    %p72 = scmp.eq.s32.totalorder %s13, 1
    %p73 = scmp.ne.s32.totalorder %s68, %s70
    %p74 = scmp.eq.s32.totalorder %s13, 0
    %p75 = por %p73, %p74
    %p76 = scmp.ne.s32.totalorder %s68, %s70
    %p77 = scmp.eq.s32.totalorder %s18, 1
    %p78 = por %p76, %p77
    %p79 = scmp.ne.s32.totalorder %s70, %s71
    %p80 = scmp.eq.s32.totalorder %s18, 0
    %p81 = por %p79, %p80
    %p82 = scmp.ne.s32.totalorder %s70, %s71
    %p83 = scmp.eq.s32.totalorder %s19, 1
    %p84 = por %p82, %p83
    %p86 = scmp.ne.s32.totalorder %s71, %s85
    %p87 = scmp.eq.s32.totalorder %s19, 0
    %p88 = por %p86, %p87
    %s90 = sadd.s32 %s89, 1
    %p93 = scmp.eq.s32.totalorder %s13, 1
    %p94 = scmp.ne.s32.totalorder %s89, %s91
    %p95 = scmp.eq.s32.totalorder %s13, 0
    %p96 = por %p94, %p95
    %p97 = scmp.ne.s32.totalorder %s89, %s91
    %p98 = scmp.eq.s32.totalorder %s18, 1
    %p99 = por %p97, %p98
    %p100 = scmp.ne.s32.totalorder %s91, %s92
    %p101 = scmp.eq.s32.totalorder %s18, 0
    %p102 = por %p100, %p101
    %p103 = scmp.ne.s32.totalorder %s91, %s92
    %p104 = scmp.eq.s32.totalorder %s19, 1
    %p105 = por %p103, %p104
    %p107 = scmp.ne.s32.totalorder %s92, %s106
    %p108 = scmp.eq.s32.totalorder %s19, 0
    %p109 = por %p107, %p108
    %s111 = sadd.s32 %s110, 1
    %p114 = scmp.eq.s32.totalorder %s13, 1
    %p115 = scmp.ne.s32.totalorder %s110, %s112
    %p116 = scmp.eq.s32.totalorder %s13, 0
    %p117 = por %p115, %p116
    %p118 = scmp.ne.s32.totalorder %s110, %s112
    %p119 = scmp.eq.s32.totalorder %s18, 1
    %p120 = por %p118, %p119
    %p121 = scmp.ne.s32.totalorder %s112, %s113
    %p122 = scmp.eq.s32.totalorder %s18, 0
    %p123 = por %p121, %p122
    %p124 = scmp.ne.s32.totalorder %s112, %s113
    %p125 = scmp.eq.s32.totalorder %s19, 1
    %p126 = por %p124, %p125
    %p128 = scmp.ne.s32.totalorder %s113, %s127
    %p129 = scmp.eq.s32.totalorder %s19, 0
    %p130 = por %p128, %p129
    %s132 = sadd.s32 %s131, 1
    %p135 = scmp.eq.s32.totalorder %s13, 1
    %p136 = scmp.ne.s32.totalorder %s131, %s133
    %p137 = scmp.eq.s32.totalorder %s13, 0
    %p138 = por %p136, %p137
    %p139 = scmp.ne.s32.totalorder %s131, %s133
    %p140 = scmp.eq.s32.totalorder %s18, 1
    %p141 = por %p139, %p140
    %p142 = scmp.ne.s32.totalorder %s133, %s134
    %p143 = scmp.eq.s32.totalorder %s18, 0
    %p144 = por %p142, %p143
    %p145 = scmp.ne.s32.totalorder %s133, %s134
    %p146 = scmp.eq.s32.totalorder %s19, 1
    %p147 = por %p145, %p146
    %p149 = scmp.ne.s32.totalorder %s134, %s148
    %p150 = scmp.eq.s32.totalorder %s19, 0
    %p151 = por %p149, %p150
    %s153 = sadd.s32 %s152, 1
    %p156 = scmp.eq.s32.totalorder %s13, 1
    %p157 = scmp.ne.s32.totalorder %s152, %s154
    %p158 = scmp.eq.s32.totalorder %s13, 0
    %p159 = por %p157, %p158
    %p160 = scmp.ne.s32.totalorder %s152, %s154
    %p161 = scmp.eq.s32.totalorder %s18, 1
    %p162 = por %p160, %p161
    %p163 = scmp.ne.s32.totalorder %s154, %s155
    %p164 = scmp.eq.s32.totalorder %s18, 0
    %p165 = por %p163, %p164
    %p166 = scmp.ne.s32.totalorder %s154, %s155
    %p167 = scmp.eq.s32.totalorder %s19, 1
    %p168 = por %p166, %p167
    %p170 = scmp.ne.s32.totalorder %s155, %s169
    %p171 = scmp.eq.s32.totalorder %s19, 0
    %p172 = por %p170, %p171
    %s173 = ssub.s32 %s13, %s20
    %p174 = scmp.eq.s32.totalorder %s173, 0
    %s176 = sadd.s32 %s175, 1
    %s177 = scalar_select %p174, %s175, %s176
    %p180 = pneg %p174
    %p181 = scmp.eq.s32.totalorder %s13, 1
    %p182 = por %p180, %p181
    %p183 = scmp.ne.s32.totalorder %s175, %s178
    %p184 = scmp.eq.s32.totalorder %s13, 0
    %p185 = por %p183, %p184
    %p186 = scmp.ne.s32.totalorder %s175, %s178
    %p187 = scmp.eq.s32.totalorder %s18, 1
    %p188 = por %p186, %p187
    %p189 = scmp.ne.s32.totalorder %s178, %s179
    %p190 = scmp.eq.s32.totalorder %s18, 0
    %p191 = por %p189, %p190
    %p192 = scmp.ne.s32.totalorder %s178, %s179
    %p193 = scmp.eq.s32.totalorder %s19, 1
    %p194 = por %p192, %p193
    %p196 = scmp.ne.s32.totalorder %s179, %s195
    %p197 = scmp.eq.s32.totalorder %s19, 0
    %p198 = por %p196, %p197
    %p199 = scmp.le.s32.totalorder 1, %s13
    %p200 = scmp.lt.s32.totalorder %s13, 3
    %p201 = pnand %p199, %p200
    %p202 = pneg %p201
    // Predicated region
    $region9: #{sppf_forward.1} parent=5 // pred_check
      _
    $region10: #{sppf_forward.1} parent=5 // pred_check_branch
      %204 = sbr.rel (%p201) target = $region12
    $region11: #{sppf_forward.1} parent=5 // pred_region
      %s205 = ssub.s32 %s13, 1
      // Predicated region
      $region13: #{sppf_forward.1} parent=11 // pred_check
        %p206 = pneg %p60
      $region14: #{sppf_forward.1} parent=11 // pred_check_branch
        %208 = sbr.rel (%p206) target = $region16
      $region15: #{sppf_forward.1} parent=11 // pred_region
        _
      $region16: #{sppf_forward.1} parent=11 // pred_fallthru
        _
      // Predicated region
      $region17: #{sppf_forward.1} parent=11 // pred_check
        %p209 = pneg %p81
      $region18: #{sppf_forward.1} parent=11 // pred_check_branch
        %211 = sbr.rel (%p209) target = $region20
      $region19: #{sppf_forward.1} parent=11 // pred_region
        _
      $region20: #{sppf_forward.1} parent=11 // pred_fallthru
        _
      // Predicated region
      $region21: #{sppf_forward.1} parent=11 // pred_check
        %p212 = pneg %p102
      $region22: #{sppf_forward.1} parent=11 // pred_check_branch
        %214 = sbr.rel (%p212) target = $region24
      $region23: #{sppf_forward.1} parent=11 // pred_region
        _
      $region24: #{sppf_forward.1} parent=11 // pred_fallthru
        _
      // Predicated region
      $region25: #{sppf_forward.1} parent=11 // pred_check
        %p215 = pneg %p123
      $region26: #{sppf_forward.1} parent=11 // pred_check_branch
        %217 = sbr.rel (%p215) target = $region28
      $region27: #{sppf_forward.1} parent=11 // pred_region
        _
      $region28: #{sppf_forward.1} parent=11 // pred_fallthru
        _
      // Predicated region
      $region29: #{sppf_forward.1} parent=11 // pred_check
        %p218 = pneg %p144
      $region30: #{sppf_forward.1} parent=11 // pred_check_branch
        %220 = sbr.rel (%p218) target = $region32
      $region31: #{sppf_forward.1} parent=11 // pred_region
        _
      $region32: #{sppf_forward.1} parent=11 // pred_fallthru
        _
      // Predicated region
      $region33: #{sppf_forward.1} parent=11 // pred_check
        %p221 = pneg %p165
      $region34: #{sppf_forward.1} parent=11 // pred_check_branch
        %223 = sbr.rel (%p221) target = $region36
      $region35: #{sppf_forward.1} parent=11 // pred_region
        _
      $region36: #{sppf_forward.1} parent=11 // pred_fallthru
        _
    $region12: #{sppf_forward.1} parent=5 // pred_fallthru
      _
    %p224 = scmp.lt.s32.totalorder %s13, 2
    // Predicated region
    $region37: #{sppf_forward.1} parent=5 // pred_check
      %p225 = pneg %p224
    $region38: #{sppf_forward.1} parent=5 // pred_check_branch
      %227 = sbr.rel (%p225) target = $region40
    $region39: #{sppf_forward.1} parent=5 // pred_region
      // Predicated region
      $region41: #{sppf_forward.1} parent=39 // pred_check
        %p228 = pneg %p33
      $region42: #{sppf_forward.1} parent=39 // pred_check_branch
        %230 = sbr.rel (%p228) target = $region44
      $region43: #{sppf_forward.1} parent=39 // pred_region
        %p231 = scmp.lt.s32.totalorder %s13, 1
        %s232 = scalar_select %p231, %s13, 1
        %s233 = smul.addr %s232, 32
        %s234 = smul.addr %s233, 8
        %s235 = scalar_lea.vmem %s0, %s234
      $region44: #{sppf_forward.1} parent=39 // pred_fallthru
        _
    $region40: #{sppf_forward.1} parent=5 // pred_fallthru
      _
    %p236 = scmp.le.s32.totalorder 1, %s13
    %p237 = scmp.lt.s32.totalorder %s13, 3
    %p238 = pnand %p236, %p237
    %p239 = pneg %p238
    // Predicated region
    $region45: #{sppf_forward.1} parent=5 // pred_check
      _
    $region46: #{sppf_forward.1} parent=5 // pred_check_branch
      %241 = sbr.rel (%p238) target = $region48
    $region47: #{sppf_forward.1} parent=5 // pred_region
      %s242 = ssub.s32 %s13, 1
      %p243 = scmp.lt.s32.totalorder %s18, 1
      %s244 = scalar_select %p243, %s18, 1
      %s245 = smul.addr %s244, 32
      %s246 = smul.addr %s245, 8
      %s247 = scalar_lea.vmem %s0, %s246
      %p248 = pneg %p39
      %p249 = pneg %p36
      %p250 = pneg %p60
      %p251 = pneg %p57
      %p252 = pneg %p81
      %p253 = pneg %p78
      %p254 = pneg %p102
      %p255 = pneg %p99
      %p256 = pneg %p123
      %p257 = pneg %p120
      %p258 = pneg %p144
      %p259 = pneg %p141
      %p260 = pneg %p165
      %p261 = pneg %p162
      %p262 = pneg %p191
      %p263 = pneg %p188
      %p264 = scmp.lt.s32.totalorder %s18, 1
      %s265 = scalar_select %p264, %s18, 1
      %s266 = smul.addr %s265, 32
      %s267 = smul.addr %s266, 8
      %s268 = scalar_lea.vmem %s7, %s267
      %p269 = scmp.lt.s32.totalorder %s18, 1
      %s270 = scalar_select %p269, %s18, 1
      %s271 = smul.addr %s270, 32
      %s272 = smul.addr %s271, 8
      %s273 = scalar_lea.vmem %s0, %s272
      %p274 = scmp.lt.s32.totalorder %s18, 1
      %s275 = scalar_select %p274, %s18, 1
      %s276 = smul.addr %s275, 32
      %s277 = smul.addr %s276, 8
      %s278 = scalar_lea.vmem %s7, %s277
      %vm280 = vcmask 15360
      %281 = vst.msk [vmem:[#allocation2] sm:$0xff] %vm280, -inf
      %282 = vst.msk [vmem:[#allocation2 + $0x8] sm:$0xff] %vm280, -inf
      %283 = vst.msk [vmem:[#allocation2 + $0x10] sm:$0xff] %vm280, -inf
      %284 = vst.msk [vmem:[#allocation2 + $0x18] sm:$0xff] %vm280, -inf
      %285 = vst.msk [vmem:[#allocation2 + $0x20] sm:$0xff] %vm280, -inf
      %286 = vst.msk [vmem:[#allocation2 + $0x28] sm:$0xff] %vm280, -inf
      %287 = vst.msk [vmem:[#allocation2 + $0x30] sm:$0xff] %vm280, -inf
      %288 = vst.msk [vmem:[#allocation2 + $0x38] sm:$0xff] %vm280, -inf
      %289 = vst.msk [vmem:[#allocation2 + $0x40] sm:$0xff] %vm280, -inf
      %290 = vst.msk [vmem:[#allocation2 + $0x48] sm:$0xff] %vm280, -inf
      %291 = vst.msk [vmem:[#allocation2 + $0x50] sm:$0xff] %vm280, -inf
      %292 = vst.msk [vmem:[#allocation2 + $0x58] sm:$0xff] %vm280, -inf
      %293 = vst.msk [vmem:[#allocation2 + $0x60] sm:$0xff] %vm280, -inf
      %294 = vst.msk [vmem:[#allocation2 + $0x68] sm:$0xff] %vm280, -inf
      %295 = vst.msk [vmem:[#allocation2 + $0x70] sm:$0xff] %vm280, -inf
      %296 = vst.msk [vmem:[#allocation2 + $0x78] sm:$0xff] %vm280, -inf
      %297 = vst.msk [vmem:[#allocation2 + $0x80] sm:$0xff] %vm280, -inf
      %298 = vst.msk [vmem:[#allocation2 + $0x88] sm:$0xff] %vm280, -inf
      %299 = vst.msk [vmem:[#allocation2 + $0x90] sm:$0xff] %vm280, -inf
      %300 = vst.msk [vmem:[#allocation2 + $0x98] sm:$0xff] %vm280, -inf
      %301 = vst.msk [vmem:[#allocation2 + $0xa0] sm:$0xff] %vm280, -inf
      %302 = vst.msk [vmem:[#allocation2 + $0xa8] sm:$0xff] %vm280, -inf
      %303 = vst.msk [vmem:[#allocation2 + $0xb0] sm:$0xff] %vm280, -inf
      %304 = vst.msk [vmem:[#allocation2 + $0xb8] sm:$0xff] %vm280, -inf
      %305 = vst.msk [vmem:[#allocation2 + $0xc0] sm:$0xff] %vm280, -inf
      %306 = vst.msk [vmem:[#allocation2 + $0xc8] sm:$0xff] %vm280, -inf
      %307 = vst.msk [vmem:[#allocation2 + $0xd0] sm:$0xff] %vm280, -inf
      %308 = vst.msk [vmem:[#allocation2 + $0xd8] sm:$0xff] %vm280, -inf
      %309 = vst.msk [vmem:[#allocation2 + $0xe0] sm:$0xff] %vm280, -inf
      %310 = vst.msk [vmem:[#allocation2 + $0xe8] sm:$0xff] %vm280, -inf
      %311 = vst.msk [vmem:[#allocation2 + $0xf0] sm:$0xff] %vm280, -inf
      %312 = vst.msk [vmem:[#allocation2 + $0xf8] sm:$0xff] %vm280, -inf
      %s313 = scalar_lea.vmem [#allocation2], 768
      %314 = vst.msk [vmem:[%s313] sm:$0xff] %vm280, -inf
      %315 = vst.msk [vmem:[%s313 + $0x8] sm:$0xff] %vm280, -inf
      %316 = vst.msk [vmem:[%s313 + $0x10] sm:$0xff] %vm280, -inf
      %317 = vst.msk [vmem:[%s313 + $0x18] sm:$0xff] %vm280, -inf
      %318 = vst.msk [vmem:[%s313 + $0x20] sm:$0xff] %vm280, -inf
      %319 = vst.msk [vmem:[%s313 + $0x28] sm:$0xff] %vm280, -inf
      %320 = vst.msk [vmem:[%s313 + $0x30] sm:$0xff] %vm280, -inf
      %321 = vst.msk [vmem:[%s313 + $0x38] sm:$0xff] %vm280, -inf
      %322 = vst.msk [vmem:[%s313 + $0x40] sm:$0xff] %vm280, -inf
      %323 = vst.msk [vmem:[%s313 + $0x48] sm:$0xff] %vm280, -inf
      %324 = vst.msk [vmem:[%s313 + $0x50] sm:$0xff] %vm280, -inf
      %325 = vst.msk [vmem:[%s313 + $0x58] sm:$0xff] %vm280, -inf
      %326 = vst.msk [vmem:[%s313 + $0x60] sm:$0xff] %vm280, -inf
      %327 = vst.msk [vmem:[%s313 + $0x68] sm:$0xff] %vm280, -inf
      %328 = vst.msk [vmem:[%s313 + $0x70] sm:$0xff] %vm280, -inf
      %329 = vst.msk [vmem:[%s313 + $0x78] sm:$0xff] %vm280, -inf
      %330 = vst.msk [vmem:[%s313 + $0x80] sm:$0xff] %vm280, -inf
      %331 = vst.msk [vmem:[%s313 + $0x88] sm:$0xff] %vm280, -inf
      %332 = vst.msk [vmem:[%s313 + $0x90] sm:$0xff] %vm280, -inf
      %333 = vst.msk [vmem:[%s313 + $0x98] sm:$0xff] %vm280, -inf
      %334 = vst.msk [vmem:[%s313 + $0xa0] sm:$0xff] %vm280, -inf
      %335 = vst.msk [vmem:[%s313 + $0xa8] sm:$0xff] %vm280, -inf
      %336 = vst.msk [vmem:[%s313 + $0xb0] sm:$0xff] %vm280, -inf
      %337 = vst.msk [vmem:[%s313 + $0xb8] sm:$0xff] %vm280, -inf
      %338 = vst.msk [vmem:[%s313 + $0xc0] sm:$0xff] %vm280, -inf
      %339 = vst.msk [vmem:[%s313 + $0xc8] sm:$0xff] %vm280, -inf
      %340 = vst.msk [vmem:[%s313 + $0xd0] sm:$0xff] %vm280, -inf
      %341 = vst.msk [vmem:[%s313 + $0xd8] sm:$0xff] %vm280, -inf
      %342 = vst.msk [vmem:[%s313 + $0xe0] sm:$0xff] %vm280, -inf
      %343 = vst.msk [vmem:[%s313 + $0xe8] sm:$0xff] %vm280, -inf
      %344 = vst.msk [vmem:[%s313 + $0xf0] sm:$0xff] %vm280, -inf
      %345 = vst.msk [vmem:[%s313 + $0xf8] sm:$0xff] %vm280, -inf
      %s346 = scalar_lea.vmem [#allocation2], 256
      %347 = vst.msk [vmem:[%s346] sm:$0xff] %vm280, -inf
      %348 = vst.msk [vmem:[%s346 + $0x20] sm:$0xff] %vm280, -inf
      %349 = vst.msk [vmem:[%s346 + $0x40] sm:$0xff] %vm280, -inf
      %350 = vst.msk [vmem:[%s346 + $0x60] sm:$0xff] %vm280, -inf
      %351 = vst.msk [vmem:[%s346 + $0x80] sm:$0xff] %vm280, -inf
      %352 = vst.msk [vmem:[%s346 + $0xa0] sm:$0xff] %vm280, -inf
      %353 = vst.msk [vmem:[%s346 + $0xc0] sm:$0xff] %vm280, -inf
      %354 = vst.msk [vmem:[%s346 + $0xe0] sm:$0xff] %vm280, -inf
      %355 = vst.msk [vmem:[%s346 + $0x100] sm:$0xff] %vm280, -inf
      %356 = vst.msk [vmem:[%s346 + $0x120] sm:$0xff] %vm280, -inf
      %357 = vst.msk [vmem:[%s346 + $0x140] sm:$0xff] %vm280, -inf
      %358 = vst.msk [vmem:[%s346 + $0x160] sm:$0xff] %vm280, -inf
      %359 = vst.msk [vmem:[%s346 + $0x180] sm:$0xff] %vm280, -inf
      %360 = vst.msk [vmem:[%s346 + $0x1a0] sm:$0xff] %vm280, -inf
      %361 = vst.msk [vmem:[%s346 + $0x1c0] sm:$0xff] %vm280, -inf
      %362 = vst.msk [vmem:[%s346 + $0x1e0] sm:$0xff] %vm280, -inf
      %363 = vst.msk [vmem:[%s346 + $0x18] sm:$0xff] %vm280, -inf
      %364 = vst.msk [vmem:[%s346 + $0x38] sm:$0xff] %vm280, -inf
      %365 = vst.msk [vmem:[%s346 + $0x58] sm:$0xff] %vm280, -inf
      %366 = vst.msk [vmem:[%s346 + $0x78] sm:$0xff] %vm280, -inf
      %367 = vst.msk [vmem:[%s346 + $0x98] sm:$0xff] %vm280, -inf
      %368 = vst.msk [vmem:[%s346 + $0xb8] sm:$0xff] %vm280, -inf
      %369 = vst.msk [vmem:[%s346 + $0xd8] sm:$0xff] %vm280, -inf
      %370 = vst.msk [vmem:[%s346 + $0xf8] sm:$0xff] %vm280, -inf
      %371 = vst.msk [vmem:[%s346 + $0x118] sm:$0xff] %vm280, -inf
      %372 = vst.msk [vmem:[%s346 + $0x138] sm:$0xff] %vm280, -inf
      %373 = vst.msk [vmem:[%s346 + $0x158] sm:$0xff] %vm280, -inf
      %374 = vst.msk [vmem:[%s346 + $0x178] sm:$0xff] %vm280, -inf
      %375 = vst.msk [vmem:[%s346 + $0x198] sm:$0xff] %vm280, -inf
      %376 = vst.msk [vmem:[%s346 + $0x1b8] sm:$0xff] %vm280, -inf
      %377 = vst.msk [vmem:[%s346 + $0x1d8] sm:$0xff] %vm280, -inf
      %378 = vst.msk [vmem:[%s346 + $0x1f8] sm:$0xff] %vm280, -inf
      %v379 = vld [vmem:[%s273] sm:$0xff]
      %v380 = vld [vmem:[%s273 + $0x8] sm:$0xff]
      %v381 = vld [vmem:[%s273 + $0x10] sm:$0xff]
      %v382 = vld [vmem:[%s273 + $0x18] sm:$0xff]
      %v383 = vld [vmem:[%s273 + $0x20] sm:$0xff]
      %v384 = vld [vmem:[%s273 + $0x28] sm:$0xff]
      %v385 = vld [vmem:[%s273 + $0x30] sm:$0xff]
      %v386 = vld [vmem:[%s273 + $0x38] sm:$0xff]
      %v387 = vld [vmem:[%s273 + $0x40] sm:$0xff]
      %v388 = vld [vmem:[%s273 + $0x48] sm:$0xff]
      %v389 = vld [vmem:[%s273 + $0x50] sm:$0xff]
      %v390 = vld [vmem:[%s273 + $0x58] sm:$0xff]
      %v391 = vld [vmem:[%s273 + $0x60] sm:$0xff]
      %v392 = vld [vmem:[%s273 + $0x68] sm:$0xff]
      %v393 = vld [vmem:[%s273 + $0x70] sm:$0xff]
      %v394 = vld [vmem:[%s273 + $0x78] sm:$0xff]
      %v395 = vld [vmem:[%s273 + $0x80] sm:$0xff]
      %v396 = vld [vmem:[%s273 + $0x88] sm:$0xff]
      %v397 = vld [vmem:[%s273 + $0x90] sm:$0xff]
      %v398 = vld [vmem:[%s273 + $0x98] sm:$0xff]
      %v399 = vld [vmem:[%s273 + $0xa0] sm:$0xff]
      %v400 = vld [vmem:[%s273 + $0xa8] sm:$0xff]
      %v401 = vld [vmem:[%s273 + $0xb0] sm:$0xff]
      %v402 = vld [vmem:[%s273 + $0xb8] sm:$0xff]
      %v403 = vld [vmem:[%s273 + $0xc0] sm:$0xff]
      %v404 = vld [vmem:[%s273 + $0xc8] sm:$0xff]
      %v405 = vld [vmem:[%s273 + $0xd0] sm:$0xff]
      %v406 = vld [vmem:[%s273 + $0xd8] sm:$0xff]
      %v407 = vld [vmem:[%s273 + $0xe0] sm:$0xff]
      %v408 = vld [vmem:[%s273 + $0xe8] sm:$0xff]
      %v409 = vld [vmem:[%s273 + $0xf0] sm:$0xff]
      %v410 = vld [vmem:[%s273 + $0xf8] sm:$0xff]
      %v411 = vpack.c.bf16 %v380, %v379
      %v412 = vpack.c.bf16 %v382, %v381
      %v413 = vpack.c.bf16 %v384, %v383
      %v414 = vpack.c.bf16 %v386, %v385
      %v415 = vpack.c.bf16 %v388, %v387
      %v416 = vpack.c.bf16 %v390, %v389
      %v417 = vpack.c.bf16 %v392, %v391
      %v418 = vpack.c.bf16 %v394, %v393
      %v419 = vpack.c.bf16 %v396, %v395
      %v420 = vpack.c.bf16 %v398, %v397
      %v421 = vpack.c.bf16 %v400, %v399
      %v422 = vpack.c.bf16 %v402, %v401
      %v423 = vpack.c.bf16 %v404, %v403
      %v424 = vpack.c.bf16 %v406, %v405
      %v425 = vpack.c.bf16 %v408, %v407
      %v426 = vpack.c.bf16 %v410, %v409
      %v427 = vld [vmem:[%s1] sm:$0x3]
      %vm428 = vcmask 31744
      %v430 = vsel %vm428, %v411, 0
      %v433 = vsel %vm428, %v412, 0
      %v436 = vsel %vm428, %v413, 0
      %v439 = vsel %vm428, %v414, 0
      %v442 = vsel %vm428, %v415, 0
      %v445 = vsel %vm428, %v416, 0
      %v448 = vsel %vm428, %v417, 0
      %v451 = vsel %vm428, %v418, 0
      %v454 = vsel %vm428, %v419, 0
      %v457 = vsel %vm428, %v420, 0
      %v460 = vsel %vm428, %v421, 0
      %v463 = vsel %vm428, %v422, 0
      %v466 = vsel %vm428, %v423, 0
      %v469 = vsel %vm428, %v424, 0
      %v472 = vsel %vm428, %v425, 0
      %v475 = vsel %vm428, %v426, 0
      %vm477 = vcmask 1041408
      %v479 = vsel %vm477, %v427, 0
      %481 = vmatprep.subr.bf16.mxu0 0
      %482 = vmatpush1.bf16.msra.mxu0 0
      %483 = vmatprep.subr.bf16.mxu0 0
      %484 = vmatpush1.bf16.msra.mxu0 0
      %485 = vmatprep.subr.bf16.mxu0 0
      %486 = vmatpush1.bf16.msra.mxu0 0
      %487 = vmatprep.subr.bf16.mxu0 0
      %488 = vmatpush1.bf16.msra.mxu0 0
      %489 = vmatprep.subr.bf16.mxu0 0
      %490 = vmatpush1.bf16.msra.mxu0 0
      %491 = vmatprep.subr.bf16.mxu0 0
      %492 = vmatpush1.bf16.msra.mxu0 0
      %493 = vmatprep.subr.bf16.mxu0 0
      %494 = vmatpush1.bf16.msra.mxu0 0
      %495 = vmatprep.subr.bf16.mxu0 0
      %496 = vmatpush1.bf16.msra.mxu0 %v479
      %497 = vmatprep.subr.bf16.mxu0 0
      %498 = vmatpush2.bf16.msra.mxu0 0
      %499 = vmatprep.subr.bf16.mxu0 0
      %500 = vmatpush2.bf16.msra.mxu0 0
      %501 = vmatprep.subr.bf16.mxu0 0
      %502 = vmatpush2.bf16.msra.mxu0 0
      %503 = vmatprep.subr.bf16.mxu0 0
      %504 = vmatpush2.bf16.msra.mxu0 0
      %505 = vmatprep.subr.bf16.mxu0 0
      %506 = vmatpush2.bf16.msra.mxu0 0
      %507 = vmatprep.subr.bf16.mxu0 0
      %508 = vmatpush2.bf16.msra.mxu0 0
      %509 = vmatprep.subr.bf16.mxu0 0
      %510 = vmatpush2.bf16.msra.mxu0 0
      %511 = vmatprep.subr.bf16.mxu0 0
      %512 = vmatpush2.bf16.msra.mxu0 0
      %513 = vmatprep.mubr.bf16.mxu0 0
      %514 = vmatmul.mubr.bf16.gmra.mxu0 %v430
      %v515 = vpop.f32.mrf.mxu0
      %v516 = vadd.f32 0.0, %v515
      %v517 = vpop.f32.mrf.mxu0
      %v518 = vpop.f32.mrf.mxu0
      %v519 = vadd.f32 0.0, %v518
      %v520 = vpop.f32.mrf.mxu0
      %521 = vmatprep.mubr.bf16.mxu0 0
      %522 = vmatmul.mubr.bf16.gmra.mxu0 %v433
      %v523 = vpop.f32.mrf.mxu0
      %v524 = vadd.f32 0.0, %v523
      %v525 = vpop.f32.mrf.mxu0
      %v526 = vpop.f32.mrf.mxu0
      %v527 = vadd.f32 0.0, %v526
      %v528 = vpop.f32.mrf.mxu0
      %529 = vmatprep.mubr.bf16.mxu0 0
      %530 = vmatmul.mubr.bf16.gmra.mxu0 %v436
      %v531 = vpop.f32.mrf.mxu0
      %v532 = vadd.f32 0.0, %v531
      %v533 = vpop.f32.mrf.mxu0
      %v534 = vpop.f32.mrf.mxu0
      %v535 = vadd.f32 0.0, %v534
      %v536 = vpop.f32.mrf.mxu0
      %537 = vmatprep.mubr.bf16.mxu0 0
      %538 = vmatmul.mubr.bf16.gmra.mxu0 %v439
      %v539 = vpop.f32.mrf.mxu0
      %v540 = vadd.f32 0.0, %v539
      %v541 = vpop.f32.mrf.mxu0
      %v542 = vpop.f32.mrf.mxu0
      %v543 = vadd.f32 0.0, %v542
      %v544 = vpop.f32.mrf.mxu0
      %545 = vmatprep.mubr.bf16.mxu0 0
      %546 = vmatmul.mubr.bf16.gmra.mxu0 %v442
      %v547 = vpop.f32.mrf.mxu0
      %v548 = vadd.f32 0.0, %v547
      %v549 = vpop.f32.mrf.mxu0
      %v550 = vpop.f32.mrf.mxu0
      %v551 = vadd.f32 0.0, %v550
      %v552 = vpop.f32.mrf.mxu0
      %553 = vmatprep.mubr.bf16.mxu0 0
      %554 = vmatmul.mubr.bf16.gmra.mxu0 %v445
      %v555 = vpop.f32.mrf.mxu0
      %v556 = vadd.f32 0.0, %v555
      %v557 = vpop.f32.mrf.mxu0
      %v558 = vpop.f32.mrf.mxu0
      %v559 = vadd.f32 0.0, %v558
      %v560 = vpop.f32.mrf.mxu0
      %561 = vmatprep.mubr.bf16.mxu0 0
      %562 = vmatmul.mubr.bf16.gmra.mxu0 %v448
      %v563 = vpop.f32.mrf.mxu0
      %v564 = vadd.f32 0.0, %v563
      %v565 = vpop.f32.mrf.mxu0
      %v566 = vpop.f32.mrf.mxu0
      %v567 = vadd.f32 0.0, %v566
      %v568 = vpop.f32.mrf.mxu0
      %569 = vmatprep.mubr.bf16.mxu0 0
      %570 = vmatmul.mubr.bf16.gmra.mxu0 %v451
      %v571 = vpop.f32.mrf.mxu0
      %v572 = vadd.f32 0.0, %v571
      %v573 = vpop.f32.mrf.mxu0
      %v574 = vpop.f32.mrf.mxu0
      %v575 = vadd.f32 0.0, %v574
      %v576 = vpop.f32.mrf.mxu0
      %577 = vmatprep.mubr.bf16.mxu0 0
      %578 = vmatmul.mubr.bf16.gmra.mxu0 %v454
      %v579 = vpop.f32.mrf.mxu0
      %v580 = vadd.f32 0.0, %v579
      %v581 = vpop.f32.mrf.mxu0
      %v582 = vpop.f32.mrf.mxu0
      %v583 = vadd.f32 0.0, %v582
      %v584 = vpop.f32.mrf.mxu0
      %585 = vmatprep.mubr.bf16.mxu0 0
      %586 = vmatmul.mubr.bf16.gmra.mxu0 %v457
      %v587 = vpop.f32.mrf.mxu0
      %v588 = vadd.f32 0.0, %v587
      %v589 = vpop.f32.mrf.mxu0
      %v590 = vpop.f32.mrf.mxu0
      %v591 = vadd.f32 0.0, %v590
      %v592 = vpop.f32.mrf.mxu0
      %593 = vmatprep.mubr.bf16.mxu0 0
      %594 = vmatmul.mubr.bf16.gmra.mxu0 %v460
      %v595 = vpop.f32.mrf.mxu0
      %v596 = vadd.f32 0.0, %v595
      %v597 = vpop.f32.mrf.mxu0
      %v598 = vpop.f32.mrf.mxu0
      %v599 = vadd.f32 0.0, %v598
      %v600 = vpop.f32.mrf.mxu0
      %601 = vmatprep.mubr.bf16.mxu0 0
      %602 = vmatmul.mubr.bf16.gmra.mxu0 %v463
      %v603 = vpop.f32.mrf.mxu0
      %v604 = vadd.f32 0.0, %v603
      %v605 = vpop.f32.mrf.mxu0
      %v606 = vpop.f32.mrf.mxu0
      %v607 = vadd.f32 0.0, %v606
      %v608 = vpop.f32.mrf.mxu0
      %609 = vmatprep.mubr.bf16.mxu0 0
      %610 = vmatmul.mubr.bf16.gmra.mxu0 %v466
      %v611 = vpop.f32.mrf.mxu0
      %v612 = vadd.f32 0.0, %v611
      %v613 = vpop.f32.mrf.mxu0
      %v614 = vpop.f32.mrf.mxu0
      %v615 = vadd.f32 0.0, %v614
      %v616 = vpop.f32.mrf.mxu0
      %617 = vmatprep.mubr.bf16.mxu0 0
      %618 = vmatmul.mubr.bf16.gmra.mxu0 %v469
      %v619 = vpop.f32.mrf.mxu0
      %v620 = vadd.f32 0.0, %v619
      %v621 = vpop.f32.mrf.mxu0
      %v622 = vpop.f32.mrf.mxu0
      %v623 = vadd.f32 0.0, %v622
      %v624 = vpop.f32.mrf.mxu0
      %625 = vmatprep.mubr.bf16.mxu0 0
      %626 = vmatmul.mubr.bf16.gmra.mxu0 %v472
      %v627 = vpop.f32.mrf.mxu0
      %v628 = vadd.f32 0.0, %v627
      %v629 = vpop.f32.mrf.mxu0
      %v630 = vpop.f32.mrf.mxu0
      %v631 = vadd.f32 0.0, %v630
      %v632 = vpop.f32.mrf.mxu0
      %633 = vmatprep.mubr.bf16.mxu0 0
      %634 = vmatmul.mubr.bf16.gmra.mxu0 %v475
      %v635 = vpop.f32.mrf.mxu0
      %v636 = vadd.f32 0.0, %v635
      %v637 = vpop.f32.mrf.mxu0
      %v638 = vpop.f32.mrf.mxu0
      %v639 = vadd.f32 0.0, %v638
      %v640 = vpop.f32.mrf.mxu0
      %641 = vdwg.mxu0
      %v642 = vld [vmem:[%s2] sm:$0x1]
      %v644 = vlaneseq
      %v645 = vshrl.u32 %v644, 7
      %v646 = vsub.s32 0, %v645
      %v647 = vrot.slane %v642, %v646
      %v649 = vmul.f32 %v516, %v647
      %v650 = vmul.f32 %v519, %v647
      %v651 = vmul.f32 %v524, %v647
      %v652 = vmul.f32 %v527, %v647
      %v653 = vmul.f32 %v532, %v647
      %v654 = vmul.f32 %v535, %v647
      %v655 = vmul.f32 %v540, %v647
      %v656 = vmul.f32 %v543, %v647
      %v657 = vmul.f32 %v548, %v647
      %v658 = vmul.f32 %v551, %v647
      %v659 = vmul.f32 %v556, %v647
      %v660 = vmul.f32 %v559, %v647
      %v661 = vmul.f32 %v564, %v647
      %v662 = vmul.f32 %v567, %v647
      %v663 = vmul.f32 %v572, %v647
      %v664 = vmul.f32 %v575, %v647
      %v665 = vmul.f32 %v580, %v647
      %v666 = vmul.f32 %v583, %v647
      %v667 = vmul.f32 %v588, %v647
      %v668 = vmul.f32 %v591, %v647
      %v669 = vmul.f32 %v596, %v647
      %v670 = vmul.f32 %v599, %v647
      %v671 = vmul.f32 %v604, %v647
      %v672 = vmul.f32 %v607, %v647
      %v673 = vmul.f32 %v612, %v647
      %v674 = vmul.f32 %v615, %v647
      %v675 = vmul.f32 %v620, %v647
      %v676 = vmul.f32 %v623, %v647
      %v677 = vmul.f32 %v628, %v647
      %v678 = vmul.f32 %v631, %v647
      %v679 = vmul.f32 %v636, %v647
      %v680 = vmul.f32 %v639, %v647
      %v681 = vld [vmem:[%s3] sm:$0x1]
      %v683 = vlaneseq
      %v684 = vshrl.u32 %v683, 7
      %v685 = vsub.s32 0, %v684
      %v686 = vrot.slane %v681, %v685
      %v688 = vadd.f32 %v649, %v686
      %v689 = vadd.f32 %v650, %v686
      %v690 = vadd.f32 %v651, %v686
      %v691 = vadd.f32 %v652, %v686
      %v692 = vadd.f32 %v653, %v686
      %v693 = vadd.f32 %v654, %v686
      %v694 = vadd.f32 %v655, %v686
      %v695 = vadd.f32 %v656, %v686
      %v696 = vadd.f32 %v657, %v686
      %v697 = vadd.f32 %v658, %v686
      %v698 = vadd.f32 %v659, %v686
      %v699 = vadd.f32 %v660, %v686
      %v700 = vadd.f32 %v661, %v686
      %v701 = vadd.f32 %v662, %v686
      %v702 = vadd.f32 %v663, %v686
      %v703 = vadd.f32 %v664, %v686
      %v704 = vadd.f32 %v665, %v686
      %v705 = vadd.f32 %v666, %v686
      %v706 = vadd.f32 %v667, %v686
      %v707 = vadd.f32 %v668, %v686
      %v708 = vadd.f32 %v669, %v686
      %v709 = vadd.f32 %v670, %v686
      %v710 = vadd.f32 %v671, %v686
      %v711 = vadd.f32 %v672, %v686
      %v712 = vadd.f32 %v673, %v686
      %v713 = vadd.f32 %v674, %v686
      %v714 = vadd.f32 %v675, %v686
      %v715 = vadd.f32 %v676, %v686
      %v716 = vadd.f32 %v677, %v686
      %v717 = vadd.f32 %v678, %v686
      %v718 = vadd.f32 %v679, %v686
      %v719 = vadd.f32 %v680, %v686
      %v720 = vsub.f32 0.0, %v688
      %v721 = vsub.f32 0.0, %v689
      %v722 = vsub.f32 0.0, %v690
      %v723 = vsub.f32 0.0, %v691
      %v724 = vsub.f32 0.0, %v692
      %v725 = vsub.f32 0.0, %v693
      %v726 = vsub.f32 0.0, %v694
      %v727 = vsub.f32 0.0, %v695
      %v728 = vsub.f32 0.0, %v696
      %v729 = vsub.f32 0.0, %v697
      %v730 = vsub.f32 0.0, %v698
      %v731 = vsub.f32 0.0, %v699
      %v732 = vsub.f32 0.0, %v700
      %v733 = vsub.f32 0.0, %v701
      %v734 = vsub.f32 0.0, %v702
      %v735 = vsub.f32 0.0, %v703
      %v736 = vsub.f32 0.0, %v704
      %v737 = vsub.f32 0.0, %v705
      %v738 = vsub.f32 0.0, %v706
      %v739 = vsub.f32 0.0, %v707
      %v740 = vsub.f32 0.0, %v708
      %v741 = vsub.f32 0.0, %v709
      %v742 = vsub.f32 0.0, %v710
      %v743 = vsub.f32 0.0, %v711
      %v744 = vsub.f32 0.0, %v712
      %v745 = vsub.f32 0.0, %v713
      %v746 = vsub.f32 0.0, %v714
      %v747 = vsub.f32 0.0, %v715
      %v748 = vsub.f32 0.0, %v716
      %v749 = vsub.f32 0.0, %v717
      %v750 = vsub.f32 0.0, %v718
      %v751 = vsub.f32 0.0, %v719
      %v752 = vmul.f32 %v720, 1.442695
      %v753 = vpow.pop %v752
      %v754 = vmul.f32 %v721, 1.442695
      %v755 = vpow.pop %v754
      %v756 = vmul.f32 %v722, 1.442695
      %v757 = vpow.pop %v756
      %v758 = vmul.f32 %v723, 1.442695
      %v759 = vpow.pop %v758
      %v760 = vmul.f32 %v724, 1.442695
      %v761 = vpow.pop %v760
      %v762 = vmul.f32 %v725, 1.442695
      %v763 = vpow.pop %v762
      %v764 = vmul.f32 %v726, 1.442695
      %v765 = vpow.pop %v764
      %v766 = vmul.f32 %v727, 1.442695
      %v767 = vpow.pop %v766
      %v768 = vmul.f32 %v728, 1.442695
      %v769 = vpow.pop %v768
      %v770 = vmul.f32 %v729, 1.442695
      %v771 = vpow.pop %v770
      %v772 = vmul.f32 %v730, 1.442695
      %v773 = vpow.pop %v772
      %v774 = vmul.f32 %v731, 1.442695
      %v775 = vpow.pop %v774
      %v776 = vmul.f32 %v732, 1.442695
      %v777 = vpow.pop %v776
      %v778 = vmul.f32 %v733, 1.442695
      %v779 = vpow.pop %v778
      %v780 = vmul.f32 %v734, 1.442695
      %v781 = vpow.pop %v780
      %v782 = vmul.f32 %v735, 1.442695
      %v783 = vpow.pop %v782
      %v784 = vmul.f32 %v736, 1.442695
      %v785 = vpow.pop %v784
      %v786 = vmul.f32 %v737, 1.442695
      %v787 = vpow.pop %v786
      %v788 = vmul.f32 %v738, 1.442695
      %v789 = vpow.pop %v788
      %v790 = vmul.f32 %v739, 1.442695
      %v791 = vpow.pop %v790
      %v792 = vmul.f32 %v740, 1.442695
      %v793 = vpow.pop %v792
      %v794 = vmul.f32 %v741, 1.442695
      %v795 = vpow.pop %v794
      %v796 = vmul.f32 %v742, 1.442695
      %v797 = vpow.pop %v796
      %v798 = vmul.f32 %v743, 1.442695
      %v799 = vpow.pop %v798
      %v800 = vmul.f32 %v744, 1.442695
      %v801 = vpow.pop %v800
      %v802 = vmul.f32 %v745, 1.442695
      %v803 = vpow.pop %v802
      %v804 = vmul.f32 %v746, 1.442695
      %v805 = vpow.pop %v804
      %v806 = vmul.f32 %v747, 1.442695
      %v807 = vpow.pop %v806
      %v808 = vmul.f32 %v748, 1.442695
      %v809 = vpow.pop %v808
      %v810 = vmul.f32 %v749, 1.442695
      %v811 = vpow.pop %v810
      %v812 = vmul.f32 %v750, 1.442695
      %v813 = vpow.pop %v812
      %v814 = vmul.f32 %v751, 1.442695
      %v815 = vpow.pop %v814
      %v816 = vadd.f32 %v753, 1.0
      %v817 = vadd.f32 %v755, 1.0
      %v818 = vadd.f32 %v757, 1.0
      %v819 = vadd.f32 %v759, 1.0
      %v820 = vadd.f32 %v761, 1.0
      %v821 = vadd.f32 %v763, 1.0
      %v822 = vadd.f32 %v765, 1.0
      %v823 = vadd.f32 %v767, 1.0
      %v824 = vadd.f32 %v769, 1.0
      %v825 = vadd.f32 %v771, 1.0
      %v826 = vadd.f32 %v773, 1.0
      %v827 = vadd.f32 %v775, 1.0
      %v828 = vadd.f32 %v777, 1.0
      %v829 = vadd.f32 %v779, 1.0
      %v830 = vadd.f32 %v781, 1.0
      %v831 = vadd.f32 %v783, 1.0
      %v832 = vadd.f32 %v785, 1.0
      %v833 = vadd.f32 %v787, 1.0
      %v834 = vadd.f32 %v789, 1.0
      %v835 = vadd.f32 %v791, 1.0
      %v836 = vadd.f32 %v793, 1.0
      %v837 = vadd.f32 %v795, 1.0
      %v838 = vadd.f32 %v797, 1.0
      %v839 = vadd.f32 %v799, 1.0
      %v840 = vadd.f32 %v801, 1.0
      %v841 = vadd.f32 %v803, 1.0
      %v842 = vadd.f32 %v805, 1.0
      %v843 = vadd.f32 %v807, 1.0
      %v844 = vadd.f32 %v809, 1.0
      %v845 = vadd.f32 %v811, 1.0
      %v846 = vadd.f32 %v813, 1.0
      %v847 = vadd.f32 %v815, 1.0
      %v848 = vrcp.pop %v816
      %v849 = vrcp.pop %v817
      %v850 = vrcp.pop %v818
      %v851 = vrcp.pop %v819
      %v852 = vrcp.pop %v820
      %v853 = vrcp.pop %v821
      %v854 = vrcp.pop %v822
      %v855 = vrcp.pop %v823
      %v856 = vrcp.pop %v824
      %v857 = vrcp.pop %v825
      %v858 = vrcp.pop %v826
      %v859 = vrcp.pop %v827
      %v860 = vrcp.pop %v828
      %v861 = vrcp.pop %v829
      %v862 = vrcp.pop %v830
      %v863 = vrcp.pop %v831
      %v864 = vrcp.pop %v832
      %v865 = vrcp.pop %v833
      %v866 = vrcp.pop %v834
      %v867 = vrcp.pop %v835
      %v868 = vrcp.pop %v836
      %v869 = vrcp.pop %v837
      %v870 = vrcp.pop %v838
      %v871 = vrcp.pop %v839
      %v872 = vrcp.pop %v840
      %v873 = vrcp.pop %v841
      %v874 = vrcp.pop %v842
      %v875 = vrcp.pop %v843
      %v876 = vrcp.pop %v844
      %v877 = vrcp.pop %v845
      %v878 = vrcp.pop %v846
      %v879 = vrcp.pop %v847
      %v880 = vmul.f32 %v688, %v848
      %v881 = vmul.f32 %v689, %v849
      %v882 = vmul.f32 %v690, %v850
      %v883 = vmul.f32 %v691, %v851
      %v884 = vmul.f32 %v692, %v852
      %v885 = vmul.f32 %v693, %v853
      %v886 = vmul.f32 %v694, %v854
      %v887 = vmul.f32 %v695, %v855
      %v888 = vmul.f32 %v696, %v856
      %v889 = vmul.f32 %v697, %v857
      %v890 = vmul.f32 %v698, %v858
      %v891 = vmul.f32 %v699, %v859
      %v892 = vmul.f32 %v700, %v860
      %v893 = vmul.f32 %v701, %v861
      %v894 = vmul.f32 %v702, %v862
      %v895 = vmul.f32 %v703, %v863
      %v896 = vmul.f32 %v704, %v864
      %v897 = vmul.f32 %v705, %v865
      %v898 = vmul.f32 %v706, %v866
      %v899 = vmul.f32 %v707, %v867
      %v900 = vmul.f32 %v708, %v868
      %v901 = vmul.f32 %v709, %v869
      %v902 = vmul.f32 %v710, %v870
      %v903 = vmul.f32 %v711, %v871
      %v904 = vmul.f32 %v712, %v872
      %v905 = vmul.f32 %v713, %v873
      %v906 = vmul.f32 %v714, %v874
      %v907 = vmul.f32 %v715, %v875
      %v908 = vmul.f32 %v716, %v876
      %v909 = vmul.f32 %v717, %v877
      %v910 = vmul.f32 %v718, %v878
      %v911 = vmul.f32 %v719, %v879
      %912 = vst.msk [vmem:[%s346 + $0x8] sm:$0xff] %vm280, %v880
      %913 = vst.msk [vmem:[%s346 + $0x10] sm:$0xff] %vm280, %v881
      %914 = vst.msk [vmem:[%s346 + $0x28] sm:$0xff] %vm280, %v882
      %915 = vst.msk [vmem:[%s346 + $0x30] sm:$0xff] %vm280, %v883
      %916 = vst.msk [vmem:[%s346 + $0x48] sm:$0xff] %vm280, %v884
      %917 = vst.msk [vmem:[%s346 + $0x50] sm:$0xff] %vm280, %v885
      %918 = vst.msk [vmem:[%s346 + $0x68] sm:$0xff] %vm280, %v886
      %919 = vst.msk [vmem:[%s346 + $0x70] sm:$0xff] %vm280, %v887
      %920 = vst.msk [vmem:[%s346 + $0x88] sm:$0xff] %vm280, %v888
      %921 = vst.msk [vmem:[%s346 + $0x90] sm:$0xff] %vm280, %v889
      %922 = vst.msk [vmem:[%s346 + $0xa8] sm:$0xff] %vm280, %v890
      %923 = vst.msk [vmem:[%s346 + $0xb0] sm:$0xff] %vm280, %v891
      %924 = vst.msk [vmem:[%s346 + $0xc8] sm:$0xff] %vm280, %v892
      %925 = vst.msk [vmem:[%s346 + $0xd0] sm:$0xff] %vm280, %v893
      %926 = vst.msk [vmem:[%s346 + $0xe8] sm:$0xff] %vm280, %v894
      %927 = vst.msk [vmem:[%s346 + $0xf0] sm:$0xff] %vm280, %v895
      %928 = vst.msk [vmem:[%s346 + $0x108] sm:$0xff] %vm280, %v896
      %929 = vst.msk [vmem:[%s346 + $0x110] sm:$0xff] %vm280, %v897
      %930 = vst.msk [vmem:[%s346 + $0x128] sm:$0xff] %vm280, %v898
      %931 = vst.msk [vmem:[%s346 + $0x130] sm:$0xff] %vm280, %v899
      %932 = vst.msk [vmem:[%s346 + $0x148] sm:$0xff] %vm280, %v900
      %933 = vst.msk [vmem:[%s346 + $0x150] sm:$0xff] %vm280, %v901
      %934 = vst.msk [vmem:[%s346 + $0x168] sm:$0xff] %vm280, %v902
      %935 = vst.msk [vmem:[%s346 + $0x170] sm:$0xff] %vm280, %v903
      %936 = vst.msk [vmem:[%s346 + $0x188] sm:$0xff] %vm280, %v904
      %937 = vst.msk [vmem:[%s346 + $0x190] sm:$0xff] %vm280, %v905
      %938 = vst.msk [vmem:[%s346 + $0x1a8] sm:$0xff] %vm280, %v906
      %939 = vst.msk [vmem:[%s346 + $0x1b0] sm:$0xff] %vm280, %v907
      %940 = vst.msk [vmem:[%s346 + $0x1c8] sm:$0xff] %vm280, %v908
      %941 = vst.msk [vmem:[%s346 + $0x1d0] sm:$0xff] %vm280, %v909
      %942 = vst.msk [vmem:[%s346 + $0x1e8] sm:$0xff] %vm280, %v910
      %943 = vst.msk [vmem:[%s346 + $0x1f0] sm:$0xff] %vm280, %v911
      %v944 = vpack.c.bf16 %v881, %v880
      %v945 = vpack.c.bf16 %v883, %v882
      %v946 = vpack.c.bf16 %v885, %v884
      %v947 = vpack.c.bf16 %v887, %v886
      %v948 = vpack.c.bf16 %v889, %v888
      %v949 = vpack.c.bf16 %v891, %v890
      %v950 = vpack.c.bf16 %v893, %v892
      %v951 = vpack.c.bf16 %v895, %v894
      %v952 = vpack.c.bf16 %v897, %v896
      %v953 = vpack.c.bf16 %v899, %v898
      %v954 = vpack.c.bf16 %v901, %v900
      %v955 = vpack.c.bf16 %v903, %v902
      %v956 = vpack.c.bf16 %v905, %v904
      %v957 = vpack.c.bf16 %v907, %v906
      %v958 = vpack.c.bf16 %v909, %v908
      %v959 = vpack.c.bf16 %v911, %v910
      %v960 = vld [vmem:[%s4] sm:$0x1]
      %s961 = scalar_lea.vmem [#allocation2], 192
      %v962 = vld [vmem:[%s961] sm:$0xff]
      %v963 = vld [vmem:[%s961 + $0x8] sm:$0xff]
      %v964 = vld [vmem:[%s961 + $0x10] sm:$0xff]
      %v965 = vld [vmem:[%s961 + $0x18] sm:$0xff]
      %v966 = vld [vmem:[%s961 + $0x20] sm:$0xff]
      %v967 = vld [vmem:[%s961 + $0x28] sm:$0xff]
      %v968 = vld [vmem:[%s961 + $0x30] sm:$0xff]
      %v969 = vld [vmem:[%s961 + $0x38] sm:$0xff]
      %v970 = vld [vmem:[%s961 + $0x40] sm:$0xff]
      %v971 = vld [vmem:[%s961 + $0x48] sm:$0xff]
      %v972 = vld [vmem:[%s961 + $0x50] sm:$0xff]
      %v973 = vld [vmem:[%s961 + $0x58] sm:$0xff]
      %v974 = vld [vmem:[%s961 + $0x60] sm:$0xff]
      %v975 = vld [vmem:[%s961 + $0x68] sm:$0xff]
      %v976 = vld [vmem:[%s961 + $0x70] sm:$0xff]
      %v977 = vld [vmem:[%s961 + $0x78] sm:$0xff]
      %v978 = vld [vmem:[%s961 + $0x80] sm:$0xff]
      %v979 = vld [vmem:[%s961 + $0x88] sm:$0xff]
      %v980 = vld [vmem:[%s961 + $0x90] sm:$0xff]
      %v981 = vld [vmem:[%s961 + $0x98] sm:$0xff]
      %v982 = vld [vmem:[%s961 + $0xa0] sm:$0xff]
      %v983 = vld [vmem:[%s961 + $0xa8] sm:$0xff]
      %v984 = vld [vmem:[%s961 + $0xb0] sm:$0xff]
      %v985 = vld [vmem:[%s961 + $0xb8] sm:$0xff]
      %v986 = vld [vmem:[%s961 + $0xc0] sm:$0xff]
      %v987 = vld [vmem:[%s961 + $0xc8] sm:$0xff]
      %v988 = vld [vmem:[%s961 + $0xd0] sm:$0xff]
      %v989 = vld [vmem:[%s961 + $0xd8] sm:$0xff]
      %v990 = vld [vmem:[%s961 + $0xe0] sm:$0xff]
      %v991 = vld [vmem:[%s961 + $0xe8] sm:$0xff]
      %v992 = vld [vmem:[%s961 + $0xf0] sm:$0xff]
      %v993 = vld [vmem:[%s961 + $0xf8] sm:$0xff]
      %v994 = vld [vmem:[%s961 + $0x100] sm:$0xff]
      %v995 = vld [vmem:[%s961 + $0x108] sm:$0xff]
      %v996 = vld [vmem:[%s961 + $0x110] sm:$0xff]
      %v997 = vld [vmem:[%s961 + $0x118] sm:$0xff]
      %v998 = vld [vmem:[%s961 + $0x120] sm:$0xff]
      %v999 = vld [vmem:[%s961 + $0x128] sm:$0xff]
      %v1000 = vld [vmem:[%s961 + $0x130] sm:$0xff]
      %v1001 = vld [vmem:[%s961 + $0x138] sm:$0xff]
      %v1002 = vld [vmem:[%s961 + $0x140] sm:$0xff]
      %v1003 = vld [vmem:[%s961 + $0x148] sm:$0xff]
      %v1004 = vld [vmem:[%s961 + $0x150] sm:$0xff]
      %v1005 = vld [vmem:[%s961 + $0x158] sm:$0xff]
      %v1006 = vld [vmem:[%s961 + $0x160] sm:$0xff]
      %v1007 = vld [vmem:[%s961 + $0x168] sm:$0xff]
      %v1008 = vld [vmem:[%s961 + $0x170] sm:$0xff]
      %v1009 = vld [vmem:[%s961 + $0x178] sm:$0xff]
      %v1010 = vld [vmem:[%s961 + $0x180] sm:$0xff]
      %v1011 = vld [vmem:[%s961 + $0x188] sm:$0xff]
      %v1012 = vld [vmem:[%s961 + $0x190] sm:$0xff]
      %v1013 = vld [vmem:[%s961 + $0x198] sm:$0xff]
      %v1014 = vld [vmem:[%s961 + $0x1a0] sm:$0xff]
      %v1015 = vld [vmem:[%s961 + $0x1a8] sm:$0xff]
      %v1016 = vld [vmem:[%s961 + $0x1b0] sm:$0xff]
      %v1017 = vld [vmem:[%s961 + $0x1b8] sm:$0xff]
      %v1018 = vld [vmem:[%s961 + $0x1c0] sm:$0xff]
      %v1019 = vld [vmem:[%s961 + $0x1c8] sm:$0xff]
      %v1020 = vld [vmem:[%s961 + $0x1d0] sm:$0xff]
      %v1021 = vld [vmem:[%s961 + $0x1d8] sm:$0xff]
      %v1022 = vld [vmem:[%s961 + $0x1e0] sm:$0xff]
      %v1023 = vld [vmem:[%s961 + $0x1e8] sm:$0xff]
      %v1024 = vld [vmem:[%s961 + $0x1f0] sm:$0xff]
      %v1025 = vld [vmem:[%s961 + $0x1f8] sm:$0xff]
      %v1026 = vld [vmem:[%s961 + $0x200] sm:$0xff]
      %v1027 = vld [vmem:[%s961 + $0x208] sm:$0xff]
      %v1028 = vld [vmem:[%s961 + $0x210] sm:$0xff]
      %v1029 = vld [vmem:[%s961 + $0x218] sm:$0xff]
      %v1030 = vld [vmem:[%s961 + $0x220] sm:$0xff]
      %v1031 = vld [vmem:[%s961 + $0x228] sm:$0xff]
      %v1032 = vld [vmem:[%s961 + $0x230] sm:$0xff]
      %v1033 = vld [vmem:[%s961 + $0x238] sm:$0xff]
      %v1034 = vld [vmem:[%s961 + $0x240] sm:$0xff]
      %v1035 = vld [vmem:[%s961 + $0x248] sm:$0xff]
      %v1036 = vld [vmem:[%s961 + $0x250] sm:$0xff]
      %v1037 = vld [vmem:[%s961 + $0x258] sm:$0xff]
      %v1038 = vld [vmem:[%s961 + $0x260] sm:$0xff]
      %v1039 = vld [vmem:[%s961 + $0x268] sm:$0xff]
      %v1040 = vld [vmem:[%s961 + $0x270] sm:$0xff]
      %v1041 = vld [vmem:[%s961 + $0x278] sm:$0xff]
      %v1042 = vmax.f32 %v962, %v966
      %v1043 = vmax.f32 %v963, %v967
      %v1044 = vmax.f32 %v964, %v968
      %v1045 = vmax.f32 %v965, %v969
      %v1046 = vmax.f32 %v966, %v970
      %v1047 = vmax.f32 %v967, %v971
      %v1048 = vmax.f32 %v968, %v972
      %v1049 = vmax.f32 %v969, %v973
      %v1050 = vmax.f32 %v970, %v974
      %v1051 = vmax.f32 %v971, %v975
      %v1052 = vmax.f32 %v972, %v976
      %v1053 = vmax.f32 %v973, %v977
      %v1054 = vmax.f32 %v974, %v978
      %v1055 = vmax.f32 %v975, %v979
      %v1056 = vmax.f32 %v976, %v980
      %v1057 = vmax.f32 %v977, %v981
      %v1058 = vmax.f32 %v978, %v982
      %v1059 = vmax.f32 %v979, %v983
      %v1060 = vmax.f32 %v980, %v984
      %v1061 = vmax.f32 %v981, %v985
      %v1062 = vmax.f32 %v982, %v986
      %v1063 = vmax.f32 %v983, %v987
      %v1064 = vmax.f32 %v984, %v988
      %v1065 = vmax.f32 %v985, %v989
      %v1066 = vmax.f32 %v986, %v990
      %v1067 = vmax.f32 %v987, %v991
      %v1068 = vmax.f32 %v988, %v992
      %v1069 = vmax.f32 %v989, %v993
      %v1070 = vmax.f32 %v990, %v994
      %v1071 = vmax.f32 %v991, %v995
      %v1072 = vmax.f32 %v992, %v996
      %v1073 = vmax.f32 %v993, %v997
      %v1074 = vmax.f32 %v994, %v998
      %v1075 = vmax.f32 %v995, %v999
      %v1076 = vmax.f32 %v996, %v1000
      %v1077 = vmax.f32 %v997, %v1001
      %v1078 = vmax.f32 %v998, %v1002
      %v1079 = vmax.f32 %v999, %v1003
      %v1080 = vmax.f32 %v1000, %v1004
      %v1081 = vmax.f32 %v1001, %v1005
      %v1082 = vmax.f32 %v1002, %v1006
      %v1083 = vmax.f32 %v1003, %v1007
      %v1084 = vmax.f32 %v1004, %v1008
      %v1085 = vmax.f32 %v1005, %v1009
      %v1086 = vmax.f32 %v1006, %v1010
      %v1087 = vmax.f32 %v1007, %v1011
      %v1088 = vmax.f32 %v1008, %v1012
      %v1089 = vmax.f32 %v1009, %v1013
      %v1090 = vmax.f32 %v1010, %v1014
      %v1091 = vmax.f32 %v1011, %v1015
      %v1092 = vmax.f32 %v1012, %v1016
      %v1093 = vmax.f32 %v1013, %v1017
      %v1094 = vmax.f32 %v1014, %v1018
      %v1095 = vmax.f32 %v1015, %v1019
      %v1096 = vmax.f32 %v1016, %v1020
      %v1097 = vmax.f32 %v1017, %v1021
      %v1098 = vmax.f32 %v1018, %v1022
      %v1099 = vmax.f32 %v1019, %v1023
      %v1100 = vmax.f32 %v1020, %v1024
      %v1101 = vmax.f32 %v1021, %v1025
      %v1102 = vmax.f32 %v1022, %v1026
      %v1103 = vmax.f32 %v1023, %v1027
      %v1104 = vmax.f32 %v1024, %v1028
      %v1105 = vmax.f32 %v1025, %v1029
      %v1106 = vmax.f32 %v1026, %v1030
      %v1107 = vmax.f32 %v1027, %v1031
      %v1108 = vmax.f32 %v1028, %v1032
      %v1109 = vmax.f32 %v1029, %v1033
      %v1110 = vmax.f32 %v1030, %v1034
      %v1111 = vmax.f32 %v1031, %v1035
      %v1112 = vmax.f32 %v1032, %v1036
      %v1113 = vmax.f32 %v1033, %v1037
      %v1114 = vmax.f32 %v1042, %v1050
      %v1115 = vmax.f32 %v1043, %v1051
      %v1116 = vmax.f32 %v1044, %v1052
      %v1117 = vmax.f32 %v1045, %v1053
      %v1118 = vmax.f32 %v1046, %v1054
      %v1119 = vmax.f32 %v1047, %v1055
      %v1120 = vmax.f32 %v1048, %v1056
      %v1121 = vmax.f32 %v1049, %v1057
      %v1122 = vmax.f32 %v1050, %v1058
      %v1123 = vmax.f32 %v1051, %v1059
      %v1124 = vmax.f32 %v1052, %v1060
      %v1125 = vmax.f32 %v1053, %v1061
      %v1126 = vmax.f32 %v1054, %v1062
      %v1127 = vmax.f32 %v1055, %v1063
      %v1128 = vmax.f32 %v1056, %v1064
      %v1129 = vmax.f32 %v1057, %v1065
      %v1130 = vmax.f32 %v1058, %v1066
      %v1131 = vmax.f32 %v1059, %v1067
      %v1132 = vmax.f32 %v1060, %v1068
      %v1133 = vmax.f32 %v1061, %v1069
      %v1134 = vmax.f32 %v1062, %v1070
      %v1135 = vmax.f32 %v1063, %v1071
      %v1136 = vmax.f32 %v1064, %v1072
      %v1137 = vmax.f32 %v1065, %v1073
      %v1138 = vmax.f32 %v1066, %v1074
      %v1139 = vmax.f32 %v1067, %v1075
      %v1140 = vmax.f32 %v1068, %v1076
      %v1141 = vmax.f32 %v1069, %v1077
      %v1142 = vmax.f32 %v1070, %v1078
      %v1143 = vmax.f32 %v1071, %v1079
      %v1144 = vmax.f32 %v1072, %v1080
      %v1145 = vmax.f32 %v1073, %v1081
      %v1146 = vmax.f32 %v1074, %v1082
      %v1147 = vmax.f32 %v1075, %v1083
      %v1148 = vmax.f32 %v1076, %v1084
      %v1149 = vmax.f32 %v1077, %v1085
      %v1150 = vmax.f32 %v1078, %v1086
      %v1151 = vmax.f32 %v1079, %v1087
      %v1152 = vmax.f32 %v1080, %v1088
      %v1153 = vmax.f32 %v1081, %v1089
      %v1154 = vmax.f32 %v1082, %v1090
      %v1155 = vmax.f32 %v1083, %v1091
      %v1156 = vmax.f32 %v1084, %v1092
      %v1157 = vmax.f32 %v1085, %v1093
      %v1158 = vmax.f32 %v1086, %v1094
      %v1159 = vmax.f32 %v1087, %v1095
      %v1160 = vmax.f32 %v1088, %v1096
      %v1161 = vmax.f32 %v1089, %v1097
      %v1162 = vmax.f32 %v1090, %v1098
      %v1163 = vmax.f32 %v1091, %v1099
      %v1164 = vmax.f32 %v1092, %v1100
      %v1165 = vmax.f32 %v1093, %v1101
      %v1166 = vmax.f32 %v1094, %v1102
      %v1167 = vmax.f32 %v1095, %v1103
      %v1168 = vmax.f32 %v1096, %v1104
      %v1169 = vmax.f32 %v1097, %v1105
      %v1170 = vmax.f32 %v1098, %v1106
      %v1171 = vmax.f32 %v1099, %v1107
      %v1172 = vmax.f32 %v1100, %v1108
      %v1173 = vmax.f32 %v1101, %v1109
      %v1174 = vmax.f32 %v1102, %v1110
      %v1175 = vmax.f32 %v1103, %v1111
      %v1176 = vmax.f32 %v1104, %v1112
      %v1177 = vmax.f32 %v1105, %v1113
      %v1178 = vmax.f32 %v1114, %v978
      %v1179 = vmax.f32 %v1115, %v979
      %v1180 = vmax.f32 %v1116, %v980
      %v1181 = vmax.f32 %v1117, %v981
      %v1182 = vmax.f32 %v1118, %v982
      %v1183 = vmax.f32 %v1119, %v983
      %v1184 = vmax.f32 %v1120, %v984
      %v1185 = vmax.f32 %v1121, %v985
      %v1186 = vmax.f32 %v1122, %v986
      %v1187 = vmax.f32 %v1123, %v987
      %v1188 = vmax.f32 %v1124, %v988
      %v1189 = vmax.f32 %v1125, %v989
      %v1190 = vmax.f32 %v1126, %v990
      %v1191 = vmax.f32 %v1127, %v991
      %v1192 = vmax.f32 %v1128, %v992
      %v1193 = vmax.f32 %v1129, %v993
      %v1194 = vmax.f32 %v1130, %v994
      %v1195 = vmax.f32 %v1131, %v995
      %v1196 = vmax.f32 %v1132, %v996
      %v1197 = vmax.f32 %v1133, %v997
      %v1198 = vmax.f32 %v1134, %v998
      %v1199 = vmax.f32 %v1135, %v999
      %v1200 = vmax.f32 %v1136, %v1000
      %v1201 = vmax.f32 %v1137, %v1001
      %v1202 = vmax.f32 %v1138, %v1002
      %v1203 = vmax.f32 %v1139, %v1003
      %v1204 = vmax.f32 %v1140, %v1004
      %v1205 = vmax.f32 %v1141, %v1005
      %v1206 = vmax.f32 %v1142, %v1006
      %v1207 = vmax.f32 %v1143, %v1007
      %v1208 = vmax.f32 %v1144, %v1008
      %v1209 = vmax.f32 %v1145, %v1009
      %v1210 = vmax.f32 %v1146, %v1010
      %v1211 = vmax.f32 %v1147, %v1011
      %v1212 = vmax.f32 %v1148, %v1012
      %v1213 = vmax.f32 %v1149, %v1013
      %v1214 = vmax.f32 %v1150, %v1014
      %v1215 = vmax.f32 %v1151, %v1015
      %v1216 = vmax.f32 %v1152, %v1016
      %v1217 = vmax.f32 %v1153, %v1017
      %v1218 = vmax.f32 %v1154, %v1018
      %v1219 = vmax.f32 %v1155, %v1019
      %v1220 = vmax.f32 %v1156, %v1020
      %v1221 = vmax.f32 %v1157, %v1021
      %v1222 = vmax.f32 %v1158, %v1022
      %v1223 = vmax.f32 %v1159, %v1023
      %v1224 = vmax.f32 %v1160, %v1024
      %v1225 = vmax.f32 %v1161, %v1025
      %v1226 = vmax.f32 %v1162, %v1026
      %v1227 = vmax.f32 %v1163, %v1027
      %v1228 = vmax.f32 %v1164, %v1028
      %v1229 = vmax.f32 %v1165, %v1029
      %v1230 = vmax.f32 %v1166, %v1030
      %v1231 = vmax.f32 %v1167, %v1031
      %v1232 = vmax.f32 %v1168, %v1032
      %v1233 = vmax.f32 %v1169, %v1033
      %v1234 = vmax.f32 %v1170, %v1034
      %v1235 = vmax.f32 %v1171, %v1035
      %v1236 = vmax.f32 %v1172, %v1036
      %v1237 = vmax.f32 %v1173, %v1037
      %v1238 = vmax.f32 %v1174, %v1038
      %v1239 = vmax.f32 %v1175, %v1039
      %v1240 = vmax.f32 %v1176, %v1040
      %v1241 = vmax.f32 %v1177, %v1041
      %vm1306 = vcmask 1046528
      %v1307 = vrot.slane %v1178, 1
      %v1308 = vrot.slane %v1179, 1
      %v1309 = vsel %vm1306, %v1307, %v1308
      %v1310 = vrot.slane %v1180, 1
      %v1311 = vsel %vm1306, %v1308, %v1310
      %v1312 = vrot.slane %v1181, 1
      %v1313 = vsel %vm1306, %v1310, %v1312
      %v1314 = vrot.slane %v1182, 1
      %v1315 = vrot.slane %v1183, 1
      %v1316 = vsel %vm1306, %v1314, %v1315
      %v1317 = vrot.slane %v1184, 1
      %v1318 = vsel %vm1306, %v1315, %v1317
      %v1319 = vrot.slane %v1185, 1
      %v1320 = vsel %vm1306, %v1317, %v1319
      %v1321 = vrot.slane %v1186, 1
      %v1322 = vrot.slane %v1187, 1
      %v1323 = vsel %vm1306, %v1321, %v1322
      %v1324 = vrot.slane %v1188, 1
      %v1325 = vsel %vm1306, %v1322, %v1324
      %v1326 = vrot.slane %v1189, 1
      %v1327 = vsel %vm1306, %v1324, %v1326
      %v1328 = vrot.slane %v1190, 1
      %v1329 = vrot.slane %v1191, 1
      %v1330 = vsel %vm1306, %v1328, %v1329
      %v1331 = vrot.slane %v1192, 1
      %v1332 = vsel %vm1306, %v1329, %v1331
      %v1333 = vrot.slane %v1193, 1
      %v1334 = vsel %vm1306, %v1331, %v1333
      %v1335 = vrot.slane %v1194, 1
      %v1336 = vrot.slane %v1195, 1
      %v1337 = vsel %vm1306, %v1335, %v1336
      %v1338 = vrot.slane %v1196, 1
      %v1339 = vsel %vm1306, %v1336, %v1338
      %v1340 = vrot.slane %v1197, 1
      %v1341 = vsel %vm1306, %v1338, %v1340
      %v1342 = vrot.slane %v1198, 1
      %v1343 = vrot.slane %v1199, 1
      %v1344 = vsel %vm1306, %v1342, %v1343
      %v1345 = vrot.slane %v1200, 1
      %v1346 = vsel %vm1306, %v1343, %v1345
      %v1347 = vrot.slane %v1201, 1
      %v1348 = vsel %vm1306, %v1345, %v1347
      %v1349 = vrot.slane %v1202, 1
      %v1350 = vrot.slane %v1203, 1
      %v1351 = vsel %vm1306, %v1349, %v1350
      %v1352 = vrot.slane %v1204, 1
      %v1353 = vsel %vm1306, %v1350, %v1352
      %v1354 = vrot.slane %v1205, 1
      %v1355 = vsel %vm1306, %v1352, %v1354
      %v1356 = vrot.slane %v1206, 1
      %v1357 = vrot.slane %v1207, 1
      %v1358 = vsel %vm1306, %v1356, %v1357
      %v1359 = vrot.slane %v1208, 1
      %v1360 = vsel %vm1306, %v1357, %v1359
      %v1361 = vrot.slane %v1209, 1
      %v1362 = vsel %vm1306, %v1359, %v1361
      %v1363 = vrot.slane %v1210, 1
      %v1364 = vrot.slane %v1211, 1
      %v1365 = vsel %vm1306, %v1363, %v1364
      %v1366 = vrot.slane %v1212, 1
      %v1367 = vsel %vm1306, %v1364, %v1366
      %v1368 = vrot.slane %v1213, 1
      %v1369 = vsel %vm1306, %v1366, %v1368
      %v1370 = vrot.slane %v1214, 1
      %v1371 = vrot.slane %v1215, 1
      %v1372 = vsel %vm1306, %v1370, %v1371
      %v1373 = vrot.slane %v1216, 1
      %v1374 = vsel %vm1306, %v1371, %v1373
      %v1375 = vrot.slane %v1217, 1
      %v1376 = vsel %vm1306, %v1373, %v1375
      %v1377 = vrot.slane %v1218, 1
      %v1378 = vrot.slane %v1219, 1
      %v1379 = vsel %vm1306, %v1377, %v1378
      %v1380 = vrot.slane %v1220, 1
      %v1381 = vsel %vm1306, %v1378, %v1380
      %v1382 = vrot.slane %v1221, 1
      %v1383 = vsel %vm1306, %v1380, %v1382
      %v1384 = vrot.slane %v1222, 1
      %v1385 = vrot.slane %v1223, 1
      %v1386 = vsel %vm1306, %v1384, %v1385
      %v1387 = vrot.slane %v1224, 1
      %v1388 = vsel %vm1306, %v1385, %v1387
      %v1389 = vrot.slane %v1225, 1
      %v1390 = vsel %vm1306, %v1387, %v1389
      %v1391 = vrot.slane %v1226, 1
      %v1392 = vrot.slane %v1227, 1
      %v1393 = vsel %vm1306, %v1391, %v1392
      %v1394 = vrot.slane %v1228, 1
      %v1395 = vsel %vm1306, %v1392, %v1394
      %v1396 = vrot.slane %v1229, 1
      %v1397 = vsel %vm1306, %v1394, %v1396
      %v1398 = vrot.slane %v1230, 1
      %v1399 = vrot.slane %v1231, 1
      %v1400 = vsel %vm1306, %v1398, %v1399
      %v1401 = vrot.slane %v1232, 1
      %v1402 = vsel %vm1306, %v1399, %v1401
      %v1403 = vrot.slane %v1233, 1
      %v1404 = vsel %vm1306, %v1401, %v1403
      %v1405 = vrot.slane %v1234, 1
      %v1406 = vrot.slane %v1235, 1
      %v1407 = vsel %vm1306, %v1405, %v1406
      %v1408 = vrot.slane %v1236, 1
      %v1409 = vsel %vm1306, %v1406, %v1408
      %v1410 = vrot.slane %v1237, 1
      %v1411 = vsel %vm1306, %v1408, %v1410
      %v1412 = vrot.slane %v1238, 1
      %v1413 = vrot.slane %v1239, 1
      %v1414 = vsel %vm1306, %v1412, %v1413
      %v1415 = vrot.slane %v1240, 1
      %v1416 = vsel %vm1306, %v1413, %v1415
      %v1417 = vrot.slane %v1241, 1
      %v1418 = vsel %vm1306, %v1415, %v1417
      %v1483 = vmax.f32 %v1178, %v1309
      %v1484 = vmax.f32 %v1179, %v1311
      %v1485 = vmax.f32 %v1180, %v1313
      %v1486 = vmax.f32 %v1181, %v1312
      %v1487 = vmax.f32 %v1182, %v1316
      %v1488 = vmax.f32 %v1183, %v1318
      %v1489 = vmax.f32 %v1184, %v1320
      %v1490 = vmax.f32 %v1185, %v1319
      %v1491 = vmax.f32 %v1186, %v1323
      %v1492 = vmax.f32 %v1187, %v1325
      %v1493 = vmax.f32 %v1188, %v1327
      %v1494 = vmax.f32 %v1189, %v1326
      %v1495 = vmax.f32 %v1190, %v1330
      %v1496 = vmax.f32 %v1191, %v1332
      %v1497 = vmax.f32 %v1192, %v1334
      %v1498 = vmax.f32 %v1193, %v1333
      %v1499 = vmax.f32 %v1194, %v1337
      %v1500 = vmax.f32 %v1195, %v1339
      %v1501 = vmax.f32 %v1196, %v1341
      %v1502 = vmax.f32 %v1197, %v1340
      %v1503 = vmax.f32 %v1198, %v1344
      %v1504 = vmax.f32 %v1199, %v1346
      %v1505 = vmax.f32 %v1200, %v1348
      %v1506 = vmax.f32 %v1201, %v1347
      %v1507 = vmax.f32 %v1202, %v1351
      %v1508 = vmax.f32 %v1203, %v1353
      %v1509 = vmax.f32 %v1204, %v1355
      %v1510 = vmax.f32 %v1205, %v1354
      %v1511 = vmax.f32 %v1206, %v1358
      %v1512 = vmax.f32 %v1207, %v1360
      %v1513 = vmax.f32 %v1208, %v1362
      %v1514 = vmax.f32 %v1209, %v1361
      %v1515 = vmax.f32 %v1210, %v1365
      %v1516 = vmax.f32 %v1211, %v1367
      %v1517 = vmax.f32 %v1212, %v1369
      %v1518 = vmax.f32 %v1213, %v1368
      %v1519 = vmax.f32 %v1214, %v1372
      %v1520 = vmax.f32 %v1215, %v1374
      %v1521 = vmax.f32 %v1216, %v1376
      %v1522 = vmax.f32 %v1217, %v1375
      %v1523 = vmax.f32 %v1218, %v1379
      %v1524 = vmax.f32 %v1219, %v1381
      %v1525 = vmax.f32 %v1220, %v1383
      %v1526 = vmax.f32 %v1221, %v1382
      %v1527 = vmax.f32 %v1222, %v1386
      %v1528 = vmax.f32 %v1223, %v1388
      %v1529 = vmax.f32 %v1224, %v1390
      %v1530 = vmax.f32 %v1225, %v1389
      %v1531 = vmax.f32 %v1226, %v1393
      %v1532 = vmax.f32 %v1227, %v1395
      %v1533 = vmax.f32 %v1228, %v1397
      %v1534 = vmax.f32 %v1229, %v1396
      %v1535 = vmax.f32 %v1230, %v1400
      %v1536 = vmax.f32 %v1231, %v1402
      %v1537 = vmax.f32 %v1232, %v1404
      %v1538 = vmax.f32 %v1233, %v1403
      %v1539 = vmax.f32 %v1234, %v1407
      %v1540 = vmax.f32 %v1235, %v1409
      %v1541 = vmax.f32 %v1236, %v1411
      %v1542 = vmax.f32 %v1237, %v1410
      %v1543 = vmax.f32 %v1238, %v1414
      %v1544 = vmax.f32 %v1239, %v1416
      %v1545 = vmax.f32 %v1240, %v1418
      %v1546 = vmax.f32 %v1241, %v1417
      %vm1595 = vcmask 1045504
      %v1596 = vrot.slane %v1484, 2
      %v1597 = vrot.slane %v1485, 2
      %v1598 = vsel %vm1595, %v1596, %v1597
      %v1599 = vrot.slane %v1486, 2
      %v1600 = vsel %vm1595, %v1597, %v1599
      %v1601 = vrot.slane %v1488, 2
      %v1602 = vrot.slane %v1489, 2
      %v1603 = vsel %vm1595, %v1601, %v1602
      %v1604 = vrot.slane %v1490, 2
      %v1605 = vsel %vm1595, %v1602, %v1604
      %v1606 = vrot.slane %v1492, 2
      %v1607 = vrot.slane %v1493, 2
      %v1608 = vsel %vm1595, %v1606, %v1607
      %v1609 = vrot.slane %v1494, 2
      %v1610 = vsel %vm1595, %v1607, %v1609
      %v1611 = vrot.slane %v1496, 2
      %v1612 = vrot.slane %v1497, 2
      %v1613 = vsel %vm1595, %v1611, %v1612
      %v1614 = vrot.slane %v1498, 2
      %v1615 = vsel %vm1595, %v1612, %v1614
      %v1616 = vrot.slane %v1500, 2
      %v1617 = vrot.slane %v1501, 2
      %v1618 = vsel %vm1595, %v1616, %v1617
      %v1619 = vrot.slane %v1502, 2
      %v1620 = vsel %vm1595, %v1617, %v1619
      %v1621 = vrot.slane %v1504, 2
      %v1622 = vrot.slane %v1505, 2
      %v1623 = vsel %vm1595, %v1621, %v1622
      %v1624 = vrot.slane %v1506, 2
      %v1625 = vsel %vm1595, %v1622, %v1624
      %v1626 = vrot.slane %v1508, 2
      %v1627 = vrot.slane %v1509, 2
      %v1628 = vsel %vm1595, %v1626, %v1627
      %v1629 = vrot.slane %v1510, 2
      %v1630 = vsel %vm1595, %v1627, %v1629
      %v1631 = vrot.slane %v1512, 2
      %v1632 = vrot.slane %v1513, 2
      %v1633 = vsel %vm1595, %v1631, %v1632
      %v1634 = vrot.slane %v1514, 2
      %v1635 = vsel %vm1595, %v1632, %v1634
      %v1636 = vrot.slane %v1516, 2
      %v1637 = vrot.slane %v1517, 2
      %v1638 = vsel %vm1595, %v1636, %v1637
      %v1639 = vrot.slane %v1518, 2
      %v1640 = vsel %vm1595, %v1637, %v1639
      %v1641 = vrot.slane %v1520, 2
      %v1642 = vrot.slane %v1521, 2
      %v1643 = vsel %vm1595, %v1641, %v1642
      %v1644 = vrot.slane %v1522, 2
      %v1645 = vsel %vm1595, %v1642, %v1644
      %v1646 = vrot.slane %v1524, 2
      %v1647 = vrot.slane %v1525, 2
      %v1648 = vsel %vm1595, %v1646, %v1647
      %v1649 = vrot.slane %v1526, 2
      %v1650 = vsel %vm1595, %v1647, %v1649
      %v1651 = vrot.slane %v1528, 2
      %v1652 = vrot.slane %v1529, 2
      %v1653 = vsel %vm1595, %v1651, %v1652
      %v1654 = vrot.slane %v1530, 2
      %v1655 = vsel %vm1595, %v1652, %v1654
      %v1656 = vrot.slane %v1532, 2
      %v1657 = vrot.slane %v1533, 2
      %v1658 = vsel %vm1595, %v1656, %v1657
      %v1659 = vrot.slane %v1534, 2
      %v1660 = vsel %vm1595, %v1657, %v1659
      %v1661 = vrot.slane %v1536, 2
      %v1662 = vrot.slane %v1537, 2
      %v1663 = vsel %vm1595, %v1661, %v1662
      %v1664 = vrot.slane %v1538, 2
      %v1665 = vsel %vm1595, %v1662, %v1664
      %v1666 = vrot.slane %v1540, 2
      %v1667 = vrot.slane %v1541, 2
      %v1668 = vsel %vm1595, %v1666, %v1667
      %v1669 = vrot.slane %v1542, 2
      %v1670 = vsel %vm1595, %v1667, %v1669
      %v1671 = vrot.slane %v1544, 2
      %v1672 = vrot.slane %v1545, 2
      %v1673 = vsel %vm1595, %v1671, %v1672
      %v1674 = vrot.slane %v1546, 2
      %v1675 = vsel %vm1595, %v1672, %v1674
      %v1724 = vmax.f32 %v1483, %v1596
      %v1725 = vmax.f32 %v1484, %v1598
      %v1726 = vmax.f32 %v1485, %v1600
      %v1727 = vmax.f32 %v1487, %v1601
      %v1728 = vmax.f32 %v1488, %v1603
      %v1729 = vmax.f32 %v1489, %v1605
      %v1730 = vmax.f32 %v1491, %v1606
      %v1731 = vmax.f32 %v1492, %v1608
      %v1732 = vmax.f32 %v1493, %v1610
      %v1733 = vmax.f32 %v1495, %v1611
      %v1734 = vmax.f32 %v1496, %v1613
      %v1735 = vmax.f32 %v1497, %v1615
      %v1736 = vmax.f32 %v1499, %v1616
      %v1737 = vmax.f32 %v1500, %v1618
      %v1738 = vmax.f32 %v1501, %v1620
      %v1739 = vmax.f32 %v1503, %v1621
      %v1740 = vmax.f32 %v1504, %v1623
      %v1741 = vmax.f32 %v1505, %v1625
      %v1742 = vmax.f32 %v1507, %v1626
      %v1743 = vmax.f32 %v1508, %v1628
      %v1744 = vmax.f32 %v1509, %v1630
      %v1745 = vmax.f32 %v1511, %v1631
      %v1746 = vmax.f32 %v1512, %v1633
      %v1747 = vmax.f32 %v1513, %v1635
      %v1748 = vmax.f32 %v1515, %v1636
      %v1749 = vmax.f32 %v1516, %v1638
      %v1750 = vmax.f32 %v1517, %v1640
      %v1751 = vmax.f32 %v1519, %v1641
      %v1752 = vmax.f32 %v1520, %v1643
      %v1753 = vmax.f32 %v1521, %v1645
      %v1754 = vmax.f32 %v1523, %v1646
      %v1755 = vmax.f32 %v1524, %v1648
      %v1756 = vmax.f32 %v1525, %v1650
      %v1757 = vmax.f32 %v1527, %v1651
      %v1758 = vmax.f32 %v1528, %v1653
      %v1759 = vmax.f32 %v1529, %v1655
      %v1760 = vmax.f32 %v1531, %v1656
      %v1761 = vmax.f32 %v1532, %v1658
      %v1762 = vmax.f32 %v1533, %v1660
      %v1763 = vmax.f32 %v1535, %v1661
      %v1764 = vmax.f32 %v1536, %v1663
      %v1765 = vmax.f32 %v1537, %v1665
      %v1766 = vmax.f32 %v1539, %v1666
      %v1767 = vmax.f32 %v1540, %v1668
      %v1768 = vmax.f32 %v1541, %v1670
      %v1769 = vmax.f32 %v1543, %v1671
      %v1770 = vmax.f32 %v1544, %v1673
      %v1771 = vmax.f32 %v1545, %v1675
      %vm1772 = vcmask 1043456
      %v1773 = vrot.slane %v1179, 4
      %v1774 = vrot.slane %v1180, 4
      %v1775 = vsel %vm1772, %v1773, %v1774
      %v1776 = vrot.slane %v1181, 4
      %v1777 = vsel %vm1772, %v1774, %v1776
      %v1778 = vrot.slane %v1183, 4
      %v1779 = vrot.slane %v1184, 4
      %v1780 = vsel %vm1772, %v1778, %v1779
      %v1781 = vrot.slane %v1185, 4
      %v1782 = vsel %vm1772, %v1779, %v1781
      %v1783 = vrot.slane %v1187, 4
      %v1784 = vrot.slane %v1188, 4
      %v1785 = vsel %vm1772, %v1783, %v1784
      %v1786 = vrot.slane %v1189, 4
      %v1787 = vsel %vm1772, %v1784, %v1786
      %v1788 = vrot.slane %v1191, 4
      %v1789 = vrot.slane %v1192, 4
      %v1790 = vsel %vm1772, %v1788, %v1789
      %v1791 = vrot.slane %v1193, 4
      %v1792 = vsel %vm1772, %v1789, %v1791
      %v1793 = vrot.slane %v1195, 4
      %v1794 = vrot.slane %v1196, 4
      %v1795 = vsel %vm1772, %v1793, %v1794
      %v1796 = vrot.slane %v1197, 4
      %v1797 = vsel %vm1772, %v1794, %v1796
      %v1798 = vrot.slane %v1199, 4
      %v1799 = vrot.slane %v1200, 4
      %v1800 = vsel %vm1772, %v1798, %v1799
      %v1801 = vrot.slane %v1201, 4
      %v1802 = vsel %vm1772, %v1799, %v1801
      %v1803 = vrot.slane %v1203, 4
      %v1804 = vrot.slane %v1204, 4
      %v1805 = vsel %vm1772, %v1803, %v1804
      %v1806 = vrot.slane %v1205, 4
      %v1807 = vsel %vm1772, %v1804, %v1806
      %v1808 = vrot.slane %v1207, 4
      %v1809 = vrot.slane %v1208, 4
      %v1810 = vsel %vm1772, %v1808, %v1809
      %v1811 = vrot.slane %v1209, 4
      %v1812 = vsel %vm1772, %v1809, %v1811
      %v1813 = vrot.slane %v1211, 4
      %v1814 = vrot.slane %v1212, 4
      %v1815 = vsel %vm1772, %v1813, %v1814
      %v1816 = vrot.slane %v1213, 4
      %v1817 = vsel %vm1772, %v1814, %v1816
      %v1818 = vrot.slane %v1215, 4
      %v1819 = vrot.slane %v1216, 4
      %v1820 = vsel %vm1772, %v1818, %v1819
      %v1821 = vrot.slane %v1217, 4
      %v1822 = vsel %vm1772, %v1819, %v1821
      %v1823 = vrot.slane %v1219, 4
      %v1824 = vrot.slane %v1220, 4
      %v1825 = vsel %vm1772, %v1823, %v1824
      %v1826 = vrot.slane %v1221, 4
      %v1827 = vsel %vm1772, %v1824, %v1826
      %v1828 = vrot.slane %v1223, 4
      %v1829 = vrot.slane %v1224, 4
      %v1830 = vsel %vm1772, %v1828, %v1829
      %v1831 = vrot.slane %v1225, 4
      %v1832 = vsel %vm1772, %v1829, %v1831
      %v1833 = vrot.slane %v1227, 4
      %v1834 = vrot.slane %v1228, 4
      %v1835 = vsel %vm1772, %v1833, %v1834
      %v1836 = vrot.slane %v1229, 4
      %v1837 = vsel %vm1772, %v1834, %v1836
      %v1838 = vrot.slane %v1231, 4
      %v1839 = vrot.slane %v1232, 4
      %v1840 = vsel %vm1772, %v1838, %v1839
      %v1841 = vrot.slane %v1233, 4
      %v1842 = vsel %vm1772, %v1839, %v1841
      %v1843 = vrot.slane %v1235, 4
      %v1844 = vrot.slane %v1236, 4
      %v1845 = vsel %vm1772, %v1843, %v1844
      %v1846 = vrot.slane %v1237, 4
      %v1847 = vsel %vm1772, %v1844, %v1846
      %v1848 = vrot.slane %v1239, 4
      %v1849 = vrot.slane %v1240, 4
      %v1850 = vsel %vm1772, %v1848, %v1849
      %v1851 = vrot.slane %v1241, 4
      %v1852 = vsel %vm1772, %v1849, %v1851
      %v1901 = vmax.f32 %v1724, %v1773
      %v1902 = vmax.f32 %v1725, %v1775
      %v1903 = vmax.f32 %v1726, %v1777
      %v1904 = vmax.f32 %v1727, %v1778
      %v1905 = vmax.f32 %v1728, %v1780
      %v1906 = vmax.f32 %v1729, %v1782
      %v1907 = vmax.f32 %v1730, %v1783
      %v1908 = vmax.f32 %v1731, %v1785
      %v1909 = vmax.f32 %v1732, %v1787
      %v1910 = vmax.f32 %v1733, %v1788
      %v1911 = vmax.f32 %v1734, %v1790
      %v1912 = vmax.f32 %v1735, %v1792
      %v1913 = vmax.f32 %v1736, %v1793
      %v1914 = vmax.f32 %v1737, %v1795
      %v1915 = vmax.f32 %v1738, %v1797
      %v1916 = vmax.f32 %v1739, %v1798
      %v1917 = vmax.f32 %v1740, %v1800
      %v1918 = vmax.f32 %v1741, %v1802
      %v1919 = vmax.f32 %v1742, %v1803
      %v1920 = vmax.f32 %v1743, %v1805
      %v1921 = vmax.f32 %v1744, %v1807
      %v1922 = vmax.f32 %v1745, %v1808
      %v1923 = vmax.f32 %v1746, %v1810
      %v1924 = vmax.f32 %v1747, %v1812
      %v1925 = vmax.f32 %v1748, %v1813
      %v1926 = vmax.f32 %v1749, %v1815
      %v1927 = vmax.f32 %v1750, %v1817
      %v1928 = vmax.f32 %v1751, %v1818
      %v1929 = vmax.f32 %v1752, %v1820
      %v1930 = vmax.f32 %v1753, %v1822
      %v1931 = vmax.f32 %v1754, %v1823
      %v1932 = vmax.f32 %v1755, %v1825
      %v1933 = vmax.f32 %v1756, %v1827
      %v1934 = vmax.f32 %v1757, %v1828
      %v1935 = vmax.f32 %v1758, %v1830
      %v1936 = vmax.f32 %v1759, %v1832
      %v1937 = vmax.f32 %v1760, %v1833
      %v1938 = vmax.f32 %v1761, %v1835
      %v1939 = vmax.f32 %v1762, %v1837
      %v1940 = vmax.f32 %v1763, %v1838
      %v1941 = vmax.f32 %v1764, %v1840
      %v1942 = vmax.f32 %v1765, %v1842
      %v1943 = vmax.f32 %v1766, %v1843
      %v1944 = vmax.f32 %v1767, %v1845
      %v1945 = vmax.f32 %v1768, %v1847
      %v1946 = vmax.f32 %v1769, %v1848
      %v1947 = vmax.f32 %v1770, %v1850
      %v1948 = vmax.f32 %v1771, %v1852
      %v1997 = vrot.slane %v1901, 6
      %v1998 = vrot.slane %v1902, 6
      %v1999 = vsel %vm477, %v1997, %v1998
      %v2000 = vrot.slane %v1903, 6
      %v2001 = vsel %vm477, %v1998, %v2000
      %v2002 = vrot.slane %v1904, 6
      %v2003 = vrot.slane %v1905, 6
      %v2004 = vsel %vm477, %v2002, %v2003
      %v2005 = vrot.slane %v1906, 6
      %v2006 = vsel %vm477, %v2003, %v2005
      %v2007 = vrot.slane %v1907, 6
      %v2008 = vrot.slane %v1908, 6
      %v2009 = vsel %vm477, %v2007, %v2008
      %v2010 = vrot.slane %v1909, 6
      %v2011 = vsel %vm477, %v2008, %v2010
      %v2012 = vrot.slane %v1910, 6
      %v2013 = vrot.slane %v1911, 6
      %v2014 = vsel %vm477, %v2012, %v2013
      %v2015 = vrot.slane %v1912, 6
      %v2016 = vsel %vm477, %v2013, %v2015
      %v2017 = vrot.slane %v1913, 6
      %v2018 = vrot.slane %v1914, 6
      %v2019 = vsel %vm477, %v2017, %v2018
      %v2020 = vrot.slane %v1915, 6
      %v2021 = vsel %vm477, %v2018, %v2020
      %v2022 = vrot.slane %v1916, 6
      %v2023 = vrot.slane %v1917, 6
      %v2024 = vsel %vm477, %v2022, %v2023
      %v2025 = vrot.slane %v1918, 6
      %v2026 = vsel %vm477, %v2023, %v2025
      %v2027 = vrot.slane %v1919, 6
      %v2028 = vrot.slane %v1920, 6
      %v2029 = vsel %vm477, %v2027, %v2028
      %v2030 = vrot.slane %v1921, 6
      %v2031 = vsel %vm477, %v2028, %v2030
      %v2032 = vrot.slane %v1922, 6
      %v2033 = vrot.slane %v1923, 6
      %v2034 = vsel %vm477, %v2032, %v2033
      %v2035 = vrot.slane %v1924, 6
      %v2036 = vsel %vm477, %v2033, %v2035
      %v2037 = vrot.slane %v1925, 6
      %v2038 = vrot.slane %v1926, 6
      %v2039 = vsel %vm477, %v2037, %v2038
      %v2040 = vrot.slane %v1927, 6
      %v2041 = vsel %vm477, %v2038, %v2040
      %v2042 = vrot.slane %v1928, 6
      %v2043 = vrot.slane %v1929, 6
      %v2044 = vsel %vm477, %v2042, %v2043
      %v2045 = vrot.slane %v1930, 6
      %v2046 = vsel %vm477, %v2043, %v2045
      %v2047 = vrot.slane %v1931, 6
      %v2048 = vrot.slane %v1932, 6
      %v2049 = vsel %vm477, %v2047, %v2048
      %v2050 = vrot.slane %v1933, 6
      %v2051 = vsel %vm477, %v2048, %v2050
      %v2052 = vrot.slane %v1934, 6
      %v2053 = vrot.slane %v1935, 6
      %v2054 = vsel %vm477, %v2052, %v2053
      %v2055 = vrot.slane %v1936, 6
      %v2056 = vsel %vm477, %v2053, %v2055
      %v2057 = vrot.slane %v1937, 6
      %v2058 = vrot.slane %v1938, 6
      %v2059 = vsel %vm477, %v2057, %v2058
      %v2060 = vrot.slane %v1939, 6
      %v2061 = vsel %vm477, %v2058, %v2060
      %v2062 = vrot.slane %v1940, 6
      %v2063 = vrot.slane %v1941, 6
      %v2064 = vsel %vm477, %v2062, %v2063
      %v2065 = vrot.slane %v1942, 6
      %v2066 = vsel %vm477, %v2063, %v2065
      %v2067 = vrot.slane %v1943, 6
      %v2068 = vrot.slane %v1944, 6
      %v2069 = vsel %vm477, %v2067, %v2068
      %v2070 = vrot.slane %v1945, 6
      %v2071 = vsel %vm477, %v2068, %v2070
      %v2072 = vrot.slane %v1946, 6
      %v2073 = vrot.slane %v1947, 6
      %v2074 = vsel %vm477, %v2072, %v2073
      %v2075 = vrot.slane %v1948, 6
      %v2076 = vsel %vm477, %v2073, %v2075
      %v2109 = vpack.c.bf16 %v2001, %v1999
      %v2110 = vpack.c.bf16 %v2006, %v2004
      %v2111 = vpack.c.bf16 %v2011, %v2009
      %v2112 = vpack.c.bf16 %v2016, %v2014
      %v2113 = vpack.c.bf16 %v2021, %v2019
      %v2114 = vpack.c.bf16 %v2026, %v2024
      %v2115 = vpack.c.bf16 %v2031, %v2029
      %v2116 = vpack.c.bf16 %v2036, %v2034
      %v2117 = vpack.c.bf16 %v2041, %v2039
      %v2118 = vpack.c.bf16 %v2046, %v2044
      %v2119 = vpack.c.bf16 %v2051, %v2049
      %v2120 = vpack.c.bf16 %v2056, %v2054
      %v2121 = vpack.c.bf16 %v2061, %v2059
      %v2122 = vpack.c.bf16 %v2066, %v2064
      %v2123 = vpack.c.bf16 %v2071, %v2069
      %v2124 = vpack.c.bf16 %v2076, %v2074
      %s2125 = scalar_lea.vmem %s4, 1
      %v2126 = vld [vmem:[%s2125] sm:$0x1]
      %v2128 = vsel %vm280, %v2109, 0
      %v2131 = vsel %vm280, %v2110, 0
      %v2134 = vsel %vm280, %v2111, 0
      %v2137 = vsel %vm280, %v2112, 0
      %v2140 = vsel %vm280, %v2113, 0
      %v2143 = vsel %vm280, %v2114, 0
      %v2146 = vsel %vm280, %v2115, 0
      %v2149 = vsel %vm280, %v2116, 0
      %v2152 = vsel %vm280, %v2117, 0
      %v2155 = vsel %vm280, %v2118, 0
      %v2158 = vsel %vm280, %v2119, 0
      %v2161 = vsel %vm280, %v2120, 0
      %v2164 = vsel %vm280, %v2121, 0
      %v2167 = vsel %vm280, %v2122, 0
      %v2170 = vsel %vm280, %v2123, 0
      %v2173 = vsel %vm280, %v2124, 0
      %vm2175 = vcmask 1040384
      %v2177 = vsel %vm2175, %v2126, 0
      %2179 = vmatprep.subr.bf16.mxu0 0
      %2180 = vmatpush1.bf16.msra.mxu0 0
      %2181 = vmatprep.subr.bf16.mxu0 0
      %2182 = vmatpush1.bf16.msra.mxu0 0
      %2183 = vmatprep.subr.bf16.mxu0 0
      %2184 = vmatpush1.bf16.msra.mxu0 0
      %2185 = vmatprep.subr.bf16.mxu0 0
      %2186 = vmatpush1.bf16.msra.mxu0 0
      %2187 = vmatprep.subr.bf16.mxu0 0
      %2188 = vmatpush1.bf16.msra.mxu0 0
      %2189 = vmatprep.subr.bf16.mxu0 0
      %2190 = vmatpush1.bf16.msra.mxu0 0
      %2191 = vmatprep.subr.bf16.mxu0 0
      %2192 = vmatpush1.bf16.msra.mxu0 0
      %2193 = vmatprep.subr.bf16.mxu0 0
      %2194 = vmatpush1.bf16.msra.mxu0 %v2177
      %2195 = vmatprep.subr.bf16.mxu0 0
      %2196 = vmatpush2.bf16.msra.mxu0 0
      %2197 = vmatprep.subr.bf16.mxu0 0
      %2198 = vmatpush2.bf16.msra.mxu0 0
      %2199 = vmatprep.subr.bf16.mxu0 0
      %2200 = vmatpush2.bf16.msra.mxu0 0
      %2201 = vmatprep.subr.bf16.mxu0 0
      %2202 = vmatpush2.bf16.msra.mxu0 0
      %2203 = vmatprep.subr.bf16.mxu0 0
      %2204 = vmatpush2.bf16.msra.mxu0 0
      %2205 = vmatprep.subr.bf16.mxu0 0
      %2206 = vmatpush2.bf16.msra.mxu0 0
      %2207 = vmatprep.subr.bf16.mxu0 0
      %2208 = vmatpush2.bf16.msra.mxu0 0
      %2209 = vmatprep.subr.bf16.mxu0 0
      %2210 = vmatpush2.bf16.msra.mxu0 0
      %2211 = vmatprep.mubr.bf16.mxu0 0
      %2212 = vmatmul.mubr.bf16.gmra.mxu0 %v2128
      %v2213 = vpop.f32.mrf.mxu0
      %v2214 = vadd.f32 0.0, %v2213
      %v2215 = vpop.f32.mrf.mxu0
      %v2216 = vpop.f32.mrf.mxu0
      %v2217 = vadd.f32 0.0, %v2216
      %v2218 = vpop.f32.mrf.mxu0
      %2219 = vmatprep.mubr.bf16.mxu0 0
      %2220 = vmatmul.mubr.bf16.gmra.mxu0 %v2131
      %v2221 = vpop.f32.mrf.mxu0
      %v2222 = vadd.f32 0.0, %v2221
      %v2223 = vpop.f32.mrf.mxu0
      %v2224 = vpop.f32.mrf.mxu0
      %v2225 = vadd.f32 0.0, %v2224
      %v2226 = vpop.f32.mrf.mxu0
      %2227 = vmatprep.mubr.bf16.mxu0 0
      %2228 = vmatmul.mubr.bf16.gmra.mxu0 %v2134
      %v2229 = vpop.f32.mrf.mxu0
      %v2230 = vadd.f32 0.0, %v2229
      %v2231 = vpop.f32.mrf.mxu0
      %v2232 = vpop.f32.mrf.mxu0
      %v2233 = vadd.f32 0.0, %v2232
      %v2234 = vpop.f32.mrf.mxu0
      %2235 = vmatprep.mubr.bf16.mxu0 0
      %2236 = vmatmul.mubr.bf16.gmra.mxu0 %v2137
      %v2237 = vpop.f32.mrf.mxu0
      %v2238 = vadd.f32 0.0, %v2237
      %v2239 = vpop.f32.mrf.mxu0
      %v2240 = vpop.f32.mrf.mxu0
      %v2241 = vadd.f32 0.0, %v2240
      %v2242 = vpop.f32.mrf.mxu0
      %2243 = vmatprep.mubr.bf16.mxu0 0
      %2244 = vmatmul.mubr.bf16.gmra.mxu0 %v2140
      %v2245 = vpop.f32.mrf.mxu0
      %v2246 = vadd.f32 0.0, %v2245
      %v2247 = vpop.f32.mrf.mxu0
      %v2248 = vpop.f32.mrf.mxu0
      %v2249 = vadd.f32 0.0, %v2248
      %v2250 = vpop.f32.mrf.mxu0
      %2251 = vmatprep.mubr.bf16.mxu0 0
      %2252 = vmatmul.mubr.bf16.gmra.mxu0 %v2143
      %v2253 = vpop.f32.mrf.mxu0
      %v2254 = vadd.f32 0.0, %v2253
      %v2255 = vpop.f32.mrf.mxu0
      %v2256 = vpop.f32.mrf.mxu0
      %v2257 = vadd.f32 0.0, %v2256
      %v2258 = vpop.f32.mrf.mxu0
      %2259 = vmatprep.mubr.bf16.mxu0 0
      %2260 = vmatmul.mubr.bf16.gmra.mxu0 %v2146
      %v2261 = vpop.f32.mrf.mxu0
      %v2262 = vadd.f32 0.0, %v2261
      %v2263 = vpop.f32.mrf.mxu0
      %v2264 = vpop.f32.mrf.mxu0
      %v2265 = vadd.f32 0.0, %v2264
      %v2266 = vpop.f32.mrf.mxu0
      %2267 = vmatprep.mubr.bf16.mxu0 0
      %2268 = vmatmul.mubr.bf16.gmra.mxu0 %v2149
      %v2269 = vpop.f32.mrf.mxu0
      %v2270 = vadd.f32 0.0, %v2269
      %v2271 = vpop.f32.mrf.mxu0
      %v2272 = vpop.f32.mrf.mxu0
      %v2273 = vadd.f32 0.0, %v2272
      %v2274 = vpop.f32.mrf.mxu0
      %2275 = vmatprep.mubr.bf16.mxu0 0
      %2276 = vmatmul.mubr.bf16.gmra.mxu0 %v2152
      %v2277 = vpop.f32.mrf.mxu0
      %v2278 = vadd.f32 0.0, %v2277
      %v2279 = vpop.f32.mrf.mxu0
      %v2280 = vpop.f32.mrf.mxu0
      %v2281 = vadd.f32 0.0, %v2280
      %v2282 = vpop.f32.mrf.mxu0
      %2283 = vmatprep.mubr.bf16.mxu0 0
      %2284 = vmatmul.mubr.bf16.gmra.mxu0 %v2155
      %v2285 = vpop.f32.mrf.mxu0
      %v2286 = vadd.f32 0.0, %v2285
      %v2287 = vpop.f32.mrf.mxu0
      %v2288 = vpop.f32.mrf.mxu0
      %v2289 = vadd.f32 0.0, %v2288
      %v2290 = vpop.f32.mrf.mxu0
      %2291 = vmatprep.mubr.bf16.mxu0 0
      %2292 = vmatmul.mubr.bf16.gmra.mxu0 %v2158
      %v2293 = vpop.f32.mrf.mxu0
      %v2294 = vadd.f32 0.0, %v2293
      %v2295 = vpop.f32.mrf.mxu0
      %v2296 = vpop.f32.mrf.mxu0
      %v2297 = vadd.f32 0.0, %v2296
      %v2298 = vpop.f32.mrf.mxu0
      %2299 = vmatprep.mubr.bf16.mxu0 0
      %2300 = vmatmul.mubr.bf16.gmra.mxu0 %v2161
      %v2301 = vpop.f32.mrf.mxu0
      %v2302 = vadd.f32 0.0, %v2301
      %v2303 = vpop.f32.mrf.mxu0
      %v2304 = vpop.f32.mrf.mxu0
      %v2305 = vadd.f32 0.0, %v2304
      %v2306 = vpop.f32.mrf.mxu0
      %2307 = vmatprep.mubr.bf16.mxu0 0
      %2308 = vmatmul.mubr.bf16.gmra.mxu0 %v2164
      %v2309 = vpop.f32.mrf.mxu0
      %v2310 = vadd.f32 0.0, %v2309
      %v2311 = vpop.f32.mrf.mxu0
      %v2312 = vpop.f32.mrf.mxu0
      %v2313 = vadd.f32 0.0, %v2312
      %v2314 = vpop.f32.mrf.mxu0
      %2315 = vmatprep.mubr.bf16.mxu0 0
      %2316 = vmatmul.mubr.bf16.gmra.mxu0 %v2167
      %v2317 = vpop.f32.mrf.mxu0
      %v2318 = vadd.f32 0.0, %v2317
      %v2319 = vpop.f32.mrf.mxu0
      %v2320 = vpop.f32.mrf.mxu0
      %v2321 = vadd.f32 0.0, %v2320
      %v2322 = vpop.f32.mrf.mxu0
      %2323 = vmatprep.mubr.bf16.mxu0 0
      %2324 = vmatmul.mubr.bf16.gmra.mxu0 %v2170
      %v2325 = vpop.f32.mrf.mxu0
      %v2326 = vadd.f32 0.0, %v2325
      %v2327 = vpop.f32.mrf.mxu0
      %v2328 = vpop.f32.mrf.mxu0
      %v2329 = vadd.f32 0.0, %v2328
      %v2330 = vpop.f32.mrf.mxu0
      %2331 = vmatprep.mubr.bf16.mxu0 0
      %2332 = vmatmul.mubr.bf16.gmra.mxu0 %v2173
      %v2333 = vpop.f32.mrf.mxu0
      %v2334 = vadd.f32 0.0, %v2333
      %v2335 = vpop.f32.mrf.mxu0
      %v2336 = vpop.f32.mrf.mxu0
      %v2337 = vadd.f32 0.0, %v2336
      %v2338 = vpop.f32.mrf.mxu0
      %2339 = vdwg.mxu0
      %v2341 = vsel %vm280, %v944, 0
      %v2344 = vsel %vm280, %v945, 0
      %v2347 = vsel %vm280, %v946, 0
      %v2350 = vsel %vm280, %v947, 0
      %v2353 = vsel %vm280, %v948, 0
      %v2356 = vsel %vm280, %v949, 0
      %v2359 = vsel %vm280, %v950, 0
      %v2362 = vsel %vm280, %v951, 0
      %v2365 = vsel %vm280, %v952, 0
      %v2368 = vsel %vm280, %v953, 0
      %v2371 = vsel %vm280, %v954, 0
      %v2374 = vsel %vm280, %v955, 0
      %v2377 = vsel %vm280, %v956, 0
      %v2380 = vsel %vm280, %v957, 0
      %v2383 = vsel %vm280, %v958, 0
      %v2386 = vsel %vm280, %v959, 0
      %v2389 = vsel %vm2175, %v960, 0
      %2391 = vmatprep.subr.bf16.mxu0 0
      %2392 = vmatpush1.bf16.msra.mxu0 0
      %2393 = vmatprep.subr.bf16.mxu0 0
      %2394 = vmatpush1.bf16.msra.mxu0 0
      %2395 = vmatprep.subr.bf16.mxu0 0
      %2396 = vmatpush1.bf16.msra.mxu0 0
      %2397 = vmatprep.subr.bf16.mxu0 0
      %2398 = vmatpush1.bf16.msra.mxu0 0
      %2399 = vmatprep.subr.bf16.mxu0 0
      %2400 = vmatpush1.bf16.msra.mxu0 0
      %2401 = vmatprep.subr.bf16.mxu0 0
      %2402 = vmatpush1.bf16.msra.mxu0 0
      %2403 = vmatprep.subr.bf16.mxu0 0
      %2404 = vmatpush1.bf16.msra.mxu0 0
      %2405 = vmatprep.subr.bf16.mxu0 0
      %2406 = vmatpush1.bf16.msra.mxu0 %v2389
      %2407 = vmatprep.subr.bf16.mxu0 0
      %2408 = vmatpush2.bf16.msra.mxu0 0
      %2409 = vmatprep.subr.bf16.mxu0 0
      %2410 = vmatpush2.bf16.msra.mxu0 0
      %2411 = vmatprep.subr.bf16.mxu0 0
      %2412 = vmatpush2.bf16.msra.mxu0 0
      %2413 = vmatprep.subr.bf16.mxu0 0
      %2414 = vmatpush2.bf16.msra.mxu0 0
      %2415 = vmatprep.subr.bf16.mxu0 0
      %2416 = vmatpush2.bf16.msra.mxu0 0
      %2417 = vmatprep.subr.bf16.mxu0 0
      %2418 = vmatpush2.bf16.msra.mxu0 0
      %2419 = vmatprep.subr.bf16.mxu0 0
      %2420 = vmatpush2.bf16.msra.mxu0 0
      %2421 = vmatprep.subr.bf16.mxu0 0
      %2422 = vmatpush2.bf16.msra.mxu0 0
      %2423 = vmatprep.mubr.bf16.mxu0 0
      %2424 = vmatmul.mubr.bf16.gmra.mxu0 %v2341
      %v2425 = vpop.f32.mrf.mxu0
      %v2426 = vadd.f32 %v2214, %v2425
      %v2427 = vpop.f32.mrf.mxu0
      %v2428 = vpop.f32.mrf.mxu0
      %v2429 = vadd.f32 %v2217, %v2428
      %v2430 = vpop.f32.mrf.mxu0
      %2431 = vmatprep.mubr.bf16.mxu0 0
      %2432 = vmatmul.mubr.bf16.gmra.mxu0 %v2344
      %v2433 = vpop.f32.mrf.mxu0
      %v2434 = vadd.f32 %v2222, %v2433
      %v2435 = vpop.f32.mrf.mxu0
      %v2436 = vpop.f32.mrf.mxu0
      %v2437 = vadd.f32 %v2225, %v2436
      %v2438 = vpop.f32.mrf.mxu0
      %2439 = vmatprep.mubr.bf16.mxu0 0
      %2440 = vmatmul.mubr.bf16.gmra.mxu0 %v2347
      %v2441 = vpop.f32.mrf.mxu0
      %v2442 = vadd.f32 %v2230, %v2441
      %v2443 = vpop.f32.mrf.mxu0
      %v2444 = vpop.f32.mrf.mxu0
      %v2445 = vadd.f32 %v2233, %v2444
      %v2446 = vpop.f32.mrf.mxu0
      %2447 = vmatprep.mubr.bf16.mxu0 0
      %2448 = vmatmul.mubr.bf16.gmra.mxu0 %v2350
      %v2449 = vpop.f32.mrf.mxu0
      %v2450 = vadd.f32 %v2238, %v2449
      %v2451 = vpop.f32.mrf.mxu0
      %v2452 = vpop.f32.mrf.mxu0
      %v2453 = vadd.f32 %v2241, %v2452
      %v2454 = vpop.f32.mrf.mxu0
      %2455 = vmatprep.mubr.bf16.mxu0 0
      %2456 = vmatmul.mubr.bf16.gmra.mxu0 %v2353
      %v2457 = vpop.f32.mrf.mxu0
      %v2458 = vadd.f32 %v2246, %v2457
      %v2459 = vpop.f32.mrf.mxu0
      %v2460 = vpop.f32.mrf.mxu0
      %v2461 = vadd.f32 %v2249, %v2460
      %v2462 = vpop.f32.mrf.mxu0
      %2463 = vmatprep.mubr.bf16.mxu0 0
      %2464 = vmatmul.mubr.bf16.gmra.mxu0 %v2356
      %v2465 = vpop.f32.mrf.mxu0
      %v2466 = vadd.f32 %v2254, %v2465
      %v2467 = vpop.f32.mrf.mxu0
      %v2468 = vpop.f32.mrf.mxu0
      %v2469 = vadd.f32 %v2257, %v2468
      %v2470 = vpop.f32.mrf.mxu0
      %2471 = vmatprep.mubr.bf16.mxu0 0
      %2472 = vmatmul.mubr.bf16.gmra.mxu0 %v2359
      %v2473 = vpop.f32.mrf.mxu0
      %v2474 = vadd.f32 %v2262, %v2473
      %v2475 = vpop.f32.mrf.mxu0
      %v2476 = vpop.f32.mrf.mxu0
      %v2477 = vadd.f32 %v2265, %v2476
      %v2478 = vpop.f32.mrf.mxu0
      %2479 = vmatprep.mubr.bf16.mxu0 0
      %2480 = vmatmul.mubr.bf16.gmra.mxu0 %v2362
      %v2481 = vpop.f32.mrf.mxu0
      %v2482 = vadd.f32 %v2270, %v2481
      %v2483 = vpop.f32.mrf.mxu0
      %v2484 = vpop.f32.mrf.mxu0
      %v2485 = vadd.f32 %v2273, %v2484
      %v2486 = vpop.f32.mrf.mxu0
      %2487 = vmatprep.mubr.bf16.mxu0 0
      %2488 = vmatmul.mubr.bf16.gmra.mxu0 %v2365
      %v2489 = vpop.f32.mrf.mxu0
      %v2490 = vadd.f32 %v2278, %v2489
      %v2491 = vpop.f32.mrf.mxu0
      %v2492 = vpop.f32.mrf.mxu0
      %v2493 = vadd.f32 %v2281, %v2492
      %v2494 = vpop.f32.mrf.mxu0
      %2495 = vmatprep.mubr.bf16.mxu0 0
      %2496 = vmatmul.mubr.bf16.gmra.mxu0 %v2368
      %v2497 = vpop.f32.mrf.mxu0
      %v2498 = vadd.f32 %v2286, %v2497
      %v2499 = vpop.f32.mrf.mxu0
      %v2500 = vpop.f32.mrf.mxu0
      %v2501 = vadd.f32 %v2289, %v2500
      %v2502 = vpop.f32.mrf.mxu0
      %2503 = vmatprep.mubr.bf16.mxu0 0
      %2504 = vmatmul.mubr.bf16.gmra.mxu0 %v2371
      %v2505 = vpop.f32.mrf.mxu0
      %v2506 = vadd.f32 %v2294, %v2505
      %v2507 = vpop.f32.mrf.mxu0
      %v2508 = vpop.f32.mrf.mxu0
      %v2509 = vadd.f32 %v2297, %v2508
      %v2510 = vpop.f32.mrf.mxu0
      %2511 = vmatprep.mubr.bf16.mxu0 0
      %2512 = vmatmul.mubr.bf16.gmra.mxu0 %v2374
      %v2513 = vpop.f32.mrf.mxu0
      %v2514 = vadd.f32 %v2302, %v2513
      %v2515 = vpop.f32.mrf.mxu0
      %v2516 = vpop.f32.mrf.mxu0
      %v2517 = vadd.f32 %v2305, %v2516
      %v2518 = vpop.f32.mrf.mxu0
      %2519 = vmatprep.mubr.bf16.mxu0 0
      %2520 = vmatmul.mubr.bf16.gmra.mxu0 %v2377
      %v2521 = vpop.f32.mrf.mxu0
      %v2522 = vadd.f32 %v2310, %v2521
      %v2523 = vpop.f32.mrf.mxu0
      %v2524 = vpop.f32.mrf.mxu0
      %v2525 = vadd.f32 %v2313, %v2524
      %v2526 = vpop.f32.mrf.mxu0
      %2527 = vmatprep.mubr.bf16.mxu0 0
      %2528 = vmatmul.mubr.bf16.gmra.mxu0 %v2380
      %v2529 = vpop.f32.mrf.mxu0
      %v2530 = vadd.f32 %v2318, %v2529
      %v2531 = vpop.f32.mrf.mxu0
      %v2532 = vpop.f32.mrf.mxu0
      %v2533 = vadd.f32 %v2321, %v2532
      %v2534 = vpop.f32.mrf.mxu0
      %2535 = vmatprep.mubr.bf16.mxu0 0
      %2536 = vmatmul.mubr.bf16.gmra.mxu0 %v2383
      %v2537 = vpop.f32.mrf.mxu0
      %v2538 = vadd.f32 %v2326, %v2537
      %v2539 = vpop.f32.mrf.mxu0
      %v2540 = vpop.f32.mrf.mxu0
      %v2541 = vadd.f32 %v2329, %v2540
      %v2542 = vpop.f32.mrf.mxu0
      %2543 = vmatprep.mubr.bf16.mxu0 0
      %2544 = vmatmul.mubr.bf16.gmra.mxu0 %v2386
      %v2545 = vpop.f32.mrf.mxu0
      %v2546 = vadd.f32 %v2334, %v2545
      %v2547 = vpop.f32.mrf.mxu0
      %v2548 = vpop.f32.mrf.mxu0
      %v2549 = vadd.f32 %v2337, %v2548
      %v2550 = vpop.f32.mrf.mxu0
      %2551 = vdwg.mxu0
      %vm2552 = vcmask 15366
      %2553 = vst.msk [vmem:[%s346 + $0x2] sm:$0xc0] %vm2552, %v1901
      %2554 = vst.msk [vmem:[%s346 + $0xa] sm:$0xff] %vm280, %v1902
      %vm2555 = vcmask 13312
      %2556 = vst.msk [vmem:[%s346 + $0x12] sm:$0x3f] %vm2555, %v1903
      %2557 = vst.msk [vmem:[%s346 + $0x22] sm:$0xc0] %vm2552, %v1904
      %2558 = vst.msk [vmem:[%s346 + $0x2a] sm:$0xff] %vm280, %v1905
      %2559 = vst.msk [vmem:[%s346 + $0x32] sm:$0x3f] %vm2555, %v1906
      %2560 = vst.msk [vmem:[%s346 + $0x42] sm:$0xc0] %vm2552, %v1907
      %2561 = vst.msk [vmem:[%s346 + $0x4a] sm:$0xff] %vm280, %v1908
      %2562 = vst.msk [vmem:[%s346 + $0x52] sm:$0x3f] %vm2555, %v1909
      %2563 = vst.msk [vmem:[%s346 + $0x62] sm:$0xc0] %vm2552, %v1910
      %2564 = vst.msk [vmem:[%s346 + $0x6a] sm:$0xff] %vm280, %v1911
      %2565 = vst.msk [vmem:[%s346 + $0x72] sm:$0x3f] %vm2555, %v1912
      %2566 = vst.msk [vmem:[%s346 + $0x82] sm:$0xc0] %vm2552, %v1913
      %2567 = vst.msk [vmem:[%s346 + $0x8a] sm:$0xff] %vm280, %v1914
      %2568 = vst.msk [vmem:[%s346 + $0x92] sm:$0x3f] %vm2555, %v1915
      %2569 = vst.msk [vmem:[%s346 + $0xa2] sm:$0xc0] %vm2552, %v1916
      %2570 = vst.msk [vmem:[%s346 + $0xaa] sm:$0xff] %vm280, %v1917
      %2571 = vst.msk [vmem:[%s346 + $0xb2] sm:$0x3f] %vm2555, %v1918
      %2572 = vst.msk [vmem:[%s346 + $0xc2] sm:$0xc0] %vm2552, %v1919
      %2573 = vst.msk [vmem:[%s346 + $0xca] sm:$0xff] %vm280, %v1920
      %2574 = vst.msk [vmem:[%s346 + $0xd2] sm:$0x3f] %vm2555, %v1921
      %2575 = vst.msk [vmem:[%s346 + $0xe2] sm:$0xc0] %vm2552, %v1922
      %2576 = vst.msk [vmem:[%s346 + $0xea] sm:$0xff] %vm280, %v1923
      %2577 = vst.msk [vmem:[%s346 + $0xf2] sm:$0x3f] %vm2555, %v1924
      %2578 = vst.msk [vmem:[%s346 + $0x102] sm:$0xc0] %vm2552, %v1925
      %2579 = vst.msk [vmem:[%s346 + $0x10a] sm:$0xff] %vm280, %v1926
      %2580 = vst.msk [vmem:[%s346 + $0x112] sm:$0x3f] %vm2555, %v1927
      %2581 = vst.msk [vmem:[%s346 + $0x122] sm:$0xc0] %vm2552, %v1928
      %2582 = vst.msk [vmem:[%s346 + $0x12a] sm:$0xff] %vm280, %v1929
      %2583 = vst.msk [vmem:[%s346 + $0x132] sm:$0x3f] %vm2555, %v1930
      %2584 = vst.msk [vmem:[%s346 + $0x142] sm:$0xc0] %vm2552, %v1931
      %2585 = vst.msk [vmem:[%s346 + $0x14a] sm:$0xff] %vm280, %v1932
      %2586 = vst.msk [vmem:[%s346 + $0x152] sm:$0x3f] %vm2555, %v1933
      %2587 = vst.msk [vmem:[%s346 + $0x162] sm:$0xc0] %vm2552, %v1934
      %2588 = vst.msk [vmem:[%s346 + $0x16a] sm:$0xff] %vm280, %v1935
      %2589 = vst.msk [vmem:[%s346 + $0x172] sm:$0x3f] %vm2555, %v1936
      %2590 = vst.msk [vmem:[%s346 + $0x182] sm:$0xc0] %vm2552, %v1937
      %2591 = vst.msk [vmem:[%s346 + $0x18a] sm:$0xff] %vm280, %v1938
      %2592 = vst.msk [vmem:[%s346 + $0x192] sm:$0x3f] %vm2555, %v1939
      %2593 = vst.msk [vmem:[%s346 + $0x1a2] sm:$0xc0] %vm2552, %v1940
      %2594 = vst.msk [vmem:[%s346 + $0x1aa] sm:$0xff] %vm280, %v1941
      %2595 = vst.msk [vmem:[%s346 + $0x1b2] sm:$0x3f] %vm2555, %v1942
      %2596 = vst.msk [vmem:[%s346 + $0x1c2] sm:$0xc0] %vm2552, %v1943
      %2597 = vst.msk [vmem:[%s346 + $0x1ca] sm:$0xff] %vm280, %v1944
      %2598 = vst.msk [vmem:[%s346 + $0x1d2] sm:$0x3f] %vm2555, %v1945
      %2599 = vst.msk [vmem:[%s346 + $0x1e2] sm:$0xc0] %vm2552, %v1946
      %2600 = vst.msk [vmem:[%s346 + $0x1ea] sm:$0xff] %vm280, %v1947
      %2601 = vst.msk [vmem:[%s346 + $0x1f2] sm:$0x3f] %vm2555, %v1948
      %v2602 = vld [vmem:[%s961] sm:$0xff]
      %v2603 = vld [vmem:[%s961 + $0x8] sm:$0xff]
      %v2604 = vld [vmem:[%s961 + $0x10] sm:$0xff]
      %v2605 = vld [vmem:[%s961 + $0x18] sm:$0xff]
      %v2606 = vld [vmem:[%s961 + $0x20] sm:$0xff]
      %v2607 = vld [vmem:[%s961 + $0x28] sm:$0xff]
      %v2608 = vld [vmem:[%s961 + $0x30] sm:$0xff]
      %v2609 = vld [vmem:[%s961 + $0x38] sm:$0xff]
      %v2610 = vld [vmem:[%s961 + $0x40] sm:$0xff]
      %v2611 = vld [vmem:[%s961 + $0x48] sm:$0xff]
      %v2612 = vld [vmem:[%s961 + $0x50] sm:$0xff]
      %v2613 = vld [vmem:[%s961 + $0x58] sm:$0xff]
      %v2614 = vld [vmem:[%s961 + $0x60] sm:$0xff]
      %v2615 = vld [vmem:[%s961 + $0x68] sm:$0xff]
      %v2616 = vld [vmem:[%s961 + $0x70] sm:$0xff]
      %v2617 = vld [vmem:[%s961 + $0x78] sm:$0xff]
      %v2618 = vld [vmem:[%s961 + $0x80] sm:$0xff]
      %v2619 = vld [vmem:[%s961 + $0x88] sm:$0xff]
      %v2620 = vld [vmem:[%s961 + $0x90] sm:$0xff]
      %v2621 = vld [vmem:[%s961 + $0x98] sm:$0xff]
      %v2622 = vld [vmem:[%s961 + $0xa0] sm:$0xff]
      %v2623 = vld [vmem:[%s961 + $0xa8] sm:$0xff]
      %v2624 = vld [vmem:[%s961 + $0xb0] sm:$0xff]
      %v2625 = vld [vmem:[%s961 + $0xb8] sm:$0xff]
      %v2626 = vld [vmem:[%s961 + $0xc0] sm:$0xff]
      %v2627 = vld [vmem:[%s961 + $0xc8] sm:$0xff]
      %v2628 = vld [vmem:[%s961 + $0xd0] sm:$0xff]
      %v2629 = vld [vmem:[%s961 + $0xd8] sm:$0xff]
      %v2630 = vld [vmem:[%s961 + $0xe0] sm:$0xff]
      %v2631 = vld [vmem:[%s961 + $0xe8] sm:$0xff]
      %v2632 = vld [vmem:[%s961 + $0xf0] sm:$0xff]
      %v2633 = vld [vmem:[%s961 + $0xf8] sm:$0xff]
      %v2634 = vld [vmem:[%s961 + $0x100] sm:$0xff]
      %v2635 = vld [vmem:[%s961 + $0x108] sm:$0xff]
      %v2636 = vld [vmem:[%s961 + $0x110] sm:$0xff]
      %v2637 = vld [vmem:[%s961 + $0x118] sm:$0xff]
      %v2638 = vld [vmem:[%s961 + $0x120] sm:$0xff]
      %v2639 = vld [vmem:[%s961 + $0x128] sm:$0xff]
      %v2640 = vld [vmem:[%s961 + $0x130] sm:$0xff]
      %v2641 = vld [vmem:[%s961 + $0x138] sm:$0xff]
      %v2642 = vld [vmem:[%s961 + $0x140] sm:$0xff]
      %v2643 = vld [vmem:[%s961 + $0x148] sm:$0xff]
      %v2644 = vld [vmem:[%s961 + $0x150] sm:$0xff]
      %v2645 = vld [vmem:[%s961 + $0x158] sm:$0xff]
      %v2646 = vld [vmem:[%s961 + $0x160] sm:$0xff]
      %v2647 = vld [vmem:[%s961 + $0x168] sm:$0xff]
      %v2648 = vld [vmem:[%s961 + $0x170] sm:$0xff]
      %v2649 = vld [vmem:[%s961 + $0x178] sm:$0xff]
      %v2650 = vld [vmem:[%s961 + $0x180] sm:$0xff]
      %v2651 = vld [vmem:[%s961 + $0x188] sm:$0xff]
      %v2652 = vld [vmem:[%s961 + $0x190] sm:$0xff]
      %v2653 = vld [vmem:[%s961 + $0x198] sm:$0xff]
      %v2654 = vld [vmem:[%s961 + $0x1a0] sm:$0xff]
      %v2655 = vld [vmem:[%s961 + $0x1a8] sm:$0xff]
      %v2656 = vld [vmem:[%s961 + $0x1b0] sm:$0xff]
      %v2657 = vld [vmem:[%s961 + $0x1b8] sm:$0xff]
      %v2658 = vld [vmem:[%s961 + $0x1c0] sm:$0xff]
      %v2659 = vld [vmem:[%s961 + $0x1c8] sm:$0xff]
      %v2660 = vld [vmem:[%s961 + $0x1d0] sm:$0xff]
      %v2661 = vld [vmem:[%s961 + $0x1d8] sm:$0xff]
      %v2662 = vld [vmem:[%s961 + $0x1e0] sm:$0xff]
      %v2663 = vld [vmem:[%s961 + $0x1e8] sm:$0xff]
      %v2664 = vld [vmem:[%s961 + $0x1f0] sm:$0xff]
      %v2665 = vld [vmem:[%s961 + $0x1f8] sm:$0xff]
      %v2666 = vld [vmem:[%s961 + $0x200] sm:$0xff]
      %v2667 = vld [vmem:[%s961 + $0x208] sm:$0xff]
      %v2668 = vld [vmem:[%s961 + $0x210] sm:$0xff]
      %v2669 = vld [vmem:[%s961 + $0x218] sm:$0xff]
      %v2670 = vld [vmem:[%s961 + $0x220] sm:$0xff]
      %v2671 = vld [vmem:[%s961 + $0x228] sm:$0xff]
      %v2672 = vld [vmem:[%s961 + $0x230] sm:$0xff]
      %v2673 = vld [vmem:[%s961 + $0x238] sm:$0xff]
      %v2674 = vld [vmem:[%s961 + $0x240] sm:$0xff]
      %v2675 = vld [vmem:[%s961 + $0x248] sm:$0xff]
      %v2676 = vld [vmem:[%s961 + $0x250] sm:$0xff]
      %v2677 = vld [vmem:[%s961 + $0x258] sm:$0xff]
      %v2678 = vld [vmem:[%s961 + $0x260] sm:$0xff]
      %v2679 = vld [vmem:[%s961 + $0x268] sm:$0xff]
      %v2680 = vld [vmem:[%s961 + $0x270] sm:$0xff]
      %v2681 = vld [vmem:[%s961 + $0x278] sm:$0xff]
      %v2682 = vmax.f32 %v2602, %v2606
      %v2683 = vmax.f32 %v2603, %v2607
      %v2684 = vmax.f32 %v2604, %v2608
      %v2685 = vmax.f32 %v2605, %v2609
      %v2686 = vmax.f32 %v2606, %v2610
      %v2687 = vmax.f32 %v2607, %v2611
      %v2688 = vmax.f32 %v2608, %v2612
      %v2689 = vmax.f32 %v2609, %v2613
      %v2690 = vmax.f32 %v2610, %v2614
      %v2691 = vmax.f32 %v2611, %v2615
      %v2692 = vmax.f32 %v2612, %v2616
      %v2693 = vmax.f32 %v2613, %v2617
      %v2694 = vmax.f32 %v2614, %v2618
      %v2695 = vmax.f32 %v2615, %v2619
      %v2696 = vmax.f32 %v2616, %v2620
      %v2697 = vmax.f32 %v2617, %v2621
      %v2698 = vmax.f32 %v2618, %v2622
      %v2699 = vmax.f32 %v2619, %v2623
      %v2700 = vmax.f32 %v2620, %v2624
      %v2701 = vmax.f32 %v2621, %v2625
      %v2702 = vmax.f32 %v2622, %v2626
      %v2703 = vmax.f32 %v2623, %v2627
      %v2704 = vmax.f32 %v2624, %v2628
      %v2705 = vmax.f32 %v2625, %v2629
      %v2706 = vmax.f32 %v2626, %v2630
      %v2707 = vmax.f32 %v2627, %v2631
      %v2708 = vmax.f32 %v2628, %v2632
      %v2709 = vmax.f32 %v2629, %v2633
      %v2710 = vmax.f32 %v2630, %v2634
      %v2711 = vmax.f32 %v2631, %v2635
      %v2712 = vmax.f32 %v2632, %v2636
      %v2713 = vmax.f32 %v2633, %v2637
      %v2714 = vmax.f32 %v2634, %v2638
      %v2715 = vmax.f32 %v2635, %v2639
      %v2716 = vmax.f32 %v2636, %v2640
      %v2717 = vmax.f32 %v2637, %v2641
      %v2718 = vmax.f32 %v2638, %v2642
      %v2719 = vmax.f32 %v2639, %v2643
      %v2720 = vmax.f32 %v2640, %v2644
      %v2721 = vmax.f32 %v2641, %v2645
      %v2722 = vmax.f32 %v2642, %v2646
      %v2723 = vmax.f32 %v2643, %v2647
      %v2724 = vmax.f32 %v2644, %v2648
      %v2725 = vmax.f32 %v2645, %v2649
      %v2726 = vmax.f32 %v2646, %v2650
      %v2727 = vmax.f32 %v2647, %v2651
      %v2728 = vmax.f32 %v2648, %v2652
      %v2729 = vmax.f32 %v2649, %v2653
      %v2730 = vmax.f32 %v2650, %v2654
      %v2731 = vmax.f32 %v2651, %v2655
      %v2732 = vmax.f32 %v2652, %v2656
      %v2733 = vmax.f32 %v2653, %v2657
      %v2734 = vmax.f32 %v2654, %v2658
      %v2735 = vmax.f32 %v2655, %v2659
      %v2736 = vmax.f32 %v2656, %v2660
      %v2737 = vmax.f32 %v2657, %v2661
      %v2738 = vmax.f32 %v2658, %v2662
      %v2739 = vmax.f32 %v2659, %v2663
      %v2740 = vmax.f32 %v2660, %v2664
      %v2741 = vmax.f32 %v2661, %v2665
      %v2742 = vmax.f32 %v2662, %v2666
      %v2743 = vmax.f32 %v2663, %v2667
      %v2744 = vmax.f32 %v2664, %v2668
      %v2745 = vmax.f32 %v2665, %v2669
      %v2746 = vmax.f32 %v2666, %v2670
      %v2747 = vmax.f32 %v2667, %v2671
      %v2748 = vmax.f32 %v2668, %v2672
      %v2749 = vmax.f32 %v2669, %v2673
      %v2750 = vmax.f32 %v2670, %v2674
      %v2751 = vmax.f32 %v2671, %v2675
      %v2752 = vmax.f32 %v2672, %v2676
      %v2753 = vmax.f32 %v2673, %v2677
      %v2754 = vmax.f32 %v2682, %v2690
      %v2755 = vmax.f32 %v2683, %v2691
      %v2756 = vmax.f32 %v2684, %v2692
      %v2757 = vmax.f32 %v2685, %v2693
      %v2758 = vmax.f32 %v2686, %v2694
      %v2759 = vmax.f32 %v2687, %v2695
      %v2760 = vmax.f32 %v2688, %v2696
      %v2761 = vmax.f32 %v2689, %v2697
      %v2762 = vmax.f32 %v2690, %v2698
      %v2763 = vmax.f32 %v2691, %v2699
      %v2764 = vmax.f32 %v2692, %v2700
      %v2765 = vmax.f32 %v2693, %v2701
      %v2766 = vmax.f32 %v2694, %v2702
      %v2767 = vmax.f32 %v2695, %v2703
      %v2768 = vmax.f32 %v2696, %v2704
      %v2769 = vmax.f32 %v2697, %v2705
      %v2770 = vmax.f32 %v2698, %v2706
      %v2771 = vmax.f32 %v2699, %v2707
      %v2772 = vmax.f32 %v2700, %v2708
      %v2773 = vmax.f32 %v2701, %v2709
      %v2774 = vmax.f32 %v2702, %v2710
      %v2775 = vmax.f32 %v2703, %v2711
      %v2776 = vmax.f32 %v2704, %v2712
      %v2777 = vmax.f32 %v2705, %v2713
      %v2778 = vmax.f32 %v2706, %v2714
      %v2779 = vmax.f32 %v2707, %v2715
      %v2780 = vmax.f32 %v2708, %v2716
      %v2781 = vmax.f32 %v2709, %v2717
      %v2782 = vmax.f32 %v2710, %v2718
      %v2783 = vmax.f32 %v2711, %v2719
      %v2784 = vmax.f32 %v2712, %v2720
      %v2785 = vmax.f32 %v2713, %v2721
      %v2786 = vmax.f32 %v2714, %v2722
      %v2787 = vmax.f32 %v2715, %v2723
      %v2788 = vmax.f32 %v2716, %v2724
      %v2789 = vmax.f32 %v2717, %v2725
      %v2790 = vmax.f32 %v2718, %v2726
      %v2791 = vmax.f32 %v2719, %v2727
      %v2792 = vmax.f32 %v2720, %v2728
      %v2793 = vmax.f32 %v2721, %v2729
      %v2794 = vmax.f32 %v2722, %v2730
      %v2795 = vmax.f32 %v2723, %v2731
      %v2796 = vmax.f32 %v2724, %v2732
      %v2797 = vmax.f32 %v2725, %v2733
      %v2798 = vmax.f32 %v2726, %v2734
      %v2799 = vmax.f32 %v2727, %v2735
      %v2800 = vmax.f32 %v2728, %v2736
      %v2801 = vmax.f32 %v2729, %v2737
      %v2802 = vmax.f32 %v2730, %v2738
      %v2803 = vmax.f32 %v2731, %v2739
      %v2804 = vmax.f32 %v2732, %v2740
      %v2805 = vmax.f32 %v2733, %v2741
      %v2806 = vmax.f32 %v2734, %v2742
      %v2807 = vmax.f32 %v2735, %v2743
      %v2808 = vmax.f32 %v2736, %v2744
      %v2809 = vmax.f32 %v2737, %v2745
      %v2810 = vmax.f32 %v2738, %v2746
      %v2811 = vmax.f32 %v2739, %v2747
      %v2812 = vmax.f32 %v2740, %v2748
      %v2813 = vmax.f32 %v2741, %v2749
      %v2814 = vmax.f32 %v2742, %v2750
      %v2815 = vmax.f32 %v2743, %v2751
      %v2816 = vmax.f32 %v2744, %v2752
      %v2817 = vmax.f32 %v2745, %v2753
      %v2818 = vmax.f32 %v2754, %v2618
      %v2819 = vmax.f32 %v2755, %v2619
      %v2820 = vmax.f32 %v2756, %v2620
      %v2821 = vmax.f32 %v2757, %v2621
      %v2822 = vmax.f32 %v2758, %v2622
      %v2823 = vmax.f32 %v2759, %v2623
      %v2824 = vmax.f32 %v2760, %v2624
      %v2825 = vmax.f32 %v2761, %v2625
      %v2826 = vmax.f32 %v2762, %v2626
      %v2827 = vmax.f32 %v2763, %v2627
      %v2828 = vmax.f32 %v2764, %v2628
      %v2829 = vmax.f32 %v2765, %v2629
      %v2830 = vmax.f32 %v2766, %v2630
      %v2831 = vmax.f32 %v2767, %v2631
      %v2832 = vmax.f32 %v2768, %v2632
      %v2833 = vmax.f32 %v2769, %v2633
      %v2834 = vmax.f32 %v2770, %v2634
      %v2835 = vmax.f32 %v2771, %v2635
      %v2836 = vmax.f32 %v2772, %v2636
      %v2837 = vmax.f32 %v2773, %v2637
      %v2838 = vmax.f32 %v2774, %v2638
      %v2839 = vmax.f32 %v2775, %v2639
      %v2840 = vmax.f32 %v2776, %v2640
      %v2841 = vmax.f32 %v2777, %v2641
      %v2842 = vmax.f32 %v2778, %v2642
      %v2843 = vmax.f32 %v2779, %v2643
      %v2844 = vmax.f32 %v2780, %v2644
      %v2845 = vmax.f32 %v2781, %v2645
      %v2846 = vmax.f32 %v2782, %v2646
      %v2847 = vmax.f32 %v2783, %v2647
      %v2848 = vmax.f32 %v2784, %v2648
      %v2849 = vmax.f32 %v2785, %v2649
      %v2850 = vmax.f32 %v2786, %v2650
      %v2851 = vmax.f32 %v2787, %v2651
      %v2852 = vmax.f32 %v2788, %v2652
      %v2853 = vmax.f32 %v2789, %v2653
      %v2854 = vmax.f32 %v2790, %v2654
      %v2855 = vmax.f32 %v2791, %v2655
      %v2856 = vmax.f32 %v2792, %v2656
      %v2857 = vmax.f32 %v2793, %v2657
      %v2858 = vmax.f32 %v2794, %v2658
      %v2859 = vmax.f32 %v2795, %v2659
      %v2860 = vmax.f32 %v2796, %v2660
      %v2861 = vmax.f32 %v2797, %v2661
      %v2862 = vmax.f32 %v2798, %v2662
      %v2863 = vmax.f32 %v2799, %v2663
      %v2864 = vmax.f32 %v2800, %v2664
      %v2865 = vmax.f32 %v2801, %v2665
      %v2866 = vmax.f32 %v2802, %v2666
      %v2867 = vmax.f32 %v2803, %v2667
      %v2868 = vmax.f32 %v2804, %v2668
      %v2869 = vmax.f32 %v2805, %v2669
      %v2870 = vmax.f32 %v2806, %v2670
      %v2871 = vmax.f32 %v2807, %v2671
      %v2872 = vmax.f32 %v2808, %v2672
      %v2873 = vmax.f32 %v2809, %v2673
      %v2874 = vmax.f32 %v2810, %v2674
      %v2875 = vmax.f32 %v2811, %v2675
      %v2876 = vmax.f32 %v2812, %v2676
      %v2877 = vmax.f32 %v2813, %v2677
      %v2878 = vmax.f32 %v2814, %v2678
      %v2879 = vmax.f32 %v2815, %v2679
      %v2880 = vmax.f32 %v2816, %v2680
      %v2881 = vmax.f32 %v2817, %v2681
      %v2946 = vrot.slane %v2818, 1
      %v2947 = vrot.slane %v2819, 1
      %v2948 = vsel %vm1306, %v2946, %v2947
      %v2949 = vrot.slane %v2820, 1
      %v2950 = vsel %vm1306, %v2947, %v2949
      %v2951 = vrot.slane %v2821, 1
      %v2952 = vsel %vm1306, %v2949, %v2951
      %v2953 = vrot.slane %v2822, 1
      %v2954 = vrot.slane %v2823, 1
      %v2955 = vsel %vm1306, %v2953, %v2954
      %v2956 = vrot.slane %v2824, 1
      %v2957 = vsel %vm1306, %v2954, %v2956
      %v2958 = vrot.slane %v2825, 1
      %v2959 = vsel %vm1306, %v2956, %v2958
      %v2960 = vrot.slane %v2826, 1
      %v2961 = vrot.slane %v2827, 1
      %v2962 = vsel %vm1306, %v2960, %v2961
      %v2963 = vrot.slane %v2828, 1
      %v2964 = vsel %vm1306, %v2961, %v2963
      %v2965 = vrot.slane %v2829, 1
      %v2966 = vsel %vm1306, %v2963, %v2965
      %v2967 = vrot.slane %v2830, 1
      %v2968 = vrot.slane %v2831, 1
      %v2969 = vsel %vm1306, %v2967, %v2968
      %v2970 = vrot.slane %v2832, 1
      %v2971 = vsel %vm1306, %v2968, %v2970
      %v2972 = vrot.slane %v2833, 1
      %v2973 = vsel %vm1306, %v2970, %v2972
      %v2974 = vrot.slane %v2834, 1
      %v2975 = vrot.slane %v2835, 1
      %v2976 = vsel %vm1306, %v2974, %v2975
      %v2977 = vrot.slane %v2836, 1
      %v2978 = vsel %vm1306, %v2975, %v2977
      %v2979 = vrot.slane %v2837, 1
      %v2980 = vsel %vm1306, %v2977, %v2979
      %v2981 = vrot.slane %v2838, 1
      %v2982 = vrot.slane %v2839, 1
      %v2983 = vsel %vm1306, %v2981, %v2982
      %v2984 = vrot.slane %v2840, 1
      %v2985 = vsel %vm1306, %v2982, %v2984
      %v2986 = vrot.slane %v2841, 1
      %v2987 = vsel %vm1306, %v2984, %v2986
      %v2988 = vrot.slane %v2842, 1
      %v2989 = vrot.slane %v2843, 1
      %v2990 = vsel %vm1306, %v2988, %v2989
      %v2991 = vrot.slane %v2844, 1
      %v2992 = vsel %vm1306, %v2989, %v2991
      %v2993 = vrot.slane %v2845, 1
      %v2994 = vsel %vm1306, %v2991, %v2993
      %v2995 = vrot.slane %v2846, 1
      %v2996 = vrot.slane %v2847, 1
      %v2997 = vsel %vm1306, %v2995, %v2996
      %v2998 = vrot.slane %v2848, 1
      %v2999 = vsel %vm1306, %v2996, %v2998
      %v3000 = vrot.slane %v2849, 1
      %v3001 = vsel %vm1306, %v2998, %v3000
      %v3002 = vrot.slane %v2850, 1
      %v3003 = vrot.slane %v2851, 1
      %v3004 = vsel %vm1306, %v3002, %v3003
      %v3005 = vrot.slane %v2852, 1
      %v3006 = vsel %vm1306, %v3003, %v3005
      %v3007 = vrot.slane %v2853, 1
      %v3008 = vsel %vm1306, %v3005, %v3007
      %v3009 = vrot.slane %v2854, 1
      %v3010 = vrot.slane %v2855, 1
      %v3011 = vsel %vm1306, %v3009, %v3010
      %v3012 = vrot.slane %v2856, 1
      %v3013 = vsel %vm1306, %v3010, %v3012
      %v3014 = vrot.slane %v2857, 1
      %v3015 = vsel %vm1306, %v3012, %v3014
      %v3016 = vrot.slane %v2858, 1
      %v3017 = vrot.slane %v2859, 1
      %v3018 = vsel %vm1306, %v3016, %v3017
      %v3019 = vrot.slane %v2860, 1
      %v3020 = vsel %vm1306, %v3017, %v3019
      %v3021 = vrot.slane %v2861, 1
      %v3022 = vsel %vm1306, %v3019, %v3021
      %v3023 = vrot.slane %v2862, 1
      %v3024 = vrot.slane %v2863, 1
      %v3025 = vsel %vm1306, %v3023, %v3024
      %v3026 = vrot.slane %v2864, 1
      %v3027 = vsel %vm1306, %v3024, %v3026
      %v3028 = vrot.slane %v2865, 1
      %v3029 = vsel %vm1306, %v3026, %v3028
      %v3030 = vrot.slane %v2866, 1
      %v3031 = vrot.slane %v2867, 1
      %v3032 = vsel %vm1306, %v3030, %v3031
      %v3033 = vrot.slane %v2868, 1
      %v3034 = vsel %vm1306, %v3031, %v3033
      %v3035 = vrot.slane %v2869, 1
      %v3036 = vsel %vm1306, %v3033, %v3035
      %v3037 = vrot.slane %v2870, 1
      %v3038 = vrot.slane %v2871, 1
      %v3039 = vsel %vm1306, %v3037, %v3038
      %v3040 = vrot.slane %v2872, 1
      %v3041 = vsel %vm1306, %v3038, %v3040
      %v3042 = vrot.slane %v2873, 1
      %v3043 = vsel %vm1306, %v3040, %v3042
      %v3044 = vrot.slane %v2874, 1
      %v3045 = vrot.slane %v2875, 1
      %v3046 = vsel %vm1306, %v3044, %v3045
      %v3047 = vrot.slane %v2876, 1
      %v3048 = vsel %vm1306, %v3045, %v3047
      %v3049 = vrot.slane %v2877, 1
      %v3050 = vsel %vm1306, %v3047, %v3049
      %v3051 = vrot.slane %v2878, 1
      %v3052 = vrot.slane %v2879, 1
      %v3053 = vsel %vm1306, %v3051, %v3052
      %v3054 = vrot.slane %v2880, 1
      %v3055 = vsel %vm1306, %v3052, %v3054
      %v3056 = vrot.slane %v2881, 1
      %v3057 = vsel %vm1306, %v3054, %v3056
      %v3122 = vmax.f32 %v2818, %v2948
      %v3123 = vmax.f32 %v2819, %v2950
      %v3124 = vmax.f32 %v2820, %v2952
      %v3125 = vmax.f32 %v2821, %v2951
      %v3126 = vmax.f32 %v2822, %v2955
      %v3127 = vmax.f32 %v2823, %v2957
      %v3128 = vmax.f32 %v2824, %v2959
      %v3129 = vmax.f32 %v2825, %v2958
      %v3130 = vmax.f32 %v2826, %v2962
      %v3131 = vmax.f32 %v2827, %v2964
      %v3132 = vmax.f32 %v2828, %v2966
      %v3133 = vmax.f32 %v2829, %v2965
      %v3134 = vmax.f32 %v2830, %v2969
      %v3135 = vmax.f32 %v2831, %v2971
      %v3136 = vmax.f32 %v2832, %v2973
      %v3137 = vmax.f32 %v2833, %v2972
      %v3138 = vmax.f32 %v2834, %v2976
      %v3139 = vmax.f32 %v2835, %v2978
      %v3140 = vmax.f32 %v2836, %v2980
      %v3141 = vmax.f32 %v2837, %v2979
      %v3142 = vmax.f32 %v2838, %v2983
      %v3143 = vmax.f32 %v2839, %v2985
      %v3144 = vmax.f32 %v2840, %v2987
      %v3145 = vmax.f32 %v2841, %v2986
      %v3146 = vmax.f32 %v2842, %v2990
      %v3147 = vmax.f32 %v2843, %v2992
      %v3148 = vmax.f32 %v2844, %v2994
      %v3149 = vmax.f32 %v2845, %v2993
      %v3150 = vmax.f32 %v2846, %v2997
      %v3151 = vmax.f32 %v2847, %v2999
      %v3152 = vmax.f32 %v2848, %v3001
      %v3153 = vmax.f32 %v2849, %v3000
      %v3154 = vmax.f32 %v2850, %v3004
      %v3155 = vmax.f32 %v2851, %v3006
      %v3156 = vmax.f32 %v2852, %v3008
      %v3157 = vmax.f32 %v2853, %v3007
      %v3158 = vmax.f32 %v2854, %v3011
      %v3159 = vmax.f32 %v2855, %v3013
      %v3160 = vmax.f32 %v2856, %v3015
      %v3161 = vmax.f32 %v2857, %v3014
      %v3162 = vmax.f32 %v2858, %v3018
      %v3163 = vmax.f32 %v2859, %v3020
      %v3164 = vmax.f32 %v2860, %v3022
      %v3165 = vmax.f32 %v2861, %v3021
      %v3166 = vmax.f32 %v2862, %v3025
      %v3167 = vmax.f32 %v2863, %v3027
      %v3168 = vmax.f32 %v2864, %v3029
      %v3169 = vmax.f32 %v2865, %v3028
      %v3170 = vmax.f32 %v2866, %v3032
      %v3171 = vmax.f32 %v2867, %v3034
      %v3172 = vmax.f32 %v2868, %v3036
      %v3173 = vmax.f32 %v2869, %v3035
      %v3174 = vmax.f32 %v2870, %v3039
      %v3175 = vmax.f32 %v2871, %v3041
      %v3176 = vmax.f32 %v2872, %v3043
      %v3177 = vmax.f32 %v2873, %v3042
      %v3178 = vmax.f32 %v2874, %v3046
      %v3179 = vmax.f32 %v2875, %v3048
      %v3180 = vmax.f32 %v2876, %v3050
      %v3181 = vmax.f32 %v2877, %v3049
      %v3182 = vmax.f32 %v2878, %v3053
      %v3183 = vmax.f32 %v2879, %v3055
      %v3184 = vmax.f32 %v2880, %v3057
      %v3185 = vmax.f32 %v2881, %v3056
      %v3234 = vrot.slane %v3123, 2
      %v3235 = vrot.slane %v3124, 2
      %v3236 = vsel %vm1595, %v3234, %v3235
      %v3237 = vrot.slane %v3125, 2
      %v3238 = vsel %vm1595, %v3235, %v3237
      %v3239 = vrot.slane %v3127, 2
      %v3240 = vrot.slane %v3128, 2
      %v3241 = vsel %vm1595, %v3239, %v3240
      %v3242 = vrot.slane %v3129, 2
      %v3243 = vsel %vm1595, %v3240, %v3242
      %v3244 = vrot.slane %v3131, 2
      %v3245 = vrot.slane %v3132, 2
      %v3246 = vsel %vm1595, %v3244, %v3245
      %v3247 = vrot.slane %v3133, 2
      %v3248 = vsel %vm1595, %v3245, %v3247
      %v3249 = vrot.slane %v3135, 2
      %v3250 = vrot.slane %v3136, 2
      %v3251 = vsel %vm1595, %v3249, %v3250
      %v3252 = vrot.slane %v3137, 2
      %v3253 = vsel %vm1595, %v3250, %v3252
      %v3254 = vrot.slane %v3139, 2
      %v3255 = vrot.slane %v3140, 2
      %v3256 = vsel %vm1595, %v3254, %v3255
      %v3257 = vrot.slane %v3141, 2
      %v3258 = vsel %vm1595, %v3255, %v3257
      %v3259 = vrot.slane %v3143, 2
      %v3260 = vrot.slane %v3144, 2
      %v3261 = vsel %vm1595, %v3259, %v3260
      %v3262 = vrot.slane %v3145, 2
      %v3263 = vsel %vm1595, %v3260, %v3262
      %v3264 = vrot.slane %v3147, 2
      %v3265 = vrot.slane %v3148, 2
      %v3266 = vsel %vm1595, %v3264, %v3265
      %v3267 = vrot.slane %v3149, 2
      %v3268 = vsel %vm1595, %v3265, %v3267
      %v3269 = vrot.slane %v3151, 2
      %v3270 = vrot.slane %v3152, 2
      %v3271 = vsel %vm1595, %v3269, %v3270
      %v3272 = vrot.slane %v3153, 2
      %v3273 = vsel %vm1595, %v3270, %v3272
      %v3274 = vrot.slane %v3155, 2
      %v3275 = vrot.slane %v3156, 2
      %v3276 = vsel %vm1595, %v3274, %v3275
      %v3277 = vrot.slane %v3157, 2
      %v3278 = vsel %vm1595, %v3275, %v3277
      %v3279 = vrot.slane %v3159, 2
      %v3280 = vrot.slane %v3160, 2
      %v3281 = vsel %vm1595, %v3279, %v3280
      %v3282 = vrot.slane %v3161, 2
      %v3283 = vsel %vm1595, %v3280, %v3282
      %v3284 = vrot.slane %v3163, 2
      %v3285 = vrot.slane %v3164, 2
      %v3286 = vsel %vm1595, %v3284, %v3285
      %v3287 = vrot.slane %v3165, 2
      %v3288 = vsel %vm1595, %v3285, %v3287
      %v3289 = vrot.slane %v3167, 2
      %v3290 = vrot.slane %v3168, 2
      %v3291 = vsel %vm1595, %v3289, %v3290
      %v3292 = vrot.slane %v3169, 2
      %v3293 = vsel %vm1595, %v3290, %v3292
      %v3294 = vrot.slane %v3171, 2
      %v3295 = vrot.slane %v3172, 2
      %v3296 = vsel %vm1595, %v3294, %v3295
      %v3297 = vrot.slane %v3173, 2
      %v3298 = vsel %vm1595, %v3295, %v3297
      %v3299 = vrot.slane %v3175, 2
      %v3300 = vrot.slane %v3176, 2
      %v3301 = vsel %vm1595, %v3299, %v3300
      %v3302 = vrot.slane %v3177, 2
      %v3303 = vsel %vm1595, %v3300, %v3302
      %v3304 = vrot.slane %v3179, 2
      %v3305 = vrot.slane %v3180, 2
      %v3306 = vsel %vm1595, %v3304, %v3305
      %v3307 = vrot.slane %v3181, 2
      %v3308 = vsel %vm1595, %v3305, %v3307
      %v3309 = vrot.slane %v3183, 2
      %v3310 = vrot.slane %v3184, 2
      %v3311 = vsel %vm1595, %v3309, %v3310
      %v3312 = vrot.slane %v3185, 2
      %v3313 = vsel %vm1595, %v3310, %v3312
      %v3362 = vmax.f32 %v3122, %v3234
      %v3363 = vmax.f32 %v3123, %v3236
      %v3364 = vmax.f32 %v3124, %v3238
      %v3365 = vmax.f32 %v3126, %v3239
      %v3366 = vmax.f32 %v3127, %v3241
      %v3367 = vmax.f32 %v3128, %v3243
      %v3368 = vmax.f32 %v3130, %v3244
      %v3369 = vmax.f32 %v3131, %v3246
      %v3370 = vmax.f32 %v3132, %v3248
      %v3371 = vmax.f32 %v3134, %v3249
      %v3372 = vmax.f32 %v3135, %v3251
      %v3373 = vmax.f32 %v3136, %v3253
      %v3374 = vmax.f32 %v3138, %v3254
      %v3375 = vmax.f32 %v3139, %v3256
      %v3376 = vmax.f32 %v3140, %v3258
      %v3377 = vmax.f32 %v3142, %v3259
      %v3378 = vmax.f32 %v3143, %v3261
      %v3379 = vmax.f32 %v3144, %v3263
      %v3380 = vmax.f32 %v3146, %v3264
      %v3381 = vmax.f32 %v3147, %v3266
      %v3382 = vmax.f32 %v3148, %v3268
      %v3383 = vmax.f32 %v3150, %v3269
      %v3384 = vmax.f32 %v3151, %v3271
      %v3385 = vmax.f32 %v3152, %v3273
      %v3386 = vmax.f32 %v3154, %v3274
      %v3387 = vmax.f32 %v3155, %v3276
      %v3388 = vmax.f32 %v3156, %v3278
      %v3389 = vmax.f32 %v3158, %v3279
      %v3390 = vmax.f32 %v3159, %v3281
      %v3391 = vmax.f32 %v3160, %v3283
      %v3392 = vmax.f32 %v3162, %v3284
      %v3393 = vmax.f32 %v3163, %v3286
      %v3394 = vmax.f32 %v3164, %v3288
      %v3395 = vmax.f32 %v3166, %v3289
      %v3396 = vmax.f32 %v3167, %v3291
      %v3397 = vmax.f32 %v3168, %v3293
      %v3398 = vmax.f32 %v3170, %v3294
      %v3399 = vmax.f32 %v3171, %v3296
      %v3400 = vmax.f32 %v3172, %v3298
      %v3401 = vmax.f32 %v3174, %v3299
      %v3402 = vmax.f32 %v3175, %v3301
      %v3403 = vmax.f32 %v3176, %v3303
      %v3404 = vmax.f32 %v3178, %v3304
      %v3405 = vmax.f32 %v3179, %v3306
      %v3406 = vmax.f32 %v3180, %v3308
      %v3407 = vmax.f32 %v3182, %v3309
      %v3408 = vmax.f32 %v3183, %v3311
      %v3409 = vmax.f32 %v3184, %v3313
      %v3410 = vrot.slane %v2819, 4
      %v3411 = vrot.slane %v2820, 4
      %v3412 = vsel %vm1772, %v3410, %v3411
      %v3413 = vrot.slane %v2821, 4
      %v3414 = vsel %vm1772, %v3411, %v3413
      %v3415 = vrot.slane %v2823, 4
      %v3416 = vrot.slane %v2824, 4
      %v3417 = vsel %vm1772, %v3415, %v3416
      %v3418 = vrot.slane %v2825, 4
      %v3419 = vsel %vm1772, %v3416, %v3418
      %v3420 = vrot.slane %v2827, 4
      %v3421 = vrot.slane %v2828, 4
      %v3422 = vsel %vm1772, %v3420, %v3421
      %v3423 = vrot.slane %v2829, 4
      %v3424 = vsel %vm1772, %v3421, %v3423
      %v3425 = vrot.slane %v2831, 4
      %v3426 = vrot.slane %v2832, 4
      %v3427 = vsel %vm1772, %v3425, %v3426
      %v3428 = vrot.slane %v2833, 4
      %v3429 = vsel %vm1772, %v3426, %v3428
      %v3430 = vrot.slane %v2835, 4
      %v3431 = vrot.slane %v2836, 4
      %v3432 = vsel %vm1772, %v3430, %v3431
      %v3433 = vrot.slane %v2837, 4
      %v3434 = vsel %vm1772, %v3431, %v3433
      %v3435 = vrot.slane %v2839, 4
      %v3436 = vrot.slane %v2840, 4
      %v3437 = vsel %vm1772, %v3435, %v3436
      %v3438 = vrot.slane %v2841, 4
      %v3439 = vsel %vm1772, %v3436, %v3438
      %v3440 = vrot.slane %v2843, 4
      %v3441 = vrot.slane %v2844, 4
      %v3442 = vsel %vm1772, %v3440, %v3441
      %v3443 = vrot.slane %v2845, 4
      %v3444 = vsel %vm1772, %v3441, %v3443
      %v3445 = vrot.slane %v2847, 4
      %v3446 = vrot.slane %v2848, 4
      %v3447 = vsel %vm1772, %v3445, %v3446
      %v3448 = vrot.slane %v2849, 4
      %v3449 = vsel %vm1772, %v3446, %v3448
      %v3450 = vrot.slane %v2851, 4
      %v3451 = vrot.slane %v2852, 4
      %v3452 = vsel %vm1772, %v3450, %v3451
      %v3453 = vrot.slane %v2853, 4
      %v3454 = vsel %vm1772, %v3451, %v3453
      %v3455 = vrot.slane %v2855, 4
      %v3456 = vrot.slane %v2856, 4
      %v3457 = vsel %vm1772, %v3455, %v3456
      %v3458 = vrot.slane %v2857, 4
      %v3459 = vsel %vm1772, %v3456, %v3458
      %v3460 = vrot.slane %v2859, 4
      %v3461 = vrot.slane %v2860, 4
      %v3462 = vsel %vm1772, %v3460, %v3461
      %v3463 = vrot.slane %v2861, 4
      %v3464 = vsel %vm1772, %v3461, %v3463
      %v3465 = vrot.slane %v2863, 4
      %v3466 = vrot.slane %v2864, 4
      %v3467 = vsel %vm1772, %v3465, %v3466
      %v3468 = vrot.slane %v2865, 4
      %v3469 = vsel %vm1772, %v3466, %v3468
      %v3470 = vrot.slane %v2867, 4
      %v3471 = vrot.slane %v2868, 4
      %v3472 = vsel %vm1772, %v3470, %v3471
      %v3473 = vrot.slane %v2869, 4
      %v3474 = vsel %vm1772, %v3471, %v3473
      %v3475 = vrot.slane %v2871, 4
      %v3476 = vrot.slane %v2872, 4
      %v3477 = vsel %vm1772, %v3475, %v3476
      %v3478 = vrot.slane %v2873, 4
      %v3479 = vsel %vm1772, %v3476, %v3478
      %v3480 = vrot.slane %v2875, 4
      %v3481 = vrot.slane %v2876, 4
      %v3482 = vsel %vm1772, %v3480, %v3481
      %v3483 = vrot.slane %v2877, 4
      %v3484 = vsel %vm1772, %v3481, %v3483
      %v3485 = vrot.slane %v2879, 4
      %v3486 = vrot.slane %v2880, 4
      %v3487 = vsel %vm1772, %v3485, %v3486
      %v3488 = vrot.slane %v2881, 4
      %v3489 = vsel %vm1772, %v3486, %v3488
      %v3538 = vmax.f32 %v3362, %v3410
      %v3539 = vmax.f32 %v3363, %v3412
      %v3540 = vmax.f32 %v3364, %v3414
      %v3541 = vmax.f32 %v3365, %v3415
      %v3542 = vmax.f32 %v3366, %v3417
      %v3543 = vmax.f32 %v3367, %v3419
      %v3544 = vmax.f32 %v3368, %v3420
      %v3545 = vmax.f32 %v3369, %v3422
      %v3546 = vmax.f32 %v3370, %v3424
      %v3547 = vmax.f32 %v3371, %v3425
      %v3548 = vmax.f32 %v3372, %v3427
      %v3549 = vmax.f32 %v3373, %v3429
      %v3550 = vmax.f32 %v3374, %v3430
      %v3551 = vmax.f32 %v3375, %v3432
      %v3552 = vmax.f32 %v3376, %v3434
      %v3553 = vmax.f32 %v3377, %v3435
      %v3554 = vmax.f32 %v3378, %v3437
      %v3555 = vmax.f32 %v3379, %v3439
      %v3556 = vmax.f32 %v3380, %v3440
      %v3557 = vmax.f32 %v3381, %v3442
      %v3558 = vmax.f32 %v3382, %v3444
      %v3559 = vmax.f32 %v3383, %v3445
      %v3560 = vmax.f32 %v3384, %v3447
      %v3561 = vmax.f32 %v3385, %v3449
      %v3562 = vmax.f32 %v3386, %v3450
      %v3563 = vmax.f32 %v3387, %v3452
      %v3564 = vmax.f32 %v3388, %v3454
      %v3565 = vmax.f32 %v3389, %v3455
      %v3566 = vmax.f32 %v3390, %v3457
      %v3567 = vmax.f32 %v3391, %v3459
      %v3568 = vmax.f32 %v3392, %v3460
      %v3569 = vmax.f32 %v3393, %v3462
      %v3570 = vmax.f32 %v3394, %v3464
      %v3571 = vmax.f32 %v3395, %v3465
      %v3572 = vmax.f32 %v3396, %v3467
      %v3573 = vmax.f32 %v3397, %v3469
      %v3574 = vmax.f32 %v3398, %v3470
      %v3575 = vmax.f32 %v3399, %v3472
      %v3576 = vmax.f32 %v3400, %v3474
      %v3577 = vmax.f32 %v3401, %v3475
      %v3578 = vmax.f32 %v3402, %v3477
      %v3579 = vmax.f32 %v3403, %v3479
      %v3580 = vmax.f32 %v3404, %v3480
      %v3581 = vmax.f32 %v3405, %v3482
      %v3582 = vmax.f32 %v3406, %v3484
      %v3583 = vmax.f32 %v3407, %v3485
      %v3584 = vmax.f32 %v3408, %v3487
      %v3585 = vmax.f32 %v3409, %v3489
      %v3634 = vrot.slane %v3538, 6
      %v3635 = vrot.slane %v3539, 6
      %v3636 = vsel %vm477, %v3634, %v3635
      %v3637 = vrot.slane %v3540, 6
      %v3638 = vsel %vm477, %v3635, %v3637
      %v3639 = vrot.slane %v3541, 6
      %v3640 = vrot.slane %v3542, 6
      %v3641 = vsel %vm477, %v3639, %v3640
      %v3642 = vrot.slane %v3543, 6
      %v3643 = vsel %vm477, %v3640, %v3642
      %v3644 = vrot.slane %v3544, 6
      %v3645 = vrot.slane %v3545, 6
      %v3646 = vsel %vm477, %v3644, %v3645
      %v3647 = vrot.slane %v3546, 6
      %v3648 = vsel %vm477, %v3645, %v3647
      %v3649 = vrot.slane %v3547, 6
      %v3650 = vrot.slane %v3548, 6
      %v3651 = vsel %vm477, %v3649, %v3650
      %v3652 = vrot.slane %v3549, 6
      %v3653 = vsel %vm477, %v3650, %v3652
      %v3654 = vrot.slane %v3550, 6
      %v3655 = vrot.slane %v3551, 6
      %v3656 = vsel %vm477, %v3654, %v3655
      %v3657 = vrot.slane %v3552, 6
      %v3658 = vsel %vm477, %v3655, %v3657
      %v3659 = vrot.slane %v3553, 6
      %v3660 = vrot.slane %v3554, 6
      %v3661 = vsel %vm477, %v3659, %v3660
      %v3662 = vrot.slane %v3555, 6
      %v3663 = vsel %vm477, %v3660, %v3662
      %v3664 = vrot.slane %v3556, 6
      %v3665 = vrot.slane %v3557, 6
      %v3666 = vsel %vm477, %v3664, %v3665
      %v3667 = vrot.slane %v3558, 6
      %v3668 = vsel %vm477, %v3665, %v3667
      %v3669 = vrot.slane %v3559, 6
      %v3670 = vrot.slane %v3560, 6
      %v3671 = vsel %vm477, %v3669, %v3670
      %v3672 = vrot.slane %v3561, 6
      %v3673 = vsel %vm477, %v3670, %v3672
      %v3674 = vrot.slane %v3562, 6
      %v3675 = vrot.slane %v3563, 6
      %v3676 = vsel %vm477, %v3674, %v3675
      %v3677 = vrot.slane %v3564, 6
      %v3678 = vsel %vm477, %v3675, %v3677
      %v3679 = vrot.slane %v3565, 6
      %v3680 = vrot.slane %v3566, 6
      %v3681 = vsel %vm477, %v3679, %v3680
      %v3682 = vrot.slane %v3567, 6
      %v3683 = vsel %vm477, %v3680, %v3682
      %v3684 = vrot.slane %v3568, 6
      %v3685 = vrot.slane %v3569, 6
      %v3686 = vsel %vm477, %v3684, %v3685
      %v3687 = vrot.slane %v3570, 6
      %v3688 = vsel %vm477, %v3685, %v3687
      %v3689 = vrot.slane %v3571, 6
      %v3690 = vrot.slane %v3572, 6
      %v3691 = vsel %vm477, %v3689, %v3690
      %v3692 = vrot.slane %v3573, 6
      %v3693 = vsel %vm477, %v3690, %v3692
      %v3694 = vrot.slane %v3574, 6
      %v3695 = vrot.slane %v3575, 6
      %v3696 = vsel %vm477, %v3694, %v3695
      %v3697 = vrot.slane %v3576, 6
      %v3698 = vsel %vm477, %v3695, %v3697
      %v3699 = vrot.slane %v3577, 6
      %v3700 = vrot.slane %v3578, 6
      %v3701 = vsel %vm477, %v3699, %v3700
      %v3702 = vrot.slane %v3579, 6
      %v3703 = vsel %vm477, %v3700, %v3702
      %v3704 = vrot.slane %v3580, 6
      %v3705 = vrot.slane %v3581, 6
      %v3706 = vsel %vm477, %v3704, %v3705
      %v3707 = vrot.slane %v3582, 6
      %v3708 = vsel %vm477, %v3705, %v3707
      %v3709 = vrot.slane %v3583, 6
      %v3710 = vrot.slane %v3584, 6
      %v3711 = vsel %vm477, %v3709, %v3710
      %v3712 = vrot.slane %v3585, 6
      %v3713 = vsel %vm477, %v3710, %v3712
      %v3746 = vpack.c.bf16 %v3638, %v3636
      %v3747 = vpack.c.bf16 %v3643, %v3641
      %v3748 = vpack.c.bf16 %v3648, %v3646
      %v3749 = vpack.c.bf16 %v3653, %v3651
      %v3750 = vpack.c.bf16 %v3658, %v3656
      %v3751 = vpack.c.bf16 %v3663, %v3661
      %v3752 = vpack.c.bf16 %v3668, %v3666
      %v3753 = vpack.c.bf16 %v3673, %v3671
      %v3754 = vpack.c.bf16 %v3678, %v3676
      %v3755 = vpack.c.bf16 %v3683, %v3681
      %v3756 = vpack.c.bf16 %v3688, %v3686
      %v3757 = vpack.c.bf16 %v3693, %v3691
      %v3758 = vpack.c.bf16 %v3698, %v3696
      %v3759 = vpack.c.bf16 %v3703, %v3701
      %v3760 = vpack.c.bf16 %v3708, %v3706
      %v3761 = vpack.c.bf16 %v3713, %v3711
      %s3762 = scalar_lea.vmem %s4, 2
      %v3763 = vld [vmem:[%s3762] sm:$0x1]
      %v3765 = vsel %vm280, %v3746, 0
      %v3768 = vsel %vm280, %v3747, 0
      %v3771 = vsel %vm280, %v3748, 0
      %v3774 = vsel %vm280, %v3749, 0
      %v3777 = vsel %vm280, %v3750, 0
      %v3780 = vsel %vm280, %v3751, 0
      %v3783 = vsel %vm280, %v3752, 0
      %v3786 = vsel %vm280, %v3753, 0
      %v3789 = vsel %vm280, %v3754, 0
      %v3792 = vsel %vm280, %v3755, 0
      %v3795 = vsel %vm280, %v3756, 0
      %v3798 = vsel %vm280, %v3757, 0
      %v3801 = vsel %vm280, %v3758, 0
      %v3804 = vsel %vm280, %v3759, 0
      %v3807 = vsel %vm280, %v3760, 0
      %v3810 = vsel %vm280, %v3761, 0
      %v3813 = vsel %vm2175, %v3763, 0
      %3815 = vmatprep.subr.bf16.mxu0 0
      %3816 = vmatpush1.bf16.msra.mxu0 0
      %3817 = vmatprep.subr.bf16.mxu0 0
      %3818 = vmatpush1.bf16.msra.mxu0 0
      %3819 = vmatprep.subr.bf16.mxu0 0
      %3820 = vmatpush1.bf16.msra.mxu0 0
      %3821 = vmatprep.subr.bf16.mxu0 0
      %3822 = vmatpush1.bf16.msra.mxu0 0
      %3823 = vmatprep.subr.bf16.mxu0 0
      %3824 = vmatpush1.bf16.msra.mxu0 0
      %3825 = vmatprep.subr.bf16.mxu0 0
      %3826 = vmatpush1.bf16.msra.mxu0 0
      %3827 = vmatprep.subr.bf16.mxu0 0
      %3828 = vmatpush1.bf16.msra.mxu0 0
      %3829 = vmatprep.subr.bf16.mxu0 0
      %3830 = vmatpush1.bf16.msra.mxu0 %v3813
      %3831 = vmatprep.subr.bf16.mxu0 0
      %3832 = vmatpush2.bf16.msra.mxu0 0
      %3833 = vmatprep.subr.bf16.mxu0 0
      %3834 = vmatpush2.bf16.msra.mxu0 0
      %3835 = vmatprep.subr.bf16.mxu0 0
      %3836 = vmatpush2.bf16.msra.mxu0 0
      %3837 = vmatprep.subr.bf16.mxu0 0
      %3838 = vmatpush2.bf16.msra.mxu0 0
      %3839 = vmatprep.subr.bf16.mxu0 0
      %3840 = vmatpush2.bf16.msra.mxu0 0
      %3841 = vmatprep.subr.bf16.mxu0 0
      %3842 = vmatpush2.bf16.msra.mxu0 0
      %3843 = vmatprep.subr.bf16.mxu0 0
      %3844 = vmatpush2.bf16.msra.mxu0 0
      %3845 = vmatprep.subr.bf16.mxu0 0
      %3846 = vmatpush2.bf16.msra.mxu0 0
      %3847 = vmatprep.mubr.bf16.mxu0 0
      %3848 = vmatmul.mubr.bf16.gmra.mxu0 %v3765
      %v3849 = vpop.f32.mrf.mxu0
      %v3850 = vadd.f32 0.0, %v3849
      %v3851 = vpop.f32.mrf.mxu0
      %v3852 = vpop.f32.mrf.mxu0
      %v3853 = vadd.f32 0.0, %v3852
      %v3854 = vpop.f32.mrf.mxu0
      %3855 = vmatprep.mubr.bf16.mxu0 0
      %3856 = vmatmul.mubr.bf16.gmra.mxu0 %v3768
      %v3857 = vpop.f32.mrf.mxu0
      %v3858 = vadd.f32 0.0, %v3857
      %v3859 = vpop.f32.mrf.mxu0
      %v3860 = vpop.f32.mrf.mxu0
      %v3861 = vadd.f32 0.0, %v3860
      %v3862 = vpop.f32.mrf.mxu0
      %3863 = vmatprep.mubr.bf16.mxu0 0
      %3864 = vmatmul.mubr.bf16.gmra.mxu0 %v3771
      %v3865 = vpop.f32.mrf.mxu0
      %v3866 = vadd.f32 0.0, %v3865
      %v3867 = vpop.f32.mrf.mxu0
      %v3868 = vpop.f32.mrf.mxu0
      %v3869 = vadd.f32 0.0, %v3868
      %v3870 = vpop.f32.mrf.mxu0
      %3871 = vmatprep.mubr.bf16.mxu0 0
      %3872 = vmatmul.mubr.bf16.gmra.mxu0 %v3774
      %v3873 = vpop.f32.mrf.mxu0
      %v3874 = vadd.f32 0.0, %v3873
      %v3875 = vpop.f32.mrf.mxu0
      %v3876 = vpop.f32.mrf.mxu0
      %v3877 = vadd.f32 0.0, %v3876
      %v3878 = vpop.f32.mrf.mxu0
      %3879 = vmatprep.mubr.bf16.mxu0 0
      %3880 = vmatmul.mubr.bf16.gmra.mxu0 %v3777
      %v3881 = vpop.f32.mrf.mxu0
      %v3882 = vadd.f32 0.0, %v3881
      %v3883 = vpop.f32.mrf.mxu0
      %v3884 = vpop.f32.mrf.mxu0
      %v3885 = vadd.f32 0.0, %v3884
      %v3886 = vpop.f32.mrf.mxu0
      %3887 = vmatprep.mubr.bf16.mxu0 0
      %3888 = vmatmul.mubr.bf16.gmra.mxu0 %v3780
      %v3889 = vpop.f32.mrf.mxu0
      %v3890 = vadd.f32 0.0, %v3889
      %v3891 = vpop.f32.mrf.mxu0
      %v3892 = vpop.f32.mrf.mxu0
      %v3893 = vadd.f32 0.0, %v3892
      %v3894 = vpop.f32.mrf.mxu0
      %3895 = vmatprep.mubr.bf16.mxu0 0
      %3896 = vmatmul.mubr.bf16.gmra.mxu0 %v3783
      %v3897 = vpop.f32.mrf.mxu0
      %v3898 = vadd.f32 0.0, %v3897
      %v3899 = vpop.f32.mrf.mxu0
      %v3900 = vpop.f32.mrf.mxu0
      %v3901 = vadd.f32 0.0, %v3900
      %v3902 = vpop.f32.mrf.mxu0
      %3903 = vmatprep.mubr.bf16.mxu0 0
      %3904 = vmatmul.mubr.bf16.gmra.mxu0 %v3786
      %v3905 = vpop.f32.mrf.mxu0
      %v3906 = vadd.f32 0.0, %v3905
      %v3907 = vpop.f32.mrf.mxu0
      %v3908 = vpop.f32.mrf.mxu0
      %v3909 = vadd.f32 0.0, %v3908
      %v3910 = vpop.f32.mrf.mxu0
      %3911 = vmatprep.mubr.bf16.mxu0 0
      %3912 = vmatmul.mubr.bf16.gmra.mxu0 %v3789
      %v3913 = vpop.f32.mrf.mxu0
      %v3914 = vadd.f32 0.0, %v3913
      %v3915 = vpop.f32.mrf.mxu0
      %v3916 = vpop.f32.mrf.mxu0
      %v3917 = vadd.f32 0.0, %v3916
      %v3918 = vpop.f32.mrf.mxu0
      %3919 = vmatprep.mubr.bf16.mxu0 0
      %3920 = vmatmul.mubr.bf16.gmra.mxu0 %v3792
      %v3921 = vpop.f32.mrf.mxu0
      %v3922 = vadd.f32 0.0, %v3921
      %v3923 = vpop.f32.mrf.mxu0
      %v3924 = vpop.f32.mrf.mxu0
      %v3925 = vadd.f32 0.0, %v3924
      %v3926 = vpop.f32.mrf.mxu0
      %3927 = vmatprep.mubr.bf16.mxu0 0
      %3928 = vmatmul.mubr.bf16.gmra.mxu0 %v3795
      %v3929 = vpop.f32.mrf.mxu0
      %v3930 = vadd.f32 0.0, %v3929
      %v3931 = vpop.f32.mrf.mxu0
      %v3932 = vpop.f32.mrf.mxu0
      %v3933 = vadd.f32 0.0, %v3932
      %v3934 = vpop.f32.mrf.mxu0
      %3935 = vmatprep.mubr.bf16.mxu0 0
      %3936 = vmatmul.mubr.bf16.gmra.mxu0 %v3798
      %v3937 = vpop.f32.mrf.mxu0
      %v3938 = vadd.f32 0.0, %v3937
      %v3939 = vpop.f32.mrf.mxu0
      %v3940 = vpop.f32.mrf.mxu0
      %v3941 = vadd.f32 0.0, %v3940
      %v3942 = vpop.f32.mrf.mxu0
      %3943 = vmatprep.mubr.bf16.mxu0 0
      %3944 = vmatmul.mubr.bf16.gmra.mxu0 %v3801
      %v3945 = vpop.f32.mrf.mxu0
      %v3946 = vadd.f32 0.0, %v3945
      %v3947 = vpop.f32.mrf.mxu0
      %v3948 = vpop.f32.mrf.mxu0
      %v3949 = vadd.f32 0.0, %v3948
      %v3950 = vpop.f32.mrf.mxu0
      %3951 = vmatprep.mubr.bf16.mxu0 0
      %3952 = vmatmul.mubr.bf16.gmra.mxu0 %v3804
      %v3953 = vpop.f32.mrf.mxu0
      %v3954 = vadd.f32 0.0, %v3953
      %v3955 = vpop.f32.mrf.mxu0
      %v3956 = vpop.f32.mrf.mxu0
      %v3957 = vadd.f32 0.0, %v3956
      %v3958 = vpop.f32.mrf.mxu0
      %3959 = vmatprep.mubr.bf16.mxu0 0
      %3960 = vmatmul.mubr.bf16.gmra.mxu0 %v3807
      %v3961 = vpop.f32.mrf.mxu0
      %v3962 = vadd.f32 0.0, %v3961
      %v3963 = vpop.f32.mrf.mxu0
      %v3964 = vpop.f32.mrf.mxu0
      %v3965 = vadd.f32 0.0, %v3964
      %v3966 = vpop.f32.mrf.mxu0
      %3967 = vmatprep.mubr.bf16.mxu0 0
      %3968 = vmatmul.mubr.bf16.gmra.mxu0 %v3810
      %v3969 = vpop.f32.mrf.mxu0
      %v3970 = vadd.f32 0.0, %v3969
      %v3971 = vpop.f32.mrf.mxu0
      %v3972 = vpop.f32.mrf.mxu0
      %v3973 = vadd.f32 0.0, %v3972
      %v3974 = vpop.f32.mrf.mxu0
      %3975 = vdwg.mxu0
      %v3976 = vadd.f32 %v2426, %v3850
      %v3977 = vadd.f32 %v2429, %v3853
      %v3978 = vadd.f32 %v2434, %v3858
      %v3979 = vadd.f32 %v2437, %v3861
      %v3980 = vadd.f32 %v2442, %v3866
      %v3981 = vadd.f32 %v2445, %v3869
      %v3982 = vadd.f32 %v2450, %v3874
      %v3983 = vadd.f32 %v2453, %v3877
      %v3984 = vadd.f32 %v2458, %v3882
      %v3985 = vadd.f32 %v2461, %v3885
      %v3986 = vadd.f32 %v2466, %v3890
      %v3987 = vadd.f32 %v2469, %v3893
      %v3988 = vadd.f32 %v2474, %v3898
      %v3989 = vadd.f32 %v2477, %v3901
      %v3990 = vadd.f32 %v2482, %v3906
      %v3991 = vadd.f32 %v2485, %v3909
      %v3992 = vadd.f32 %v2490, %v3914
      %v3993 = vadd.f32 %v2493, %v3917
      %v3994 = vadd.f32 %v2498, %v3922
      %v3995 = vadd.f32 %v2501, %v3925
      %v3996 = vadd.f32 %v2506, %v3930
      %v3997 = vadd.f32 %v2509, %v3933
      %v3998 = vadd.f32 %v2514, %v3938
      %v3999 = vadd.f32 %v2517, %v3941
      %v4000 = vadd.f32 %v2522, %v3946
      %v4001 = vadd.f32 %v2525, %v3949
      %v4002 = vadd.f32 %v2530, %v3954
      %v4003 = vadd.f32 %v2533, %v3957
      %v4004 = vadd.f32 %v2538, %v3962
      %v4005 = vadd.f32 %v2541, %v3965
      %v4006 = vadd.f32 %v2546, %v3970
      %v4007 = vadd.f32 %v2549, %v3973
      %4008 = vst.msk [vmem:[%s346 + $0x2] sm:$0xc0] %vm2552, %v3538
      %4009 = vst.msk [vmem:[%s346 + $0xa] sm:$0xff] %vm280, %v3539
      %4010 = vst.msk [vmem:[%s346 + $0x12] sm:$0x3f] %vm2555, %v3540
      %4011 = vst.msk [vmem:[%s346 + $0x22] sm:$0xc0] %vm2552, %v3541
      %4012 = vst.msk [vmem:[%s346 + $0x2a] sm:$0xff] %vm280, %v3542
      %4013 = vst.msk [vmem:[%s346 + $0x32] sm:$0x3f] %vm2555, %v3543
      %4014 = vst.msk [vmem:[%s346 + $0x42] sm:$0xc0] %vm2552, %v3544
      %4015 = vst.msk [vmem:[%s346 + $0x4a] sm:$0xff] %vm280, %v3545
      %4016 = vst.msk [vmem:[%s346 + $0x52] sm:$0x3f] %vm2555, %v3546
      %4017 = vst.msk [vmem:[%s346 + $0x62] sm:$0xc0] %vm2552, %v3547
      %4018 = vst.msk [vmem:[%s346 + $0x6a] sm:$0xff] %vm280, %v3548
      %4019 = vst.msk [vmem:[%s346 + $0x72] sm:$0x3f] %vm2555, %v3549
      %4020 = vst.msk [vmem:[%s346 + $0x82] sm:$0xc0] %vm2552, %v3550
      %4021 = vst.msk [vmem:[%s346 + $0x8a] sm:$0xff] %vm280, %v3551
      %4022 = vst.msk [vmem:[%s346 + $0x92] sm:$0x3f] %vm2555, %v3552
      %4023 = vst.msk [vmem:[%s346 + $0xa2] sm:$0xc0] %vm2552, %v3553
      %4024 = vst.msk [vmem:[%s346 + $0xaa] sm:$0xff] %vm280, %v3554
      %4025 = vst.msk [vmem:[%s346 + $0xb2] sm:$0x3f] %vm2555, %v3555
      %4026 = vst.msk [vmem:[%s346 + $0xc2] sm:$0xc0] %vm2552, %v3556
      %4027 = vst.msk [vmem:[%s346 + $0xca] sm:$0xff] %vm280, %v3557
      %4028 = vst.msk [vmem:[%s346 + $0xd2] sm:$0x3f] %vm2555, %v3558
      %4029 = vst.msk [vmem:[%s346 + $0xe2] sm:$0xc0] %vm2552, %v3559
      %4030 = vst.msk [vmem:[%s346 + $0xea] sm:$0xff] %vm280, %v3560
      %4031 = vst.msk [vmem:[%s346 + $0xf2] sm:$0x3f] %vm2555, %v3561
      %4032 = vst.msk [vmem:[%s346 + $0x102] sm:$0xc0] %vm2552, %v3562
      %4033 = vst.msk [vmem:[%s346 + $0x10a] sm:$0xff] %vm280, %v3563
      %4034 = vst.msk [vmem:[%s346 + $0x112] sm:$0x3f] %vm2555, %v3564
      %4035 = vst.msk [vmem:[%s346 + $0x122] sm:$0xc0] %vm2552, %v3565
      %4036 = vst.msk [vmem:[%s346 + $0x12a] sm:$0xff] %vm280, %v3566
      %4037 = vst.msk [vmem:[%s346 + $0x132] sm:$0x3f] %vm2555, %v3567
      %4038 = vst.msk [vmem:[%s346 + $0x142] sm:$0xc0] %vm2552, %v3568
      %4039 = vst.msk [vmem:[%s346 + $0x14a] sm:$0xff] %vm280, %v3569
      %4040 = vst.msk [vmem:[%s346 + $0x152] sm:$0x3f] %vm2555, %v3570
      %4041 = vst.msk [vmem:[%s346 + $0x162] sm:$0xc0] %vm2552, %v3571
      %4042 = vst.msk [vmem:[%s346 + $0x16a] sm:$0xff] %vm280, %v3572
      %4043 = vst.msk [vmem:[%s346 + $0x172] sm:$0x3f] %vm2555, %v3573
      %4044 = vst.msk [vmem:[%s346 + $0x182] sm:$0xc0] %vm2552, %v3574
      %4045 = vst.msk [vmem:[%s346 + $0x18a] sm:$0xff] %vm280, %v3575
      %4046 = vst.msk [vmem:[%s346 + $0x192] sm:$0x3f] %vm2555, %v3576
      %4047 = vst.msk [vmem:[%s346 + $0x1a2] sm:$0xc0] %vm2552, %v3577
      %4048 = vst.msk [vmem:[%s346 + $0x1aa] sm:$0xff] %vm280, %v3578
      %4049 = vst.msk [vmem:[%s346 + $0x1b2] sm:$0x3f] %vm2555, %v3579
      %4050 = vst.msk [vmem:[%s346 + $0x1c2] sm:$0xc0] %vm2552, %v3580
      %4051 = vst.msk [vmem:[%s346 + $0x1ca] sm:$0xff] %vm280, %v3581
      %4052 = vst.msk [vmem:[%s346 + $0x1d2] sm:$0x3f] %vm2555, %v3582
      %4053 = vst.msk [vmem:[%s346 + $0x1e2] sm:$0xc0] %vm2552, %v3583
      %4054 = vst.msk [vmem:[%s346 + $0x1ea] sm:$0xff] %vm280, %v3584
      %4055 = vst.msk [vmem:[%s346 + $0x1f2] sm:$0x3f] %vm2555, %v3585
      %v4056 = vld [vmem:[%s961] sm:$0xff]
      %v4057 = vld [vmem:[%s961 + $0x8] sm:$0xff]
      %v4058 = vld [vmem:[%s961 + $0x10] sm:$0xff]
      %v4059 = vld [vmem:[%s961 + $0x18] sm:$0xff]
      %v4060 = vld [vmem:[%s961 + $0x20] sm:$0xff]
      %v4061 = vld [vmem:[%s961 + $0x28] sm:$0xff]
      %v4062 = vld [vmem:[%s961 + $0x30] sm:$0xff]
      %v4063 = vld [vmem:[%s961 + $0x38] sm:$0xff]
      %v4064 = vld [vmem:[%s961 + $0x40] sm:$0xff]
      %v4065 = vld [vmem:[%s961 + $0x48] sm:$0xff]
      %v4066 = vld [vmem:[%s961 + $0x50] sm:$0xff]
      %v4067 = vld [vmem:[%s961 + $0x58] sm:$0xff]
      %v4068 = vld [vmem:[%s961 + $0x60] sm:$0xff]
      %v4069 = vld [vmem:[%s961 + $0x68] sm:$0xff]
      %v4070 = vld [vmem:[%s961 + $0x70] sm:$0xff]
      %v4071 = vld [vmem:[%s961 + $0x78] sm:$0xff]
      %v4072 = vld [vmem:[%s961 + $0x80] sm:$0xff]
      %v4073 = vld [vmem:[%s961 + $0x88] sm:$0xff]
      %v4074 = vld [vmem:[%s961 + $0x90] sm:$0xff]
      %v4075 = vld [vmem:[%s961 + $0x98] sm:$0xff]
      %v4076 = vld [vmem:[%s961 + $0xa0] sm:$0xff]
      %v4077 = vld [vmem:[%s961 + $0xa8] sm:$0xff]
      %v4078 = vld [vmem:[%s961 + $0xb0] sm:$0xff]
      %v4079 = vld [vmem:[%s961 + $0xb8] sm:$0xff]
      %v4080 = vld [vmem:[%s961 + $0xc0] sm:$0xff]
      %v4081 = vld [vmem:[%s961 + $0xc8] sm:$0xff]
      %v4082 = vld [vmem:[%s961 + $0xd0] sm:$0xff]
      %v4083 = vld [vmem:[%s961 + $0xd8] sm:$0xff]
      %v4084 = vld [vmem:[%s961 + $0xe0] sm:$0xff]
      %v4085 = vld [vmem:[%s961 + $0xe8] sm:$0xff]
      %v4086 = vld [vmem:[%s961 + $0xf0] sm:$0xff]
      %v4087 = vld [vmem:[%s961 + $0xf8] sm:$0xff]
      %v4088 = vld [vmem:[%s961 + $0x100] sm:$0xff]
      %v4089 = vld [vmem:[%s961 + $0x108] sm:$0xff]
      %v4090 = vld [vmem:[%s961 + $0x110] sm:$0xff]
      %v4091 = vld [vmem:[%s961 + $0x118] sm:$0xff]
      %v4092 = vld [vmem:[%s961 + $0x120] sm:$0xff]
      %v4093 = vld [vmem:[%s961 + $0x128] sm:$0xff]
      %v4094 = vld [vmem:[%s961 + $0x130] sm:$0xff]
      %v4095 = vld [vmem:[%s961 + $0x138] sm:$0xff]
      %v4096 = vld [vmem:[%s961 + $0x140] sm:$0xff]
      %v4097 = vld [vmem:[%s961 + $0x148] sm:$0xff]
      %v4098 = vld [vmem:[%s961 + $0x150] sm:$0xff]
      %v4099 = vld [vmem:[%s961 + $0x158] sm:$0xff]
      %v4100 = vld [vmem:[%s961 + $0x160] sm:$0xff]
      %v4101 = vld [vmem:[%s961 + $0x168] sm:$0xff]
      %v4102 = vld [vmem:[%s961 + $0x170] sm:$0xff]
      %v4103 = vld [vmem:[%s961 + $0x178] sm:$0xff]
      %v4104 = vld [vmem:[%s961 + $0x180] sm:$0xff]
      %v4105 = vld [vmem:[%s961 + $0x188] sm:$0xff]
      %v4106 = vld [vmem:[%s961 + $0x190] sm:$0xff]
      %v4107 = vld [vmem:[%s961 + $0x198] sm:$0xff]
      %v4108 = vld [vmem:[%s961 + $0x1a0] sm:$0xff]
      %v4109 = vld [vmem:[%s961 + $0x1a8] sm:$0xff]
      %v4110 = vld [vmem:[%s961 + $0x1b0] sm:$0xff]
      %v4111 = vld [vmem:[%s961 + $0x1b8] sm:$0xff]
      %v4112 = vld [vmem:[%s961 + $0x1c0] sm:$0xff]
      %v4113 = vld [vmem:[%s961 + $0x1c8] sm:$0xff]
      %v4114 = vld [vmem:[%s961 + $0x1d0] sm:$0xff]
      %v4115 = vld [vmem:[%s961 + $0x1d8] sm:$0xff]
      %v4116 = vld [vmem:[%s961 + $0x1e0] sm:$0xff]
      %v4117 = vld [vmem:[%s961 + $0x1e8] sm:$0xff]
      %v4118 = vld [vmem:[%s961 + $0x1f0] sm:$0xff]
      %v4119 = vld [vmem:[%s961 + $0x1f8] sm:$0xff]
      %v4120 = vld [vmem:[%s961 + $0x200] sm:$0xff]
      %v4121 = vld [vmem:[%s961 + $0x208] sm:$0xff]
      %v4122 = vld [vmem:[%s961 + $0x210] sm:$0xff]
      %v4123 = vld [vmem:[%s961 + $0x218] sm:$0xff]
      %v4124 = vld [vmem:[%s961 + $0x220] sm:$0xff]
      %v4125 = vld [vmem:[%s961 + $0x228] sm:$0xff]
      %v4126 = vld [vmem:[%s961 + $0x230] sm:$0xff]
      %v4127 = vld [vmem:[%s961 + $0x238] sm:$0xff]
      %v4128 = vld [vmem:[%s961 + $0x240] sm:$0xff]
      %v4129 = vld [vmem:[%s961 + $0x248] sm:$0xff]
      %v4130 = vld [vmem:[%s961 + $0x250] sm:$0xff]
      %v4131 = vld [vmem:[%s961 + $0x258] sm:$0xff]
      %v4132 = vld [vmem:[%s961 + $0x260] sm:$0xff]
      %v4133 = vld [vmem:[%s961 + $0x268] sm:$0xff]
      %v4134 = vld [vmem:[%s961 + $0x270] sm:$0xff]
      %v4135 = vld [vmem:[%s961 + $0x278] sm:$0xff]
      %v4136 = vmax.f32 %v4056, %v4060
      %v4137 = vmax.f32 %v4057, %v4061
      %v4138 = vmax.f32 %v4058, %v4062
      %v4139 = vmax.f32 %v4059, %v4063
      %v4140 = vmax.f32 %v4060, %v4064
      %v4141 = vmax.f32 %v4061, %v4065
      %v4142 = vmax.f32 %v4062, %v4066
      %v4143 = vmax.f32 %v4063, %v4067
      %v4144 = vmax.f32 %v4064, %v4068
      %v4145 = vmax.f32 %v4065, %v4069
      %v4146 = vmax.f32 %v4066, %v4070
      %v4147 = vmax.f32 %v4067, %v4071
      %v4148 = vmax.f32 %v4068, %v4072
      %v4149 = vmax.f32 %v4069, %v4073
      %v4150 = vmax.f32 %v4070, %v4074
      %v4151 = vmax.f32 %v4071, %v4075
      %v4152 = vmax.f32 %v4072, %v4076
      %v4153 = vmax.f32 %v4073, %v4077
      %v4154 = vmax.f32 %v4074, %v4078
      %v4155 = vmax.f32 %v4075, %v4079
      %v4156 = vmax.f32 %v4076, %v4080
      %v4157 = vmax.f32 %v4077, %v4081
      %v4158 = vmax.f32 %v4078, %v4082
      %v4159 = vmax.f32 %v4079, %v4083
      %v4160 = vmax.f32 %v4080, %v4084
      %v4161 = vmax.f32 %v4081, %v4085
      %v4162 = vmax.f32 %v4082, %v4086
      %v4163 = vmax.f32 %v4083, %v4087
      %v4164 = vmax.f32 %v4084, %v4088
      %v4165 = vmax.f32 %v4085, %v4089
      %v4166 = vmax.f32 %v4086, %v4090
      %v4167 = vmax.f32 %v4087, %v4091
      %v4168 = vmax.f32 %v4088, %v4092
      %v4169 = vmax.f32 %v4089, %v4093
      %v4170 = vmax.f32 %v4090, %v4094
      %v4171 = vmax.f32 %v4091, %v4095
      %v4172 = vmax.f32 %v4092, %v4096
      %v4173 = vmax.f32 %v4093, %v4097
      %v4174 = vmax.f32 %v4094, %v4098
      %v4175 = vmax.f32 %v4095, %v4099
      %v4176 = vmax.f32 %v4096, %v4100
      %v4177 = vmax.f32 %v4097, %v4101
      %v4178 = vmax.f32 %v4098, %v4102
      %v4179 = vmax.f32 %v4099, %v4103
      %v4180 = vmax.f32 %v4100, %v4104
      %v4181 = vmax.f32 %v4101, %v4105
      %v4182 = vmax.f32 %v4102, %v4106
      %v4183 = vmax.f32 %v4103, %v4107
      %v4184 = vmax.f32 %v4104, %v4108
      %v4185 = vmax.f32 %v4105, %v4109
      %v4186 = vmax.f32 %v4106, %v4110
      %v4187 = vmax.f32 %v4107, %v4111
      %v4188 = vmax.f32 %v4108, %v4112
      %v4189 = vmax.f32 %v4109, %v4113
      %v4190 = vmax.f32 %v4110, %v4114
      %v4191 = vmax.f32 %v4111, %v4115
      %v4192 = vmax.f32 %v4112, %v4116
      %v4193 = vmax.f32 %v4113, %v4117
      %v4194 = vmax.f32 %v4114, %v4118
      %v4195 = vmax.f32 %v4115, %v4119
      %v4196 = vmax.f32 %v4116, %v4120
      %v4197 = vmax.f32 %v4117, %v4121
      %v4198 = vmax.f32 %v4118, %v4122
      %v4199 = vmax.f32 %v4119, %v4123
      %v4200 = vmax.f32 %v4120, %v4124
      %v4201 = vmax.f32 %v4121, %v4125
      %v4202 = vmax.f32 %v4122, %v4126
      %v4203 = vmax.f32 %v4123, %v4127
      %v4204 = vmax.f32 %v4124, %v4128
      %v4205 = vmax.f32 %v4125, %v4129
      %v4206 = vmax.f32 %v4126, %v4130
      %v4207 = vmax.f32 %v4127, %v4131
      %v4208 = vmax.f32 %v4136, %v4144
      %v4209 = vmax.f32 %v4137, %v4145
      %v4210 = vmax.f32 %v4138, %v4146
      %v4211 = vmax.f32 %v4139, %v4147
      %v4212 = vmax.f32 %v4140, %v4148
      %v4213 = vmax.f32 %v4141, %v4149
      %v4214 = vmax.f32 %v4142, %v4150
      %v4215 = vmax.f32 %v4143, %v4151
      %v4216 = vmax.f32 %v4144, %v4152
      %v4217 = vmax.f32 %v4145, %v4153
      %v4218 = vmax.f32 %v4146, %v4154
      %v4219 = vmax.f32 %v4147, %v4155
      %v4220 = vmax.f32 %v4148, %v4156
      %v4221 = vmax.f32 %v4149, %v4157
      %v4222 = vmax.f32 %v4150, %v4158
      %v4223 = vmax.f32 %v4151, %v4159
      %v4224 = vmax.f32 %v4152, %v4160
      %v4225 = vmax.f32 %v4153, %v4161
      %v4226 = vmax.f32 %v4154, %v4162
      %v4227 = vmax.f32 %v4155, %v4163
      %v4228 = vmax.f32 %v4156, %v4164
      %v4229 = vmax.f32 %v4157, %v4165
      %v4230 = vmax.f32 %v4158, %v4166
      %v4231 = vmax.f32 %v4159, %v4167
      %v4232 = vmax.f32 %v4160, %v4168
      %v4233 = vmax.f32 %v4161, %v4169
      %v4234 = vmax.f32 %v4162, %v4170
      %v4235 = vmax.f32 %v4163, %v4171
      %v4236 = vmax.f32 %v4164, %v4172
      %v4237 = vmax.f32 %v4165, %v4173
      %v4238 = vmax.f32 %v4166, %v4174
      %v4239 = vmax.f32 %v4167, %v4175
      %v4240 = vmax.f32 %v4168, %v4176
      %v4241 = vmax.f32 %v4169, %v4177
      %v4242 = vmax.f32 %v4170, %v4178
      %v4243 = vmax.f32 %v4171, %v4179
      %v4244 = vmax.f32 %v4172, %v4180
      %v4245 = vmax.f32 %v4173, %v4181
      %v4246 = vmax.f32 %v4174, %v4182
      %v4247 = vmax.f32 %v4175, %v4183
      %v4248 = vmax.f32 %v4176, %v4184
      %v4249 = vmax.f32 %v4177, %v4185
      %v4250 = vmax.f32 %v4178, %v4186
      %v4251 = vmax.f32 %v4179, %v4187
      %v4252 = vmax.f32 %v4180, %v4188
      %v4253 = vmax.f32 %v4181, %v4189
      %v4254 = vmax.f32 %v4182, %v4190
      %v4255 = vmax.f32 %v4183, %v4191
      %v4256 = vmax.f32 %v4184, %v4192
      %v4257 = vmax.f32 %v4185, %v4193
      %v4258 = vmax.f32 %v4186, %v4194
      %v4259 = vmax.f32 %v4187, %v4195
      %v4260 = vmax.f32 %v4188, %v4196
      %v4261 = vmax.f32 %v4189, %v4197
      %v4262 = vmax.f32 %v4190, %v4198
      %v4263 = vmax.f32 %v4191, %v4199
      %v4264 = vmax.f32 %v4192, %v4200
      %v4265 = vmax.f32 %v4193, %v4201
      %v4266 = vmax.f32 %v4194, %v4202
      %v4267 = vmax.f32 %v4195, %v4203
      %v4268 = vmax.f32 %v4196, %v4204
      %v4269 = vmax.f32 %v4197, %v4205
      %v4270 = vmax.f32 %v4198, %v4206
      %v4271 = vmax.f32 %v4199, %v4207
      %v4272 = vmax.f32 %v4208, %v4072
      %v4273 = vmax.f32 %v4209, %v4073
      %v4274 = vmax.f32 %v4210, %v4074
      %v4275 = vmax.f32 %v4211, %v4075
      %v4276 = vmax.f32 %v4212, %v4076
      %v4277 = vmax.f32 %v4213, %v4077
      %v4278 = vmax.f32 %v4214, %v4078
      %v4279 = vmax.f32 %v4215, %v4079
      %v4280 = vmax.f32 %v4216, %v4080
      %v4281 = vmax.f32 %v4217, %v4081
      %v4282 = vmax.f32 %v4218, %v4082
      %v4283 = vmax.f32 %v4219, %v4083
      %v4284 = vmax.f32 %v4220, %v4084
      %v4285 = vmax.f32 %v4221, %v4085
      %v4286 = vmax.f32 %v4222, %v4086
      %v4287 = vmax.f32 %v4223, %v4087
      %v4288 = vmax.f32 %v4224, %v4088
      %v4289 = vmax.f32 %v4225, %v4089
      %v4290 = vmax.f32 %v4226, %v4090
      %v4291 = vmax.f32 %v4227, %v4091
      %v4292 = vmax.f32 %v4228, %v4092
      %v4293 = vmax.f32 %v4229, %v4093
      %v4294 = vmax.f32 %v4230, %v4094
      %v4295 = vmax.f32 %v4231, %v4095
      %v4296 = vmax.f32 %v4232, %v4096
      %v4297 = vmax.f32 %v4233, %v4097
      %v4298 = vmax.f32 %v4234, %v4098
      %v4299 = vmax.f32 %v4235, %v4099
      %v4300 = vmax.f32 %v4236, %v4100
      %v4301 = vmax.f32 %v4237, %v4101
      %v4302 = vmax.f32 %v4238, %v4102
      %v4303 = vmax.f32 %v4239, %v4103
      %v4304 = vmax.f32 %v4240, %v4104
      %v4305 = vmax.f32 %v4241, %v4105
      %v4306 = vmax.f32 %v4242, %v4106
      %v4307 = vmax.f32 %v4243, %v4107
      %v4308 = vmax.f32 %v4244, %v4108
      %v4309 = vmax.f32 %v4245, %v4109
      %v4310 = vmax.f32 %v4246, %v4110
      %v4311 = vmax.f32 %v4247, %v4111
      %v4312 = vmax.f32 %v4248, %v4112
      %v4313 = vmax.f32 %v4249, %v4113
      %v4314 = vmax.f32 %v4250, %v4114
      %v4315 = vmax.f32 %v4251, %v4115
      %v4316 = vmax.f32 %v4252, %v4116
      %v4317 = vmax.f32 %v4253, %v4117
      %v4318 = vmax.f32 %v4254, %v4118
      %v4319 = vmax.f32 %v4255, %v4119
      %v4320 = vmax.f32 %v4256, %v4120
      %v4321 = vmax.f32 %v4257, %v4121
      %v4322 = vmax.f32 %v4258, %v4122
      %v4323 = vmax.f32 %v4259, %v4123
      %v4324 = vmax.f32 %v4260, %v4124
      %v4325 = vmax.f32 %v4261, %v4125
      %v4326 = vmax.f32 %v4262, %v4126
      %v4327 = vmax.f32 %v4263, %v4127
      %v4328 = vmax.f32 %v4264, %v4128
      %v4329 = vmax.f32 %v4265, %v4129
      %v4330 = vmax.f32 %v4266, %v4130
      %v4331 = vmax.f32 %v4267, %v4131
      %v4332 = vmax.f32 %v4268, %v4132
      %v4333 = vmax.f32 %v4269, %v4133
      %v4334 = vmax.f32 %v4270, %v4134
      %v4335 = vmax.f32 %v4271, %v4135
      %v4400 = vrot.slane %v4272, 1
      %v4401 = vrot.slane %v4273, 1
      %v4402 = vsel %vm1306, %v4400, %v4401
      %v4403 = vrot.slane %v4274, 1
      %v4404 = vsel %vm1306, %v4401, %v4403
      %v4405 = vrot.slane %v4275, 1
      %v4406 = vsel %vm1306, %v4403, %v4405
      %v4407 = vrot.slane %v4276, 1
      %v4408 = vrot.slane %v4277, 1
      %v4409 = vsel %vm1306, %v4407, %v4408
      %v4410 = vrot.slane %v4278, 1
      %v4411 = vsel %vm1306, %v4408, %v4410
      %v4412 = vrot.slane %v4279, 1
      %v4413 = vsel %vm1306, %v4410, %v4412
      %v4414 = vrot.slane %v4280, 1
      %v4415 = vrot.slane %v4281, 1
      %v4416 = vsel %vm1306, %v4414, %v4415
      %v4417 = vrot.slane %v4282, 1
      %v4418 = vsel %vm1306, %v4415, %v4417
      %v4419 = vrot.slane %v4283, 1
      %v4420 = vsel %vm1306, %v4417, %v4419
      %v4421 = vrot.slane %v4284, 1
      %v4422 = vrot.slane %v4285, 1
      %v4423 = vsel %vm1306, %v4421, %v4422
      %v4424 = vrot.slane %v4286, 1
      %v4425 = vsel %vm1306, %v4422, %v4424
      %v4426 = vrot.slane %v4287, 1
      %v4427 = vsel %vm1306, %v4424, %v4426
      %v4428 = vrot.slane %v4288, 1
      %v4429 = vrot.slane %v4289, 1
      %v4430 = vsel %vm1306, %v4428, %v4429
      %v4431 = vrot.slane %v4290, 1
      %v4432 = vsel %vm1306, %v4429, %v4431
      %v4433 = vrot.slane %v4291, 1
      %v4434 = vsel %vm1306, %v4431, %v4433
      %v4435 = vrot.slane %v4292, 1
      %v4436 = vrot.slane %v4293, 1
      %v4437 = vsel %vm1306, %v4435, %v4436
      %v4438 = vrot.slane %v4294, 1
      %v4439 = vsel %vm1306, %v4436, %v4438
      %v4440 = vrot.slane %v4295, 1
      %v4441 = vsel %vm1306, %v4438, %v4440
      %v4442 = vrot.slane %v4296, 1
      %v4443 = vrot.slane %v4297, 1
      %v4444 = vsel %vm1306, %v4442, %v4443
      %v4445 = vrot.slane %v4298, 1
      %v4446 = vsel %vm1306, %v4443, %v4445
      %v4447 = vrot.slane %v4299, 1
      %v4448 = vsel %vm1306, %v4445, %v4447
      %v4449 = vrot.slane %v4300, 1
      %v4450 = vrot.slane %v4301, 1
      %v4451 = vsel %vm1306, %v4449, %v4450
      %v4452 = vrot.slane %v4302, 1
      %v4453 = vsel %vm1306, %v4450, %v4452
      %v4454 = vrot.slane %v4303, 1
      %v4455 = vsel %vm1306, %v4452, %v4454
      %v4456 = vrot.slane %v4304, 1
      %v4457 = vrot.slane %v4305, 1
      %v4458 = vsel %vm1306, %v4456, %v4457
      %v4459 = vrot.slane %v4306, 1
      %v4460 = vsel %vm1306, %v4457, %v4459
      %v4461 = vrot.slane %v4307, 1
      %v4462 = vsel %vm1306, %v4459, %v4461
      %v4463 = vrot.slane %v4308, 1
      %v4464 = vrot.slane %v4309, 1
      %v4465 = vsel %vm1306, %v4463, %v4464
      %v4466 = vrot.slane %v4310, 1
      %v4467 = vsel %vm1306, %v4464, %v4466
      %v4468 = vrot.slane %v4311, 1
      %v4469 = vsel %vm1306, %v4466, %v4468
      %v4470 = vrot.slane %v4312, 1
      %v4471 = vrot.slane %v4313, 1
      %v4472 = vsel %vm1306, %v4470, %v4471
      %v4473 = vrot.slane %v4314, 1
      %v4474 = vsel %vm1306, %v4471, %v4473
      %v4475 = vrot.slane %v4315, 1
      %v4476 = vsel %vm1306, %v4473, %v4475
      %v4477 = vrot.slane %v4316, 1
      %v4478 = vrot.slane %v4317, 1
      %v4479 = vsel %vm1306, %v4477, %v4478
      %v4480 = vrot.slane %v4318, 1
      %v4481 = vsel %vm1306, %v4478, %v4480
      %v4482 = vrot.slane %v4319, 1
      %v4483 = vsel %vm1306, %v4480, %v4482
      %v4484 = vrot.slane %v4320, 1
      %v4485 = vrot.slane %v4321, 1
      %v4486 = vsel %vm1306, %v4484, %v4485
      %v4487 = vrot.slane %v4322, 1
      %v4488 = vsel %vm1306, %v4485, %v4487
      %v4489 = vrot.slane %v4323, 1
      %v4490 = vsel %vm1306, %v4487, %v4489
      %v4491 = vrot.slane %v4324, 1
      %v4492 = vrot.slane %v4325, 1
      %v4493 = vsel %vm1306, %v4491, %v4492
      %v4494 = vrot.slane %v4326, 1
      %v4495 = vsel %vm1306, %v4492, %v4494
      %v4496 = vrot.slane %v4327, 1
      %v4497 = vsel %vm1306, %v4494, %v4496
      %v4498 = vrot.slane %v4328, 1
      %v4499 = vrot.slane %v4329, 1
      %v4500 = vsel %vm1306, %v4498, %v4499
      %v4501 = vrot.slane %v4330, 1
      %v4502 = vsel %vm1306, %v4499, %v4501
      %v4503 = vrot.slane %v4331, 1
      %v4504 = vsel %vm1306, %v4501, %v4503
      %v4505 = vrot.slane %v4332, 1
      %v4506 = vrot.slane %v4333, 1
      %v4507 = vsel %vm1306, %v4505, %v4506
      %v4508 = vrot.slane %v4334, 1
      %v4509 = vsel %vm1306, %v4506, %v4508
      %v4510 = vrot.slane %v4335, 1
      %v4511 = vsel %vm1306, %v4508, %v4510
      %v4576 = vmax.f32 %v4272, %v4402
      %v4577 = vmax.f32 %v4273, %v4404
      %v4578 = vmax.f32 %v4274, %v4406
      %v4579 = vmax.f32 %v4275, %v4405
      %v4580 = vmax.f32 %v4276, %v4409
      %v4581 = vmax.f32 %v4277, %v4411
      %v4582 = vmax.f32 %v4278, %v4413
      %v4583 = vmax.f32 %v4279, %v4412
      %v4584 = vmax.f32 %v4280, %v4416
      %v4585 = vmax.f32 %v4281, %v4418
      %v4586 = vmax.f32 %v4282, %v4420
      %v4587 = vmax.f32 %v4283, %v4419
      %v4588 = vmax.f32 %v4284, %v4423
      %v4589 = vmax.f32 %v4285, %v4425
      %v4590 = vmax.f32 %v4286, %v4427
      %v4591 = vmax.f32 %v4287, %v4426
      %v4592 = vmax.f32 %v4288, %v4430
      %v4593 = vmax.f32 %v4289, %v4432
      %v4594 = vmax.f32 %v4290, %v4434
      %v4595 = vmax.f32 %v4291, %v4433
      %v4596 = vmax.f32 %v4292, %v4437
      %v4597 = vmax.f32 %v4293, %v4439
      %v4598 = vmax.f32 %v4294, %v4441
      %v4599 = vmax.f32 %v4295, %v4440
      %v4600 = vmax.f32 %v4296, %v4444
      %v4601 = vmax.f32 %v4297, %v4446
      %v4602 = vmax.f32 %v4298, %v4448
      %v4603 = vmax.f32 %v4299, %v4447
      %v4604 = vmax.f32 %v4300, %v4451
      %v4605 = vmax.f32 %v4301, %v4453
      %v4606 = vmax.f32 %v4302, %v4455
      %v4607 = vmax.f32 %v4303, %v4454
      %v4608 = vmax.f32 %v4304, %v4458
      %v4609 = vmax.f32 %v4305, %v4460
      %v4610 = vmax.f32 %v4306, %v4462
      %v4611 = vmax.f32 %v4307, %v4461
      %v4612 = vmax.f32 %v4308, %v4465
      %v4613 = vmax.f32 %v4309, %v4467
      %v4614 = vmax.f32 %v4310, %v4469
      %v4615 = vmax.f32 %v4311, %v4468
      %v4616 = vmax.f32 %v4312, %v4472
      %v4617 = vmax.f32 %v4313, %v4474
      %v4618 = vmax.f32 %v4314, %v4476
      %v4619 = vmax.f32 %v4315, %v4475
      %v4620 = vmax.f32 %v4316, %v4479
      %v4621 = vmax.f32 %v4317, %v4481
      %v4622 = vmax.f32 %v4318, %v4483
      %v4623 = vmax.f32 %v4319, %v4482
      %v4624 = vmax.f32 %v4320, %v4486
      %v4625 = vmax.f32 %v4321, %v4488
      %v4626 = vmax.f32 %v4322, %v4490
      %v4627 = vmax.f32 %v4323, %v4489
      %v4628 = vmax.f32 %v4324, %v4493
      %v4629 = vmax.f32 %v4325, %v4495
      %v4630 = vmax.f32 %v4326, %v4497
      %v4631 = vmax.f32 %v4327, %v4496
      %v4632 = vmax.f32 %v4328, %v4500
      %v4633 = vmax.f32 %v4329, %v4502
      %v4634 = vmax.f32 %v4330, %v4504
      %v4635 = vmax.f32 %v4331, %v4503
      %v4636 = vmax.f32 %v4332, %v4507
      %v4637 = vmax.f32 %v4333, %v4509
      %v4638 = vmax.f32 %v4334, %v4511
      %v4639 = vmax.f32 %v4335, %v4510
      %v4688 = vrot.slane %v4577, 2
      %v4689 = vrot.slane %v4578, 2
      %v4690 = vsel %vm1595, %v4688, %v4689
      %v4691 = vrot.slane %v4579, 2
      %v4692 = vsel %vm1595, %v4689, %v4691
      %v4693 = vrot.slane %v4581, 2
      %v4694 = vrot.slane %v4582, 2
      %v4695 = vsel %vm1595, %v4693, %v4694
      %v4696 = vrot.slane %v4583, 2
      %v4697 = vsel %vm1595, %v4694, %v4696
      %v4698 = vrot.slane %v4585, 2
      %v4699 = vrot.slane %v4586, 2
      %v4700 = vsel %vm1595, %v4698, %v4699
      %v4701 = vrot.slane %v4587, 2
      %v4702 = vsel %vm1595, %v4699, %v4701
      %v4703 = vrot.slane %v4589, 2
      %v4704 = vrot.slane %v4590, 2
      %v4705 = vsel %vm1595, %v4703, %v4704
      %v4706 = vrot.slane %v4591, 2
      %v4707 = vsel %vm1595, %v4704, %v4706
      %v4708 = vrot.slane %v4593, 2
      %v4709 = vrot.slane %v4594, 2
      %v4710 = vsel %vm1595, %v4708, %v4709
      %v4711 = vrot.slane %v4595, 2
      %v4712 = vsel %vm1595, %v4709, %v4711
      %v4713 = vrot.slane %v4597, 2
      %v4714 = vrot.slane %v4598, 2
      %v4715 = vsel %vm1595, %v4713, %v4714
      %v4716 = vrot.slane %v4599, 2
      %v4717 = vsel %vm1595, %v4714, %v4716
      %v4718 = vrot.slane %v4601, 2
      %v4719 = vrot.slane %v4602, 2
      %v4720 = vsel %vm1595, %v4718, %v4719
      %v4721 = vrot.slane %v4603, 2
      %v4722 = vsel %vm1595, %v4719, %v4721
      %v4723 = vrot.slane %v4605, 2
      %v4724 = vrot.slane %v4606, 2
      %v4725 = vsel %vm1595, %v4723, %v4724
      %v4726 = vrot.slane %v4607, 2
      %v4727 = vsel %vm1595, %v4724, %v4726
      %v4728 = vrot.slane %v4609, 2
      %v4729 = vrot.slane %v4610, 2
      %v4730 = vsel %vm1595, %v4728, %v4729
      %v4731 = vrot.slane %v4611, 2
      %v4732 = vsel %vm1595, %v4729, %v4731
      %v4733 = vrot.slane %v4613, 2
      %v4734 = vrot.slane %v4614, 2
      %v4735 = vsel %vm1595, %v4733, %v4734
      %v4736 = vrot.slane %v4615, 2
      %v4737 = vsel %vm1595, %v4734, %v4736
      %v4738 = vrot.slane %v4617, 2
      %v4739 = vrot.slane %v4618, 2
      %v4740 = vsel %vm1595, %v4738, %v4739
      %v4741 = vrot.slane %v4619, 2
      %v4742 = vsel %vm1595, %v4739, %v4741
      %v4743 = vrot.slane %v4621, 2
      %v4744 = vrot.slane %v4622, 2
      %v4745 = vsel %vm1595, %v4743, %v4744
      %v4746 = vrot.slane %v4623, 2
      %v4747 = vsel %vm1595, %v4744, %v4746
      %v4748 = vrot.slane %v4625, 2
      %v4749 = vrot.slane %v4626, 2
      %v4750 = vsel %vm1595, %v4748, %v4749
      %v4751 = vrot.slane %v4627, 2
      %v4752 = vsel %vm1595, %v4749, %v4751
      %v4753 = vrot.slane %v4629, 2
      %v4754 = vrot.slane %v4630, 2
      %v4755 = vsel %vm1595, %v4753, %v4754
      %v4756 = vrot.slane %v4631, 2
      %v4757 = vsel %vm1595, %v4754, %v4756
      %v4758 = vrot.slane %v4633, 2
      %v4759 = vrot.slane %v4634, 2
      %v4760 = vsel %vm1595, %v4758, %v4759
      %v4761 = vrot.slane %v4635, 2
      %v4762 = vsel %vm1595, %v4759, %v4761
      %v4763 = vrot.slane %v4637, 2
      %v4764 = vrot.slane %v4638, 2
      %v4765 = vsel %vm1595, %v4763, %v4764
      %v4766 = vrot.slane %v4639, 2
      %v4767 = vsel %vm1595, %v4764, %v4766
      %v4816 = vmax.f32 %v4576, %v4688
      %v4817 = vmax.f32 %v4577, %v4690
      %v4818 = vmax.f32 %v4578, %v4692
      %v4819 = vmax.f32 %v4580, %v4693
      %v4820 = vmax.f32 %v4581, %v4695
      %v4821 = vmax.f32 %v4582, %v4697
      %v4822 = vmax.f32 %v4584, %v4698
      %v4823 = vmax.f32 %v4585, %v4700
      %v4824 = vmax.f32 %v4586, %v4702
      %v4825 = vmax.f32 %v4588, %v4703
      %v4826 = vmax.f32 %v4589, %v4705
      %v4827 = vmax.f32 %v4590, %v4707
      %v4828 = vmax.f32 %v4592, %v4708
      %v4829 = vmax.f32 %v4593, %v4710
      %v4830 = vmax.f32 %v4594, %v4712
      %v4831 = vmax.f32 %v4596, %v4713
      %v4832 = vmax.f32 %v4597, %v4715
      %v4833 = vmax.f32 %v4598, %v4717
      %v4834 = vmax.f32 %v4600, %v4718
      %v4835 = vmax.f32 %v4601, %v4720
      %v4836 = vmax.f32 %v4602, %v4722
      %v4837 = vmax.f32 %v4604, %v4723
      %v4838 = vmax.f32 %v4605, %v4725
      %v4839 = vmax.f32 %v4606, %v4727
      %v4840 = vmax.f32 %v4608, %v4728
      %v4841 = vmax.f32 %v4609, %v4730
      %v4842 = vmax.f32 %v4610, %v4732
      %v4843 = vmax.f32 %v4612, %v4733
      %v4844 = vmax.f32 %v4613, %v4735
      %v4845 = vmax.f32 %v4614, %v4737
      %v4846 = vmax.f32 %v4616, %v4738
      %v4847 = vmax.f32 %v4617, %v4740
      %v4848 = vmax.f32 %v4618, %v4742
      %v4849 = vmax.f32 %v4620, %v4743
      %v4850 = vmax.f32 %v4621, %v4745
      %v4851 = vmax.f32 %v4622, %v4747
      %v4852 = vmax.f32 %v4624, %v4748
      %v4853 = vmax.f32 %v4625, %v4750
      %v4854 = vmax.f32 %v4626, %v4752
      %v4855 = vmax.f32 %v4628, %v4753
      %v4856 = vmax.f32 %v4629, %v4755
      %v4857 = vmax.f32 %v4630, %v4757
      %v4858 = vmax.f32 %v4632, %v4758
      %v4859 = vmax.f32 %v4633, %v4760
      %v4860 = vmax.f32 %v4634, %v4762
      %v4861 = vmax.f32 %v4636, %v4763
      %v4862 = vmax.f32 %v4637, %v4765
      %v4863 = vmax.f32 %v4638, %v4767
      %v4864 = vrot.slane %v4273, 4
      %v4865 = vrot.slane %v4274, 4
      %v4866 = vsel %vm1772, %v4864, %v4865
      %v4867 = vrot.slane %v4275, 4
      %v4868 = vsel %vm1772, %v4865, %v4867
      %v4869 = vrot.slane %v4277, 4
      %v4870 = vrot.slane %v4278, 4
      %v4871 = vsel %vm1772, %v4869, %v4870
      %v4872 = vrot.slane %v4279, 4
      %v4873 = vsel %vm1772, %v4870, %v4872
      %v4874 = vrot.slane %v4281, 4
      %v4875 = vrot.slane %v4282, 4
      %v4876 = vsel %vm1772, %v4874, %v4875
      %v4877 = vrot.slane %v4283, 4
      %v4878 = vsel %vm1772, %v4875, %v4877
      %v4879 = vrot.slane %v4285, 4
      %v4880 = vrot.slane %v4286, 4
      %v4881 = vsel %vm1772, %v4879, %v4880
      %v4882 = vrot.slane %v4287, 4
      %v4883 = vsel %vm1772, %v4880, %v4882
      %v4884 = vrot.slane %v4289, 4
      %v4885 = vrot.slane %v4290, 4
      %v4886 = vsel %vm1772, %v4884, %v4885
      %v4887 = vrot.slane %v4291, 4
      %v4888 = vsel %vm1772, %v4885, %v4887
      %v4889 = vrot.slane %v4293, 4
      %v4890 = vrot.slane %v4294, 4
      %v4891 = vsel %vm1772, %v4889, %v4890
      %v4892 = vrot.slane %v4295, 4
      %v4893 = vsel %vm1772, %v4890, %v4892
      %v4894 = vrot.slane %v4297, 4
      %v4895 = vrot.slane %v4298, 4
      %v4896 = vsel %vm1772, %v4894, %v4895
      %v4897 = vrot.slane %v4299, 4
      %v4898 = vsel %vm1772, %v4895, %v4897
      %v4899 = vrot.slane %v4301, 4
      %v4900 = vrot.slane %v4302, 4
      %v4901 = vsel %vm1772, %v4899, %v4900
      %v4902 = vrot.slane %v4303, 4
      %v4903 = vsel %vm1772, %v4900, %v4902
      %v4904 = vrot.slane %v4305, 4
      %v4905 = vrot.slane %v4306, 4
      %v4906 = vsel %vm1772, %v4904, %v4905
      %v4907 = vrot.slane %v4307, 4
      %v4908 = vsel %vm1772, %v4905, %v4907
      %v4909 = vrot.slane %v4309, 4
      %v4910 = vrot.slane %v4310, 4
      %v4911 = vsel %vm1772, %v4909, %v4910
      %v4912 = vrot.slane %v4311, 4
      %v4913 = vsel %vm1772, %v4910, %v4912
      %v4914 = vrot.slane %v4313, 4
      %v4915 = vrot.slane %v4314, 4
      %v4916 = vsel %vm1772, %v4914, %v4915
      %v4917 = vrot.slane %v4315, 4
      %v4918 = vsel %vm1772, %v4915, %v4917
      %v4919 = vrot.slane %v4317, 4
      %v4920 = vrot.slane %v4318, 4
      %v4921 = vsel %vm1772, %v4919, %v4920
      %v4922 = vrot.slane %v4319, 4
      %v4923 = vsel %vm1772, %v4920, %v4922
      %v4924 = vrot.slane %v4321, 4
      %v4925 = vrot.slane %v4322, 4
      %v4926 = vsel %vm1772, %v4924, %v4925
      %v4927 = vrot.slane %v4323, 4
      %v4928 = vsel %vm1772, %v4925, %v4927
      %v4929 = vrot.slane %v4325, 4
      %v4930 = vrot.slane %v4326, 4
      %v4931 = vsel %vm1772, %v4929, %v4930
      %v4932 = vrot.slane %v4327, 4
      %v4933 = vsel %vm1772, %v4930, %v4932
      %v4934 = vrot.slane %v4329, 4
      %v4935 = vrot.slane %v4330, 4
      %v4936 = vsel %vm1772, %v4934, %v4935
      %v4937 = vrot.slane %v4331, 4
      %v4938 = vsel %vm1772, %v4935, %v4937
      %v4939 = vrot.slane %v4333, 4
      %v4940 = vrot.slane %v4334, 4
      %v4941 = vsel %vm1772, %v4939, %v4940
      %v4942 = vrot.slane %v4335, 4
      %v4943 = vsel %vm1772, %v4940, %v4942
      %v4992 = vmax.f32 %v4816, %v4864
      %v4993 = vmax.f32 %v4817, %v4866
      %v4994 = vmax.f32 %v4818, %v4868
      %v4995 = vmax.f32 %v4819, %v4869
      %v4996 = vmax.f32 %v4820, %v4871
      %v4997 = vmax.f32 %v4821, %v4873
      %v4998 = vmax.f32 %v4822, %v4874
      %v4999 = vmax.f32 %v4823, %v4876
      %v5000 = vmax.f32 %v4824, %v4878
      %v5001 = vmax.f32 %v4825, %v4879
      %v5002 = vmax.f32 %v4826, %v4881
      %v5003 = vmax.f32 %v4827, %v4883
      %v5004 = vmax.f32 %v4828, %v4884
      %v5005 = vmax.f32 %v4829, %v4886
      %v5006 = vmax.f32 %v4830, %v4888
      %v5007 = vmax.f32 %v4831, %v4889
      %v5008 = vmax.f32 %v4832, %v4891
      %v5009 = vmax.f32 %v4833, %v4893
      %v5010 = vmax.f32 %v4834, %v4894
      %v5011 = vmax.f32 %v4835, %v4896
      %v5012 = vmax.f32 %v4836, %v4898
      %v5013 = vmax.f32 %v4837, %v4899
      %v5014 = vmax.f32 %v4838, %v4901
      %v5015 = vmax.f32 %v4839, %v4903
      %v5016 = vmax.f32 %v4840, %v4904
      %v5017 = vmax.f32 %v4841, %v4906
      %v5018 = vmax.f32 %v4842, %v4908
      %v5019 = vmax.f32 %v4843, %v4909
      %v5020 = vmax.f32 %v4844, %v4911
      %v5021 = vmax.f32 %v4845, %v4913
      %v5022 = vmax.f32 %v4846, %v4914
      %v5023 = vmax.f32 %v4847, %v4916
      %v5024 = vmax.f32 %v4848, %v4918
      %v5025 = vmax.f32 %v4849, %v4919
      %v5026 = vmax.f32 %v4850, %v4921
      %v5027 = vmax.f32 %v4851, %v4923
      %v5028 = vmax.f32 %v4852, %v4924
      %v5029 = vmax.f32 %v4853, %v4926
      %v5030 = vmax.f32 %v4854, %v4928
      %v5031 = vmax.f32 %v4855, %v4929
      %v5032 = vmax.f32 %v4856, %v4931
      %v5033 = vmax.f32 %v4857, %v4933
      %v5034 = vmax.f32 %v4858, %v4934
      %v5035 = vmax.f32 %v4859, %v4936
      %v5036 = vmax.f32 %v4860, %v4938
      %v5037 = vmax.f32 %v4861, %v4939
      %v5038 = vmax.f32 %v4862, %v4941
      %v5039 = vmax.f32 %v4863, %v4943
      %v5088 = vrot.slane %v4992, 6
      %v5089 = vrot.slane %v4993, 6
      %v5090 = vsel %vm477, %v5088, %v5089
      %v5091 = vrot.slane %v4994, 6
      %v5092 = vsel %vm477, %v5089, %v5091
      %v5093 = vrot.slane %v4995, 6
      %v5094 = vrot.slane %v4996, 6
      %v5095 = vsel %vm477, %v5093, %v5094
      %v5096 = vrot.slane %v4997, 6
      %v5097 = vsel %vm477, %v5094, %v5096
      %v5098 = vrot.slane %v4998, 6
      %v5099 = vrot.slane %v4999, 6
      %v5100 = vsel %vm477, %v5098, %v5099
      %v5101 = vrot.slane %v5000, 6
      %v5102 = vsel %vm477, %v5099, %v5101
      %v5103 = vrot.slane %v5001, 6
      %v5104 = vrot.slane %v5002, 6
      %v5105 = vsel %vm477, %v5103, %v5104
      %v5106 = vrot.slane %v5003, 6
      %v5107 = vsel %vm477, %v5104, %v5106
      %v5108 = vrot.slane %v5004, 6
      %v5109 = vrot.slane %v5005, 6
      %v5110 = vsel %vm477, %v5108, %v5109
      %v5111 = vrot.slane %v5006, 6
      %v5112 = vsel %vm477, %v5109, %v5111
      %v5113 = vrot.slane %v5007, 6
      %v5114 = vrot.slane %v5008, 6
      %v5115 = vsel %vm477, %v5113, %v5114
      %v5116 = vrot.slane %v5009, 6
      %v5117 = vsel %vm477, %v5114, %v5116
      %v5118 = vrot.slane %v5010, 6
      %v5119 = vrot.slane %v5011, 6
      %v5120 = vsel %vm477, %v5118, %v5119
      %v5121 = vrot.slane %v5012, 6
      %v5122 = vsel %vm477, %v5119, %v5121
      %v5123 = vrot.slane %v5013, 6
      %v5124 = vrot.slane %v5014, 6
      %v5125 = vsel %vm477, %v5123, %v5124
      %v5126 = vrot.slane %v5015, 6
      %v5127 = vsel %vm477, %v5124, %v5126
      %v5128 = vrot.slane %v5016, 6
      %v5129 = vrot.slane %v5017, 6
      %v5130 = vsel %vm477, %v5128, %v5129
      %v5131 = vrot.slane %v5018, 6
      %v5132 = vsel %vm477, %v5129, %v5131
      %v5133 = vrot.slane %v5019, 6
      %v5134 = vrot.slane %v5020, 6
      %v5135 = vsel %vm477, %v5133, %v5134
      %v5136 = vrot.slane %v5021, 6
      %v5137 = vsel %vm477, %v5134, %v5136
      %v5138 = vrot.slane %v5022, 6
      %v5139 = vrot.slane %v5023, 6
      %v5140 = vsel %vm477, %v5138, %v5139
      %v5141 = vrot.slane %v5024, 6
      %v5142 = vsel %vm477, %v5139, %v5141
      %v5143 = vrot.slane %v5025, 6
      %v5144 = vrot.slane %v5026, 6
      %v5145 = vsel %vm477, %v5143, %v5144
      %v5146 = vrot.slane %v5027, 6
      %v5147 = vsel %vm477, %v5144, %v5146
      %v5148 = vrot.slane %v5028, 6
      %v5149 = vrot.slane %v5029, 6
      %v5150 = vsel %vm477, %v5148, %v5149
      %v5151 = vrot.slane %v5030, 6
      %v5152 = vsel %vm477, %v5149, %v5151
      %v5153 = vrot.slane %v5031, 6
      %v5154 = vrot.slane %v5032, 6
      %v5155 = vsel %vm477, %v5153, %v5154
      %v5156 = vrot.slane %v5033, 6
      %v5157 = vsel %vm477, %v5154, %v5156
      %v5158 = vrot.slane %v5034, 6
      %v5159 = vrot.slane %v5035, 6
      %v5160 = vsel %vm477, %v5158, %v5159
      %v5161 = vrot.slane %v5036, 6
      %v5162 = vsel %vm477, %v5159, %v5161
      %v5163 = vrot.slane %v5037, 6
      %v5164 = vrot.slane %v5038, 6
      %v5165 = vsel %vm477, %v5163, %v5164
      %v5166 = vrot.slane %v5039, 6
      %v5167 = vsel %vm477, %v5164, %v5166
      %v5200 = vpack.c.bf16 %v5092, %v5090
      %v5201 = vpack.c.bf16 %v5097, %v5095
      %v5202 = vpack.c.bf16 %v5102, %v5100
      %v5203 = vpack.c.bf16 %v5107, %v5105
      %v5204 = vpack.c.bf16 %v5112, %v5110
      %v5205 = vpack.c.bf16 %v5117, %v5115
      %v5206 = vpack.c.bf16 %v5122, %v5120
      %v5207 = vpack.c.bf16 %v5127, %v5125
      %v5208 = vpack.c.bf16 %v5132, %v5130
      %v5209 = vpack.c.bf16 %v5137, %v5135
      %v5210 = vpack.c.bf16 %v5142, %v5140
      %v5211 = vpack.c.bf16 %v5147, %v5145
      %v5212 = vpack.c.bf16 %v5152, %v5150
      %v5213 = vpack.c.bf16 %v5157, %v5155
      %v5214 = vpack.c.bf16 %v5162, %v5160
      %v5215 = vpack.c.bf16 %v5167, %v5165
      %s5216 = scalar_lea.vmem %s4, 3
      %v5217 = vld [vmem:[%s5216] sm:$0x1]
      %v5219 = vsel %vm280, %v5200, 0
      %v5222 = vsel %vm280, %v5201, 0
      %v5225 = vsel %vm280, %v5202, 0
      %v5228 = vsel %vm280, %v5203, 0
      %v5231 = vsel %vm280, %v5204, 0
      %v5234 = vsel %vm280, %v5205, 0
      %v5237 = vsel %vm280, %v5206, 0
      %v5240 = vsel %vm280, %v5207, 0
      %v5243 = vsel %vm280, %v5208, 0
      %v5246 = vsel %vm280, %v5209, 0
      %v5249 = vsel %vm280, %v5210, 0
      %v5252 = vsel %vm280, %v5211, 0
      %v5255 = vsel %vm280, %v5212, 0
      %v5258 = vsel %vm280, %v5213, 0
      %v5261 = vsel %vm280, %v5214, 0
      %v5264 = vsel %vm280, %v5215, 0
      %v5267 = vsel %vm2175, %v5217, 0
      %5269 = vmatprep.subr.bf16.mxu0 0
      %5270 = vmatpush1.bf16.msra.mxu0 0
      %5271 = vmatprep.subr.bf16.mxu0 0
      %5272 = vmatpush1.bf16.msra.mxu0 0
      %5273 = vmatprep.subr.bf16.mxu0 0
      %5274 = vmatpush1.bf16.msra.mxu0 0
      %5275 = vmatprep.subr.bf16.mxu0 0
      %5276 = vmatpush1.bf16.msra.mxu0 0
      %5277 = vmatprep.subr.bf16.mxu0 0
      %5278 = vmatpush1.bf16.msra.mxu0 0
      %5279 = vmatprep.subr.bf16.mxu0 0
      %5280 = vmatpush1.bf16.msra.mxu0 0
      %5281 = vmatprep.subr.bf16.mxu0 0
      %5282 = vmatpush1.bf16.msra.mxu0 0
      %5283 = vmatprep.subr.bf16.mxu0 0
      %5284 = vmatpush1.bf16.msra.mxu0 %v5267
      %5285 = vmatprep.subr.bf16.mxu0 0
      %5286 = vmatpush2.bf16.msra.mxu0 0
      %5287 = vmatprep.subr.bf16.mxu0 0
      %5288 = vmatpush2.bf16.msra.mxu0 0
      %5289 = vmatprep.subr.bf16.mxu0 0
      %5290 = vmatpush2.bf16.msra.mxu0 0
      %5291 = vmatprep.subr.bf16.mxu0 0
      %5292 = vmatpush2.bf16.msra.mxu0 0
      %5293 = vmatprep.subr.bf16.mxu0 0
      %5294 = vmatpush2.bf16.msra.mxu0 0
      %5295 = vmatprep.subr.bf16.mxu0 0
      %5296 = vmatpush2.bf16.msra.mxu0 0
      %5297 = vmatprep.subr.bf16.mxu0 0
      %5298 = vmatpush2.bf16.msra.mxu0 0
      %5299 = vmatprep.subr.bf16.mxu0 0
      %5300 = vmatpush2.bf16.msra.mxu0 0
      %5301 = vmatprep.mubr.bf16.mxu0 0
      %5302 = vmatmul.mubr.bf16.gmra.mxu0 %v5219
      %v5303 = vpop.f32.mrf.mxu0
      %v5304 = vadd.f32 0.0, %v5303
      %v5305 = vpop.f32.mrf.mxu0
      %v5306 = vpop.f32.mrf.mxu0
      %v5307 = vadd.f32 0.0, %v5306
      %v5308 = vpop.f32.mrf.mxu0
      %5309 = vmatprep.mubr.bf16.mxu0 0
      %5310 = vmatmul.mubr.bf16.gmra.mxu0 %v5222
      %v5311 = vpop.f32.mrf.mxu0
      %v5312 = vadd.f32 0.0, %v5311
      %v5313 = vpop.f32.mrf.mxu0
      %v5314 = vpop.f32.mrf.mxu0
      %v5315 = vadd.f32 0.0, %v5314
      %v5316 = vpop.f32.mrf.mxu0
      %5317 = vmatprep.mubr.bf16.mxu0 0
      %5318 = vmatmul.mubr.bf16.gmra.mxu0 %v5225
      %v5319 = vpop.f32.mrf.mxu0
      %v5320 = vadd.f32 0.0, %v5319
      %v5321 = vpop.f32.mrf.mxu0
      %v5322 = vpop.f32.mrf.mxu0
      %v5323 = vadd.f32 0.0, %v5322
      %v5324 = vpop.f32.mrf.mxu0
      %5325 = vmatprep.mubr.bf16.mxu0 0
      %5326 = vmatmul.mubr.bf16.gmra.mxu0 %v5228
      %v5327 = vpop.f32.mrf.mxu0
      %v5328 = vadd.f32 0.0, %v5327
      %v5329 = vpop.f32.mrf.mxu0
      %v5330 = vpop.f32.mrf.mxu0
      %v5331 = vadd.f32 0.0, %v5330
      %v5332 = vpop.f32.mrf.mxu0
      %5333 = vmatprep.mubr.bf16.mxu0 0
      %5334 = vmatmul.mubr.bf16.gmra.mxu0 %v5231
      %v5335 = vpop.f32.mrf.mxu0
      %v5336 = vadd.f32 0.0, %v5335
      %v5337 = vpop.f32.mrf.mxu0
      %v5338 = vpop.f32.mrf.mxu0
      %v5339 = vadd.f32 0.0, %v5338
      %v5340 = vpop.f32.mrf.mxu0
      %5341 = vmatprep.mubr.bf16.mxu0 0
      %5342 = vmatmul.mubr.bf16.gmra.mxu0 %v5234
      %v5343 = vpop.f32.mrf.mxu0
      %v5344 = vadd.f32 0.0, %v5343
      %v5345 = vpop.f32.mrf.mxu0
      %v5346 = vpop.f32.mrf.mxu0
      %v5347 = vadd.f32 0.0, %v5346
      %v5348 = vpop.f32.mrf.mxu0
      %5349 = vmatprep.mubr.bf16.mxu0 0
      %5350 = vmatmul.mubr.bf16.gmra.mxu0 %v5237
      %v5351 = vpop.f32.mrf.mxu0
      %v5352 = vadd.f32 0.0, %v5351
      %v5353 = vpop.f32.mrf.mxu0
      %v5354 = vpop.f32.mrf.mxu0
      %v5355 = vadd.f32 0.0, %v5354
      %v5356 = vpop.f32.mrf.mxu0
      %5357 = vmatprep.mubr.bf16.mxu0 0
      %5358 = vmatmul.mubr.bf16.gmra.mxu0 %v5240
      %v5359 = vpop.f32.mrf.mxu0
      %v5360 = vadd.f32 0.0, %v5359
      %v5361 = vpop.f32.mrf.mxu0
      %v5362 = vpop.f32.mrf.mxu0
      %v5363 = vadd.f32 0.0, %v5362
      %v5364 = vpop.f32.mrf.mxu0
      %5365 = vmatprep.mubr.bf16.mxu0 0
      %5366 = vmatmul.mubr.bf16.gmra.mxu0 %v5243
      %v5367 = vpop.f32.mrf.mxu0
      %v5368 = vadd.f32 0.0, %v5367
      %v5369 = vpop.f32.mrf.mxu0
      %v5370 = vpop.f32.mrf.mxu0
      %v5371 = vadd.f32 0.0, %v5370
      %v5372 = vpop.f32.mrf.mxu0
      %5373 = vmatprep.mubr.bf16.mxu0 0
      %5374 = vmatmul.mubr.bf16.gmra.mxu0 %v5246
      %v5375 = vpop.f32.mrf.mxu0
      %v5376 = vadd.f32 0.0, %v5375
      %v5377 = vpop.f32.mrf.mxu0
      %v5378 = vpop.f32.mrf.mxu0
      %v5379 = vadd.f32 0.0, %v5378
      %v5380 = vpop.f32.mrf.mxu0
      %5381 = vmatprep.mubr.bf16.mxu0 0
      %5382 = vmatmul.mubr.bf16.gmra.mxu0 %v5249
      %v5383 = vpop.f32.mrf.mxu0
      %v5384 = vadd.f32 0.0, %v5383
      %v5385 = vpop.f32.mrf.mxu0
      %v5386 = vpop.f32.mrf.mxu0
      %v5387 = vadd.f32 0.0, %v5386
      %v5388 = vpop.f32.mrf.mxu0
      %5389 = vmatprep.mubr.bf16.mxu0 0
      %5390 = vmatmul.mubr.bf16.gmra.mxu0 %v5252
      %v5391 = vpop.f32.mrf.mxu0
      %v5392 = vadd.f32 0.0, %v5391
      %v5393 = vpop.f32.mrf.mxu0
      %v5394 = vpop.f32.mrf.mxu0
      %v5395 = vadd.f32 0.0, %v5394
      %v5396 = vpop.f32.mrf.mxu0
      %5397 = vmatprep.mubr.bf16.mxu0 0
      %5398 = vmatmul.mubr.bf16.gmra.mxu0 %v5255
      %v5399 = vpop.f32.mrf.mxu0
      %v5400 = vadd.f32 0.0, %v5399
      %v5401 = vpop.f32.mrf.mxu0
      %v5402 = vpop.f32.mrf.mxu0
      %v5403 = vadd.f32 0.0, %v5402
      %v5404 = vpop.f32.mrf.mxu0
      %5405 = vmatprep.mubr.bf16.mxu0 0
      %5406 = vmatmul.mubr.bf16.gmra.mxu0 %v5258
      %v5407 = vpop.f32.mrf.mxu0
      %v5408 = vadd.f32 0.0, %v5407
      %v5409 = vpop.f32.mrf.mxu0
      %v5410 = vpop.f32.mrf.mxu0
      %v5411 = vadd.f32 0.0, %v5410
      %v5412 = vpop.f32.mrf.mxu0
      %5413 = vmatprep.mubr.bf16.mxu0 0
      %5414 = vmatmul.mubr.bf16.gmra.mxu0 %v5261
      %v5415 = vpop.f32.mrf.mxu0
      %v5416 = vadd.f32 0.0, %v5415
      %v5417 = vpop.f32.mrf.mxu0
      %v5418 = vpop.f32.mrf.mxu0
      %v5419 = vadd.f32 0.0, %v5418
      %v5420 = vpop.f32.mrf.mxu0
      %5421 = vmatprep.mubr.bf16.mxu0 0
      %5422 = vmatmul.mubr.bf16.gmra.mxu0 %v5264
      %v5423 = vpop.f32.mrf.mxu0
      %v5424 = vadd.f32 0.0, %v5423
      %v5425 = vpop.f32.mrf.mxu0
      %v5426 = vpop.f32.mrf.mxu0
      %v5427 = vadd.f32 0.0, %v5426
      %v5428 = vpop.f32.mrf.mxu0
      %5429 = vdwg.mxu0
      %v5430 = vadd.f32 %v3976, %v5304
      %v5431 = vadd.f32 %v3977, %v5307
      %v5432 = vadd.f32 %v3978, %v5312
      %v5433 = vadd.f32 %v3979, %v5315
      %v5434 = vadd.f32 %v3980, %v5320
      %v5435 = vadd.f32 %v3981, %v5323
      %v5436 = vadd.f32 %v3982, %v5328
      %v5437 = vadd.f32 %v3983, %v5331
      %v5438 = vadd.f32 %v3984, %v5336
      %v5439 = vadd.f32 %v3985, %v5339
      %v5440 = vadd.f32 %v3986, %v5344
      %v5441 = vadd.f32 %v3987, %v5347
      %v5442 = vadd.f32 %v3988, %v5352
      %v5443 = vadd.f32 %v3989, %v5355
      %v5444 = vadd.f32 %v3990, %v5360
      %v5445 = vadd.f32 %v3991, %v5363
      %v5446 = vadd.f32 %v3992, %v5368
      %v5447 = vadd.f32 %v3993, %v5371
      %v5448 = vadd.f32 %v3994, %v5376
      %v5449 = vadd.f32 %v3995, %v5379
      %v5450 = vadd.f32 %v3996, %v5384
      %v5451 = vadd.f32 %v3997, %v5387
      %v5452 = vadd.f32 %v3998, %v5392
      %v5453 = vadd.f32 %v3999, %v5395
      %v5454 = vadd.f32 %v4000, %v5400
      %v5455 = vadd.f32 %v4001, %v5403
      %v5456 = vadd.f32 %v4002, %v5408
      %v5457 = vadd.f32 %v4003, %v5411
      %v5458 = vadd.f32 %v4004, %v5416
      %v5459 = vadd.f32 %v4005, %v5419
      %v5460 = vadd.f32 %v4006, %v5424
      %v5461 = vadd.f32 %v4007, %v5427
      %v5462 = vld [vmem:[%s5] sm:$0x1]
      %v5464 = vlaneseq
      %v5465 = vshrl.u32 %v5464, 7
      %v5466 = vsub.s32 0, %v5465
      %v5467 = vrot.slane %v5462, %v5466
      %v5469 = vmul.f32 %v5430, %v5467
      %v5470 = vmul.f32 %v5431, %v5467
      %v5471 = vmul.f32 %v5432, %v5467
      %v5472 = vmul.f32 %v5433, %v5467
      %v5473 = vmul.f32 %v5434, %v5467
      %v5474 = vmul.f32 %v5435, %v5467
      %v5475 = vmul.f32 %v5436, %v5467
      %v5476 = vmul.f32 %v5437, %v5467
      %v5477 = vmul.f32 %v5438, %v5467
      %v5478 = vmul.f32 %v5439, %v5467
      %v5479 = vmul.f32 %v5440, %v5467
      %v5480 = vmul.f32 %v5441, %v5467
      %v5481 = vmul.f32 %v5442, %v5467
      %v5482 = vmul.f32 %v5443, %v5467
      %v5483 = vmul.f32 %v5444, %v5467
      %v5484 = vmul.f32 %v5445, %v5467
      %v5485 = vmul.f32 %v5446, %v5467
      %v5486 = vmul.f32 %v5447, %v5467
      %v5487 = vmul.f32 %v5448, %v5467
      %v5488 = vmul.f32 %v5449, %v5467
      %v5489 = vmul.f32 %v5450, %v5467
      %v5490 = vmul.f32 %v5451, %v5467
      %v5491 = vmul.f32 %v5452, %v5467
      %v5492 = vmul.f32 %v5453, %v5467
      %v5493 = vmul.f32 %v5454, %v5467
      %v5494 = vmul.f32 %v5455, %v5467
      %v5495 = vmul.f32 %v5456, %v5467
      %v5496 = vmul.f32 %v5457, %v5467
      %v5497 = vmul.f32 %v5458, %v5467
      %v5498 = vmul.f32 %v5459, %v5467
      %v5499 = vmul.f32 %v5460, %v5467
      %v5500 = vmul.f32 %v5461, %v5467
      %v5501 = vld [vmem:[%s6] sm:$0x1]
      %v5503 = vlaneseq
      %v5504 = vshrl.u32 %v5503, 7
      %v5505 = vsub.s32 0, %v5504
      %v5506 = vrot.slane %v5501, %v5505
      %v5508 = vadd.f32 %v5469, %v5506
      %v5509 = vadd.f32 %v5470, %v5506
      %v5510 = vadd.f32 %v5471, %v5506
      %v5511 = vadd.f32 %v5472, %v5506
      %v5512 = vadd.f32 %v5473, %v5506
      %v5513 = vadd.f32 %v5474, %v5506
      %v5514 = vadd.f32 %v5475, %v5506
      %v5515 = vadd.f32 %v5476, %v5506
      %v5516 = vadd.f32 %v5477, %v5506
      %v5517 = vadd.f32 %v5478, %v5506
      %v5518 = vadd.f32 %v5479, %v5506
      %v5519 = vadd.f32 %v5480, %v5506
      %v5520 = vadd.f32 %v5481, %v5506
      %v5521 = vadd.f32 %v5482, %v5506
      %v5522 = vadd.f32 %v5483, %v5506
      %v5523 = vadd.f32 %v5484, %v5506
      %v5524 = vadd.f32 %v5485, %v5506
      %v5525 = vadd.f32 %v5486, %v5506
      %v5526 = vadd.f32 %v5487, %v5506
      %v5527 = vadd.f32 %v5488, %v5506
      %v5528 = vadd.f32 %v5489, %v5506
      %v5529 = vadd.f32 %v5490, %v5506
      %v5530 = vadd.f32 %v5491, %v5506
      %v5531 = vadd.f32 %v5492, %v5506
      %v5532 = vadd.f32 %v5493, %v5506
      %v5533 = vadd.f32 %v5494, %v5506
      %v5534 = vadd.f32 %v5495, %v5506
      %v5535 = vadd.f32 %v5496, %v5506
      %v5536 = vadd.f32 %v5497, %v5506
      %v5537 = vadd.f32 %v5498, %v5506
      %v5538 = vadd.f32 %v5499, %v5506
      %v5539 = vadd.f32 %v5500, %v5506
      %v5540 = vsub.f32 0.0, %v5508
      %v5541 = vsub.f32 0.0, %v5509
      %v5542 = vsub.f32 0.0, %v5510
      %v5543 = vsub.f32 0.0, %v5511
      %v5544 = vsub.f32 0.0, %v5512
      %v5545 = vsub.f32 0.0, %v5513
      %v5546 = vsub.f32 0.0, %v5514
      %v5547 = vsub.f32 0.0, %v5515
      %v5548 = vsub.f32 0.0, %v5516
      %v5549 = vsub.f32 0.0, %v5517
      %v5550 = vsub.f32 0.0, %v5518
      %v5551 = vsub.f32 0.0, %v5519
      %v5552 = vsub.f32 0.0, %v5520
      %v5553 = vsub.f32 0.0, %v5521
      %v5554 = vsub.f32 0.0, %v5522
      %v5555 = vsub.f32 0.0, %v5523
      %v5556 = vsub.f32 0.0, %v5524
      %v5557 = vsub.f32 0.0, %v5525
      %v5558 = vsub.f32 0.0, %v5526
      %v5559 = vsub.f32 0.0, %v5527
      %v5560 = vsub.f32 0.0, %v5528
      %v5561 = vsub.f32 0.0, %v5529
      %v5562 = vsub.f32 0.0, %v5530
      %v5563 = vsub.f32 0.0, %v5531
      %v5564 = vsub.f32 0.0, %v5532
      %v5565 = vsub.f32 0.0, %v5533
      %v5566 = vsub.f32 0.0, %v5534
      %v5567 = vsub.f32 0.0, %v5535
      %v5568 = vsub.f32 0.0, %v5536
      %v5569 = vsub.f32 0.0, %v5537
      %v5570 = vsub.f32 0.0, %v5538
      %v5571 = vsub.f32 0.0, %v5539
      %v5572 = vmul.f32 %v5540, 1.442695
      %v5573 = vpow.pop %v5572
      %v5574 = vmul.f32 %v5541, 1.442695
      %v5575 = vpow.pop %v5574
      %v5576 = vmul.f32 %v5542, 1.442695
      %v5577 = vpow.pop %v5576
      %v5578 = vmul.f32 %v5543, 1.442695
      %v5579 = vpow.pop %v5578
      %v5580 = vmul.f32 %v5544, 1.442695
      %v5581 = vpow.pop %v5580
      %v5582 = vmul.f32 %v5545, 1.442695
      %v5583 = vpow.pop %v5582
      %v5584 = vmul.f32 %v5546, 1.442695
      %v5585 = vpow.pop %v5584
      %v5586 = vmul.f32 %v5547, 1.442695
      %v5587 = vpow.pop %v5586
      %v5588 = vmul.f32 %v5548, 1.442695
      %v5589 = vpow.pop %v5588
      %v5590 = vmul.f32 %v5549, 1.442695
      %v5591 = vpow.pop %v5590
      %v5592 = vmul.f32 %v5550, 1.442695
      %v5593 = vpow.pop %v5592
      %v5594 = vmul.f32 %v5551, 1.442695
      %v5595 = vpow.pop %v5594
      %v5596 = vmul.f32 %v5552, 1.442695
      %v5597 = vpow.pop %v5596
      %v5598 = vmul.f32 %v5553, 1.442695
      %v5599 = vpow.pop %v5598
      %v5600 = vmul.f32 %v5554, 1.442695
      %v5601 = vpow.pop %v5600
      %v5602 = vmul.f32 %v5555, 1.442695
      %v5603 = vpow.pop %v5602
      %v5604 = vmul.f32 %v5556, 1.442695
      %v5605 = vpow.pop %v5604
      %v5606 = vmul.f32 %v5557, 1.442695
      %v5607 = vpow.pop %v5606
      %v5608 = vmul.f32 %v5558, 1.442695
      %v5609 = vpow.pop %v5608
      %v5610 = vmul.f32 %v5559, 1.442695
      %v5611 = vpow.pop %v5610
      %v5612 = vmul.f32 %v5560, 1.442695
      %v5613 = vpow.pop %v5612
      %v5614 = vmul.f32 %v5561, 1.442695
      %v5615 = vpow.pop %v5614
      %v5616 = vmul.f32 %v5562, 1.442695
      %v5617 = vpow.pop %v5616
      %v5618 = vmul.f32 %v5563, 1.442695
      %v5619 = vpow.pop %v5618
      %v5620 = vmul.f32 %v5564, 1.442695
      %v5621 = vpow.pop %v5620
      %v5622 = vmul.f32 %v5565, 1.442695
      %v5623 = vpow.pop %v5622
      %v5624 = vmul.f32 %v5566, 1.442695
      %v5625 = vpow.pop %v5624
      %v5626 = vmul.f32 %v5567, 1.442695
      %v5627 = vpow.pop %v5626
      %v5628 = vmul.f32 %v5568, 1.442695
      %v5629 = vpow.pop %v5628
      %v5630 = vmul.f32 %v5569, 1.442695
      %v5631 = vpow.pop %v5630
      %v5632 = vmul.f32 %v5570, 1.442695
      %v5633 = vpow.pop %v5632
      %v5634 = vmul.f32 %v5571, 1.442695
      %v5635 = vpow.pop %v5634
      %v5636 = vadd.f32 %v5573, 1.0
      %v5637 = vadd.f32 %v5575, 1.0
      %v5638 = vadd.f32 %v5577, 1.0
      %v5639 = vadd.f32 %v5579, 1.0
      %v5640 = vadd.f32 %v5581, 1.0
      %v5641 = vadd.f32 %v5583, 1.0
      %v5642 = vadd.f32 %v5585, 1.0
      %v5643 = vadd.f32 %v5587, 1.0
      %v5644 = vadd.f32 %v5589, 1.0
      %v5645 = vadd.f32 %v5591, 1.0
      %v5646 = vadd.f32 %v5593, 1.0
      %v5647 = vadd.f32 %v5595, 1.0
      %v5648 = vadd.f32 %v5597, 1.0
      %v5649 = vadd.f32 %v5599, 1.0
      %v5650 = vadd.f32 %v5601, 1.0
      %v5651 = vadd.f32 %v5603, 1.0
      %v5652 = vadd.f32 %v5605, 1.0
      %v5653 = vadd.f32 %v5607, 1.0
      %v5654 = vadd.f32 %v5609, 1.0
      %v5655 = vadd.f32 %v5611, 1.0
      %v5656 = vadd.f32 %v5613, 1.0
      %v5657 = vadd.f32 %v5615, 1.0
      %v5658 = vadd.f32 %v5617, 1.0
      %v5659 = vadd.f32 %v5619, 1.0
      %v5660 = vadd.f32 %v5621, 1.0
      %v5661 = vadd.f32 %v5623, 1.0
      %v5662 = vadd.f32 %v5625, 1.0
      %v5663 = vadd.f32 %v5627, 1.0
      %v5664 = vadd.f32 %v5629, 1.0
      %v5665 = vadd.f32 %v5631, 1.0
      %v5666 = vadd.f32 %v5633, 1.0
      %v5667 = vadd.f32 %v5635, 1.0
      %v5668 = vrcp.pop %v5636
      %v5669 = vrcp.pop %v5637
      %v5670 = vrcp.pop %v5638
      %v5671 = vrcp.pop %v5639
      %v5672 = vrcp.pop %v5640
      %v5673 = vrcp.pop %v5641
      %v5674 = vrcp.pop %v5642
      %v5675 = vrcp.pop %v5643
      %v5676 = vrcp.pop %v5644
      %v5677 = vrcp.pop %v5645
      %v5678 = vrcp.pop %v5646
      %v5679 = vrcp.pop %v5647
      %v5680 = vrcp.pop %v5648
      %v5681 = vrcp.pop %v5649
      %v5682 = vrcp.pop %v5650
      %v5683 = vrcp.pop %v5651
      %v5684 = vrcp.pop %v5652
      %v5685 = vrcp.pop %v5653
      %v5686 = vrcp.pop %v5654
      %v5687 = vrcp.pop %v5655
      %v5688 = vrcp.pop %v5656
      %v5689 = vrcp.pop %v5657
      %v5690 = vrcp.pop %v5658
      %v5691 = vrcp.pop %v5659
      %v5692 = vrcp.pop %v5660
      %v5693 = vrcp.pop %v5661
      %v5694 = vrcp.pop %v5662
      %v5695 = vrcp.pop %v5663
      %v5696 = vrcp.pop %v5664
      %v5697 = vrcp.pop %v5665
      %v5698 = vrcp.pop %v5666
      %v5699 = vrcp.pop %v5667
      %v5700 = vmul.f32 %v5508, %v5668
      %v5701 = vmul.f32 %v5509, %v5669
      %v5702 = vmul.f32 %v5510, %v5670
      %v5703 = vmul.f32 %v5511, %v5671
      %v5704 = vmul.f32 %v5512, %v5672
      %v5705 = vmul.f32 %v5513, %v5673
      %v5706 = vmul.f32 %v5514, %v5674
      %v5707 = vmul.f32 %v5515, %v5675
      %v5708 = vmul.f32 %v5516, %v5676
      %v5709 = vmul.f32 %v5517, %v5677
      %v5710 = vmul.f32 %v5518, %v5678
      %v5711 = vmul.f32 %v5519, %v5679
      %v5712 = vmul.f32 %v5520, %v5680
      %v5713 = vmul.f32 %v5521, %v5681
      %v5714 = vmul.f32 %v5522, %v5682
      %v5715 = vmul.f32 %v5523, %v5683
      %v5716 = vmul.f32 %v5524, %v5684
      %v5717 = vmul.f32 %v5525, %v5685
      %v5718 = vmul.f32 %v5526, %v5686
      %v5719 = vmul.f32 %v5527, %v5687
      %v5720 = vmul.f32 %v5528, %v5688
      %v5721 = vmul.f32 %v5529, %v5689
      %v5722 = vmul.f32 %v5530, %v5690
      %v5723 = vmul.f32 %v5531, %v5691
      %v5724 = vmul.f32 %v5532, %v5692
      %v5725 = vmul.f32 %v5533, %v5693
      %v5726 = vmul.f32 %v5534, %v5694
      %v5727 = vmul.f32 %v5535, %v5695
      %v5728 = vmul.f32 %v5536, %v5696
      %v5729 = vmul.f32 %v5537, %v5697
      %v5730 = vmul.f32 %v5538, %v5698
      %v5731 = vmul.f32 %v5539, %v5699
      %vm5732 = vcmask 64512
      %5733 = vst.msk [vmem:[%s278] sm:$0xff] %vm5732, %v5700
      %5734 = vst.msk [vmem:[%s278 + $0x8] sm:$0xff] %vm5732, %v5701
      %5735 = vst.msk [vmem:[%s278 + $0x10] sm:$0xff] %vm5732, %v5702
      %5736 = vst.msk [vmem:[%s278 + $0x18] sm:$0xff] %vm5732, %v5703
      %5737 = vst.msk [vmem:[%s278 + $0x20] sm:$0xff] %vm5732, %v5704
      %5738 = vst.msk [vmem:[%s278 + $0x28] sm:$0xff] %vm5732, %v5705
      %5739 = vst.msk [vmem:[%s278 + $0x30] sm:$0xff] %vm5732, %v5706
      %5740 = vst.msk [vmem:[%s278 + $0x38] sm:$0xff] %vm5732, %v5707
      %5741 = vst.msk [vmem:[%s278 + $0x40] sm:$0xff] %vm5732, %v5708
      %5742 = vst.msk [vmem:[%s278 + $0x48] sm:$0xff] %vm5732, %v5709
      %5743 = vst.msk [vmem:[%s278 + $0x50] sm:$0xff] %vm5732, %v5710
      %5744 = vst.msk [vmem:[%s278 + $0x58] sm:$0xff] %vm5732, %v5711
      %5745 = vst.msk [vmem:[%s278 + $0x60] sm:$0xff] %vm5732, %v5712
      %5746 = vst.msk [vmem:[%s278 + $0x68] sm:$0xff] %vm5732, %v5713
      %5747 = vst.msk [vmem:[%s278 + $0x70] sm:$0xff] %vm5732, %v5714
      %5748 = vst.msk [vmem:[%s278 + $0x78] sm:$0xff] %vm5732, %v5715
      %5749 = vst.msk [vmem:[%s278 + $0x80] sm:$0xff] %vm5732, %v5716
      %5750 = vst.msk [vmem:[%s278 + $0x88] sm:$0xff] %vm5732, %v5717
      %5751 = vst.msk [vmem:[%s278 + $0x90] sm:$0xff] %vm5732, %v5718
      %5752 = vst.msk [vmem:[%s278 + $0x98] sm:$0xff] %vm5732, %v5719
      %5753 = vst.msk [vmem:[%s278 + $0xa0] sm:$0xff] %vm5732, %v5720
      %5754 = vst.msk [vmem:[%s278 + $0xa8] sm:$0xff] %vm5732, %v5721
      %5755 = vst.msk [vmem:[%s278 + $0xb0] sm:$0xff] %vm5732, %v5722
      %5756 = vst.msk [vmem:[%s278 + $0xb8] sm:$0xff] %vm5732, %v5723
      %5757 = vst.msk [vmem:[%s278 + $0xc0] sm:$0xff] %vm5732, %v5724
      %5758 = vst.msk [vmem:[%s278 + $0xc8] sm:$0xff] %vm5732, %v5725
      %5759 = vst.msk [vmem:[%s278 + $0xd0] sm:$0xff] %vm5732, %v5726
      %5760 = vst.msk [vmem:[%s278 + $0xd8] sm:$0xff] %vm5732, %v5727
      %5761 = vst.msk [vmem:[%s278 + $0xe0] sm:$0xff] %vm5732, %v5728
      %5762 = vst.msk [vmem:[%s278 + $0xe8] sm:$0xff] %vm5732, %v5729
      %5763 = vst.msk [vmem:[%s278 + $0xf0] sm:$0xff] %vm5732, %v5730
      %5764 = vst.msk [vmem:[%s278 + $0xf8] sm:$0xff] %vm5732, %v5731
      %p5765 = scmp.lt.s32.totalorder %s18, 1
      %s5766 = scalar_select %p5765, %s18, 1
      %s5767 = smul.addr %s5766, 32
      %s5768 = smul.addr %s5767, 8
      %s5769 = scalar_lea.vmem %s7, %s5768
      // Predicated region
      $region49: #{sppf_forward.1} parent=47 // pred_check
        %p5770 = pneg %p188
      $region50: #{sppf_forward.1} parent=47 // pred_check_branch
        %5772 = sbr.rel (%p5770) target = $region52
      $region51: #{sppf_forward.1} parent=47 // pred_region
        _
      $region52: #{sppf_forward.1} parent=47 // pred_fallthru
        _
    $region48: #{sppf_forward.1} parent=5 // pred_fallthru
      _
    %p5773 = scmp.le.s32.totalorder 2, %s13
    // Predicated region
    $region53: #{sppf_forward.1} parent=5 // pred_check
      %p5774 = pneg %p5773
    $region54: #{sppf_forward.1} parent=5 // pred_check_branch
      %5776 = sbr.rel (%p5774) target = $region56
    $region55: #{sppf_forward.1} parent=5 // pred_region
      %s5777 = ssub.s32 %s13, 2
      // Predicated region
      $region57: #{sppf_forward.1} parent=55 // pred_check
        %p5778 = pneg %p194
      $region58: #{sppf_forward.1} parent=55 // pred_check_branch
        %5780 = sbr.rel (%p5778) target = $region60
      $region59: #{sppf_forward.1} parent=55 // pred_region
        %p5781 = scmp.lt.s32.totalorder %s19, 1
        %s5782 = scalar_select %p5781, %s19, 1
        %s5783 = smul.addr %s5782, 32
        %s5784 = smul.addr %s5783, 8
        %s5785 = scalar_lea.vmem %s7, %s5784
      $region60: #{sppf_forward.1} parent=55 // pred_fallthru
        _
    $region56: #{sppf_forward.1} parent=5 // pred_fallthru
      _
  $region6: #{sppf_forward.1} parent=0 // loop_footer
    %s17 = sadd.s32 1, %s13
  $region7: #{sppf_forward.1} parent=0 // loop_footer_branch
    %12 = sbr.rel target = $region3
  $region8: #{sppf_forward.1} parent=0 // loop_exit
    _

</llo_original>
